<compile_context>
chip_gen: v7x
topology: tpu7x:2x2x1
jax: 0.10.0
libtpu: 0.0.40
codegen_flags: <defaults>
</compile_context>

<pallas_src>
import math
import jax
import jax.numpy as jnp
from jax import lax
from jax.experimental import pallas as pl
from jax.experimental.pallas import tpu as pltpu


NEG_INF = -1e9  # large finite negative (avoids NaN on fully-masked rows)


# ----------------------------- kernel helpers -------------------------------

def _layer_norm(x, gamma, beta, eps=1e-5):
    mean = jnp.mean(x, axis=-1, keepdims=True)
    var = jnp.mean((x - mean) ** 2, axis=-1, keepdims=True)
    return (x - mean) * lax.rsqrt(var + eps) * gamma + beta


def _linear(x_f32, w_bf16, b_f32):
    # x: [T, in] f32 activations; w: [in, out] bf16 (pre-transposed in wrapper);
    # bf16 MXU matmul with f32 accumulation, bias added in f32.
    y = lax.dot_general(x_f32.astype(jnp.bfloat16), w_bf16,
                        (((1,), (0,)), ((), ())),
                        preferred_element_type=jnp.float32)
    return y + b_f32


# ------------------- fused embed + L-layer decoder kernel -------------------

def make_fused_kernel(num_heads, head_dim):
    scaling = 1.0 / math.sqrt(head_dim)
    C = num_heads * head_dim

    def kernel(tok_ref, pos_ref, seg_ref, emb_g, emb_b, pad_ref, kbias_ref,
               wq, bq, wk, bk, wv, bv, wo, bo,
               g1, be1, w1, bb1, w2, bb2, g2, be2,
               emb_out_ref, states_ref, x_sc):
        l = pl.program_id(1)

        # -- embedding sum + emb_layer_norm + pad zeroing (only at layer 0) --
        @pl.when(l == 0)
        def _():
            xe = tok_ref[0] + pos_ref[...] + seg_ref[0]          # token+pos+segment
            xe = _layer_norm(xe, emb_g[...], emb_b[...])          # emb_layer_norm
            xe = xe * (1.0 - pad_ref[0])                          # zero padded positions
            x_sc[...] = xe
            emb_out_ref[0] = xe                                   # inner_states[0]

        x = x_sc[...]                                             # [T, C] f32, VMEM-resident
        T = x.shape[0]

        # ---------------- self attention (batched over heads) ----------------
        q = _linear(x, wq[0], bq[0]) * scaling
        k = _linear(x, wk[0], bk[0])
        v = _linear(x, wv[0], bv[0])

        qh = jnp.transpose(q.reshape(T, num_heads, head_dim), (1, 0, 2)).astype(jnp.bfloat16)
        kh = jnp.transpose(k.reshape(T, num_heads, head_dim), (1, 0, 2)).astype(jnp.bfloat16)
        vh = jnp.transpose(v.reshape(T, num_heads, head_dim), (1, 0, 2)).astype(jnp.bfloat16)

        s = jnp.einsum('htd,hsd->hts', qh, kh,
                       preferred_element_type=jnp.float32)        # [H, T, T] f32
        s = s + kbias_ref[0]                                      # additive key-pad bias
        m = jnp.max(s, axis=-1, keepdims=True)
        e = jnp.exp(s - m)
        inv = pl.reciprocal(jnp.sum(e, axis=-1, keepdims=True), approx=True)
        o = jnp.einsum('hts,hsd->htd', e.astype(jnp.bfloat16), vh,
                       preferred_element_type=jnp.float32)        # [H, T, d]
        o = o * inv                                               # fold 1/denom into output
        attn = jnp.transpose(o, (1, 0, 2)).reshape(T, C)          # [T, C]
        attn = _linear(attn, wo[0], bo[0])

        x = _layer_norm(x + attn, g1[0], be1[0])                  # self_attn_layer_norm

        # TODO(synk): cross-attention branch (encoder_out is not None) not
        # implemented - forward semantics match the default encoder_out=None path.

        # ----------------------------- feed-forward --------------------------
        h = jnp.maximum(_linear(x, w1[0], bb1[0]), 0.0)           # relu
        h = _linear(h, w2[0], bb2[0])
        x = _layer_norm(x + h, g2[0], be2[0])                     # final_layer_norm

        x_sc[...] = x
        states_ref[0, 0] = x                                      # inner_states[l+1]

    return kernel


def fused_decoder_forward(tok_emb, pos_emb, seg_emb, emb_g, emb_b, pad_f, kbias,
                          stacked, num_heads):
    B, T, C = tok_emb.shape
    L = stacked["wq"].shape[0]
    kernel = make_fused_kernel(num_heads, C // num_heads)

    names = ["wq", "bq", "wk", "bk", "wv", "bv", "wo", "bo",
             "g1", "be1", "w1", "bb1", "w2", "bb2", "g2", "be2"]
    w_args = [stacked[n] for n in names]

    def layer_spec(arr):
        nd = arr.ndim
        return pl.BlockSpec((1,) + arr.shape[1:],
                            lambda b, l, _nd=nd: (l,) + (0,) * (_nd - 1))

    in_specs = [
        pl.BlockSpec((1, T, C), lambda b, l: (b, 0, 0)),   # tok_emb
        pl.BlockSpec((T, C),    lambda b, l: (0, 0)),      # pos_emb
        pl.BlockSpec((1, T, C), lambda b, l: (b, 0, 0)),   # seg_emb
        pl.BlockSpec((1, C),    lambda b, l: (0, 0)),      # emb_ln gamma
        pl.BlockSpec((1, C),    lambda b, l: (0, 0)),      # emb_ln beta
        pl.BlockSpec((1, T, 1), lambda b, l: (b, 0, 0)),   # pad mask (float)
        pl.BlockSpec((1, 1, T), lambda b, l: (b, 0, 0)),   # key-pad additive bias
    ] + [layer_spec(a) for a in w_args]

    out_shape = (jax.ShapeDtypeStruct((B, T, C), jnp.float32),       # embed output
                 jax.ShapeDtypeStruct((L, B, T, C), jnp.float32))    # per-layer outputs
    out_specs = (pl.BlockSpec((1, T, C), lambda b, l: (b, 0, 0)),
                 pl.BlockSpec((1, 1, T, C), lambda b, l: (l, b, 0, 0)))

    return pl.pallas_call(
        kernel,
        out_shape=out_shape,
        grid=(B, L),
        in_specs=in_specs,
        out_specs=out_specs,
        scratch_shapes=[pltpu.VMEM((T, C), jnp.float32)],            # resident activation
        compiler_params=pltpu.CompilerParams(
            dimension_semantics=("parallel", "arbitrary"),
            vmem_limit_bytes=64 * 1024 * 1024),
    )(tok_emb, pos_emb, seg_emb, emb_g, emb_b, pad_f, kbias, *w_args)


# ------------------------------ parameter init -------------------------------

def init_params(key, vocab, max_seq, num_segments, C, F_, num_layers, padding_idx):
    keys = jax.random.split(key, 4 + num_layers)

    def nrm(k, shape):
        return 0.02 * jax.random.normal(k, shape, jnp.float32)

    params = {
        "embed_tokens": nrm(keys[0], (vocab, C)).at[padding_idx].set(0.0),
        "embed_positions": nrm(keys[1], (max_seq, C)),
        "segment_emb": nrm(keys[2], (num_segments, C)),
        "emb_ln_g": jnp.ones((1, C), jnp.float32),
        "emb_ln_b": jnp.zeros((1, C), jnp.float32),
        "layers": [],
    }
    for i in range(num_layers):
        lk = jax.random.split(keys[4 + i], 6)
        params["layers"].append(dict(
            wq=nrm(lk[0], (C, C)), bq=jnp.zeros((1, C), jnp.float32),
            wk=nrm(lk[1], (C, C)), bk=jnp.zeros((1, C), jnp.float32),
            wv=nrm(lk[2], (C, C)), bv=jnp.zeros((1, C), jnp.float32),
            wo=nrm(lk[3], (C, C)), bo=jnp.zeros((1, C), jnp.float32),
            g1=jnp.ones((1, C), jnp.float32), be1=jnp.zeros((1, C), jnp.float32),
            w1=nrm(lk[4], (F_, C)), bb1=jnp.zeros((1, F_), jnp.float32),
            w2=nrm(lk[5], (C, F_)), bb2=jnp.zeros((1, C), jnp.float32),
            g2=jnp.ones((1, C), jnp.float32), be2=jnp.zeros((1, C), jnp.float32),
        ))
    return params


def stack_layer_params(layers):
    """Stack per-layer params along a leading L axis; matmul weights are
    pre-transposed to [in, out] and cast to bf16 (halves weight DMA, feeds MXU
    directly); biases / LN params stay f32."""
    def stack(name, transpose=False, bf16=False):
        a = jnp.stack([lp[name] for lp in layers], axis=0)
        if transpose:
            a = jnp.swapaxes(a, -1, -2)
        if bf16:
            a = a.astype(jnp.bfloat16)
        return a

    out = {}
    for n in ["wq", "wk", "wv", "wo", "w1", "w2"]:
        out[n] = stack(n, transpose=True, bf16=True)
    for n in ["bq", "bk", "bv", "bo", "bb1", "bb2", "g1", "be1", "g2", "be2"]:
        out[n] = stack(n)
    return out


# ------------------------------- full forward --------------------------------

def transformer_sentence_decoder_forward(tokens, segment_labels, params,
                                         num_heads, padding_idx):
    """Returns (inner_states: list of [T,B,C], sentence_rep: [B,C])."""
    B, T = tokens.shape
    pad = (tokens == padding_idx)                                   # [B, T] bool

    # embedding gathers are glue (plain JAX); everything else is in the kernel
    tok_emb = jnp.take(params["embed_tokens"], tokens, axis=0)      # [B,T,C]
    pos_emb = params["embed_positions"][:T]                         # [T,C]
    seg_emb = jnp.take(params["segment_emb"], segment_labels, axis=0)
    pad_f = pad.astype(jnp.float32)[:, :, None]                     # [B,T,1]
    kbias = jnp.where(pad[:, None, :], NEG_INF, 0.0).astype(jnp.float32)  # [B,1,T]

    stacked = stack_layer_params(params["layers"])
    emb_x, states = fused_decoder_forward(
        tok_emb, pos_emb, seg_emb,
        params["emb_ln_g"], params["emb_ln_b"],
        pad_f, kbias, stacked, num_heads)

    inner_states = [jnp.transpose(emb_x, (1, 0, 2))]                # T x B x C
    for l in range(states.shape[0]):
        inner_states.append(jnp.transpose(states[l], (1, 0, 2)))

    sentence_rep = states[-1][:, 0, :]                              # B x C (CLS)
    return inner_states, sentence_rep


# ------------------------------------ main ------------------------------------

if __name__ == "__main__":
    B, T, C, H, F_, L = 2, 8, 32, 4, 64, 2
    vocab, max_seq, num_segments, padding_idx = 20, 16, 2, 1

    key = jax.random.PRNGKey(0)
    pkey, tkey = jax.random.split(key)
    params = init_params(pkey, vocab, max_seq, num_segments, C, F_, L, padding_idx)

    tokens = jax.random.randint(tkey, (B, T), 2, vocab, dtype=jnp.int32)
    tokens = tokens.at[1, T - 2:].set(padding_idx)        # some padding at the end
    segment_labels = jnp.zeros((B, T), jnp.int32).at[:, T // 2:].set(1)

    inner_states, sentence_rep = transformer_sentence_decoder_forward(
        tokens, segment_labels, params, H, padding_idx)

    jax.block_until_ready(sentence_rep)
    for s in inner_states:
        jax.block_until_ready(s)

    assert sentence_rep.shape == (B, C)
    assert len(inner_states) == L + 1
    assert all(s.shape == (T, B, C) for s in inner_states)
    assert bool(jnp.all(jnp.isfinite(sentence_rep)))
    assert all(bool(jnp.all(jnp.isfinite(s))) for s in inner_states)
    print("KERNEL_OK")
</pallas_src>

<mosaic_0001>
module attributes {stable_mosaic.version = 11 : i64} {
  func.func @kernel(%arg0: i32, %arg1: i32, %arg2: memref<1x8x32xf32, #tpu.memory_space<vmem>>, %arg3: memref<8x32xf32, #tpu.memory_space<vmem>>, %arg4: memref<1x8x32xf32, #tpu.memory_space<vmem>>, %arg5: memref<1x32xf32, #tpu.memory_space<vmem>>, %arg6: memref<1x32xf32, #tpu.memory_space<vmem>>, %arg7: memref<1x8x1xf32, #tpu.memory_space<vmem>>, %arg8: memref<1x1x8xf32, #tpu.memory_space<vmem>>, %arg9: memref<1x32x32xbf16, #tpu.memory_space<vmem>>, %arg10: memref<1x1x32xf32, #tpu.memory_space<vmem>>, %arg11: memref<1x32x32xbf16, #tpu.memory_space<vmem>>, %arg12: memref<1x1x32xf32, #tpu.memory_space<vmem>>, %arg13: memref<1x32x32xbf16, #tpu.memory_space<vmem>>, %arg14: memref<1x1x32xf32, #tpu.memory_space<vmem>>, %arg15: memref<1x32x32xbf16, #tpu.memory_space<vmem>>, %arg16: memref<1x1x32xf32, #tpu.memory_space<vmem>>, %arg17: memref<1x1x32xf32, #tpu.memory_space<vmem>>, %arg18: memref<1x1x32xf32, #tpu.memory_space<vmem>>, %arg19: memref<1x32x64xbf16, #tpu.memory_space<vmem>>, %arg20: memref<1x1x64xf32, #tpu.memory_space<vmem>>, %arg21: memref<1x64x32xbf16, #tpu.memory_space<vmem>>, %arg22: memref<1x1x32xf32, #tpu.memory_space<vmem>>, %arg23: memref<1x1x32xf32, #tpu.memory_space<vmem>>, %arg24: memref<1x1x32xf32, #tpu.memory_space<vmem>>, %arg25: memref<1x8x32xf32, #tpu.memory_space<vmem>>, %arg26: memref<1x1x8x32xf32, #tpu.memory_space<vmem>>, %arg27: memref<8x32xf32, #tpu.memory_space<vmem>>) attributes {dimension_semantics = [#tpu.dimension_semantics<parallel>, #tpu.dimension_semantics<arbitrary>], iteration_bounds = array<i64: 2, 2>, scalar_prefetch = 0 : i64, scratch_operands = 1 : i64, tpu.core_type = #tpu.core_type<tc>, window_params = [{transform_indices = @transform_0, window_bounds = array<i64: 1, 8, 32>}, {pipeline_mode = #tpu.pipeline_mode<synchronous>, transform_indices = @transform_1, window_bounds = array<i64: 8, 32>}, {transform_indices = @transform_2, window_bounds = array<i64: 1, 8, 32>}, {pipeline_mode = #tpu.pipeline_mode<synchronous>, transform_indices = @transform_3, window_bounds = array<i64: 1, 32>}, {pipeline_mode = #tpu.pipeline_mode<synchronous>, transform_indices = @transform_4, window_bounds = array<i64: 1, 32>}, {transform_indices = @transform_5, window_bounds = array<i64: 1, 8, 1>}, {transform_indices = @transform_6, window_bounds = array<i64: 1, 1, 8>}, {transform_indices = @transform_7, window_bounds = array<i64: 1, 32, 32>}, {transform_indices = @transform_8, window_bounds = array<i64: 1, 1, 32>}, {transform_indices = @transform_9, window_bounds = array<i64: 1, 32, 32>}, {transform_indices = @transform_10, window_bounds = array<i64: 1, 1, 32>}, {transform_indices = @transform_11, window_bounds = array<i64: 1, 32, 32>}, {transform_indices = @transform_12, window_bounds = array<i64: 1, 1, 32>}, {transform_indices = @transform_13, window_bounds = array<i64: 1, 32, 32>}, {transform_indices = @transform_14, window_bounds = array<i64: 1, 1, 32>}, {transform_indices = @transform_15, window_bounds = array<i64: 1, 1, 32>}, {transform_indices = @transform_16, window_bounds = array<i64: 1, 1, 32>}, {transform_indices = @transform_17, window_bounds = array<i64: 1, 32, 64>}, {transform_indices = @transform_18, window_bounds = array<i64: 1, 1, 64>}, {transform_indices = @transform_19, window_bounds = array<i64: 1, 64, 32>}, {transform_indices = @transform_20, window_bounds = array<i64: 1, 1, 32>}, {transform_indices = @transform_21, window_bounds = array<i64: 1, 1, 32>}, {transform_indices = @transform_22, window_bounds = array<i64: 1, 1, 32>}, {transform_indices = @transform_23, window_bounds = array<i64: 1, 8, 32>}, {transform_indices = @transform_24, window_bounds = array<i64: 1, 1, 8, 32>}]} {
    %c0_i32 = arith.constant 0 : i32
    %0 = arith.cmpi eq, %arg1, %c0_i32 : i32
    %1 = arith.extui %0 : i1 to i32
    %c0_i32_0 = arith.constant 0 : i32
    %2 = arith.cmpi ne, %1, %c0_i32_0 : i32
    scf.if %2 {
      %c0_80 = arith.constant 0 : index
      %c0_81 = arith.constant 0 : index
      %c0_82 = arith.constant 0 : index
      %143 = vector.load %arg2[%c0_80, %c0_81, %c0_82] : memref<1x8x32xf32, #tpu.memory_space<vmem>>, vector<1x8x32xf32>
      %144 = vector.shape_cast %143 : vector<1x8x32xf32> to vector<8x32xf32>
      %c0_83 = arith.constant 0 : index
      %c0_84 = arith.constant 0 : index
      %145 = vector.load %arg3[%c0_83, %c0_84] : memref<8x32xf32, #tpu.memory_space<vmem>>, vector<8x32xf32>
      %146 = arith.addf %144, %145 : vector<8x32xf32>
      %c0_85 = arith.constant 0 : index
      %c0_86 = arith.constant 0 : index
      %c0_87 = arith.constant 0 : index
      %147 = vector.load %arg4[%c0_85, %c0_86, %c0_87] : memref<1x8x32xf32, #tpu.memory_space<vmem>>, vector<1x8x32xf32>
      %148 = vector.shape_cast %147 : vector<1x8x32xf32> to vector<8x32xf32>
      %149 = arith.addf %146, %148 : vector<8x32xf32>
      %c0_88 = arith.constant 0 : index
      %c0_89 = arith.constant 0 : index
      %150 = vector.load %arg5[%c0_88, %c0_89] : memref<1x32xf32, #tpu.memory_space<vmem>>, vector<1x32xf32>
      %c0_90 = arith.constant 0 : index
      %c0_91 = arith.constant 0 : index
      %151 = vector.load %arg6[%c0_90, %c0_91] : memref<1x32xf32, #tpu.memory_space<vmem>>, vector<1x32xf32>
      %cst_92 = arith.constant dense<0.000000e+00> : vector<8xf32>
      %152 = vector.multi_reduction <add>, %149, %cst_92 [1] : vector<8x32xf32> to vector<8xf32>
      %153 = vector.shape_cast %152 : vector<8xf32> to vector<8x1xf32>
      %cst_93 = arith.constant 3.200000e+01 : f32
      %154 = vector.broadcast %cst_93 : f32 to vector<8x1xf32>
      %155 = arith.divf %153, %154 : vector<8x1xf32>
      %156 = vector.broadcast %155 : vector<8x1xf32> to vector<8x32xf32>
      %157 = arith.subf %149, %156 : vector<8x32xf32>
      %158 = arith.mulf %157, %157 : vector<8x32xf32>
      %cst_94 = arith.constant dense<0.000000e+00> : vector<8xf32>
      %159 = vector.multi_reduction <add>, %158, %cst_94 [1] : vector<8x32xf32> to vector<8xf32>
      %160 = vector.shape_cast %159 : vector<8xf32> to vector<8x1xf32>
      %cst_95 = arith.constant 3.200000e+01 : f32
      %161 = vector.broadcast %cst_95 : f32 to vector<8x1xf32>
      %162 = arith.divf %160, %161 : vector<8x1xf32>
      %163 = vector.broadcast %155 : vector<8x1xf32> to vector<8x32xf32>
      %164 = arith.subf %149, %163 : vector<8x32xf32>
      %cst_96 = arith.constant 9.99999974E-6 : f32
      %165 = vector.broadcast %cst_96 : f32 to vector<8x1xf32>
      %166 = arith.addf %162, %165 : vector<8x1xf32>
      %167 = math.rsqrt %166 : vector<8x1xf32>
      %168 = vector.broadcast %167 : vector<8x1xf32> to vector<8x32xf32>
      %169 = arith.mulf %164, %168 : vector<8x32xf32>
      %170 = vector.broadcast %150 : vector<1x32xf32> to vector<8x32xf32>
      %171 = arith.mulf %169, %170 : vector<8x32xf32>
      %172 = vector.broadcast %151 : vector<1x32xf32> to vector<8x32xf32>
      %173 = arith.addf %171, %172 : vector<8x32xf32>
      %c0_97 = arith.constant 0 : index
      %c0_98 = arith.constant 0 : index
      %c0_99 = arith.constant 0 : index
      %174 = vector.load %arg7[%c0_97, %c0_98, %c0_99] : memref<1x8x1xf32, #tpu.memory_space<vmem>>, vector<1x8x1xf32>
      %175 = vector.shape_cast %174 : vector<1x8x1xf32> to vector<8x1xf32>
      %cst_100 = arith.constant 1.000000e+00 : f32
      %176 = vector.broadcast %cst_100 : f32 to vector<8x1xf32>
      %177 = arith.subf %176, %175 : vector<8x1xf32>
      %178 = vector.broadcast %177 : vector<8x1xf32> to vector<8x32xf32>
      %179 = arith.mulf %173, %178 : vector<8x32xf32>
      %c0_101 = arith.constant 0 : index
      %c0_102 = arith.constant 0 : index
      %180 = vector.load %arg27[%c0_101, %c0_102] : memref<8x32xf32, #tpu.memory_space<vmem>>, vector<8x32xf32>
      tpu.vector_store %arg27[%c0_101, %c0_102], %179 {strides = array<i32>} : memref<8x32xf32, #tpu.memory_space<vmem>>, vector<8x32xf32>,
      %c0_103 = arith.constant 0 : index
      %c0_104 = arith.constant 0 : index
      %c0_105 = arith.constant 0 : index
      %181 = vector.load %arg25[%c0_103, %c0_104, %c0_105] : memref<1x8x32xf32, #tpu.memory_space<vmem>>, vector<1x8x32xf32>
      %182 = vector.shape_cast %181 : vector<1x8x32xf32> to vector<8x32xf32>
      %183 = vector.shape_cast %179 : vector<8x32xf32> to vector<1x8x32xf32>
      tpu.vector_store %arg25[%c0_103, %c0_104, %c0_105], %183 {strides = array<i32>} : memref<1x8x32xf32, #tpu.memory_space<vmem>>, vector<1x8x32xf32>,
    } else {
    }
    %c0 = arith.constant 0 : index
    %c0_1 = arith.constant 0 : index
    %3 = vector.load %arg27[%c0, %c0_1] : memref<8x32xf32, #tpu.memory_space<vmem>>, vector<8x32xf32>
    %c0_2 = arith.constant 0 : index
    %c0_3 = arith.constant 0 : index
    %c0_4 = arith.constant 0 : index
    %4 = vector.load %arg9[%c0_2, %c0_3, %c0_4] : memref<1x32x32xbf16, #tpu.memory_space<vmem>>, vector<1x32x32xbf16>
    %5 = vector.shape_cast %4 : vector<1x32x32xbf16> to vector<32x32xbf16>
    %c0_5 = arith.constant 0 : index
    %c0_6 = arith.constant 0 : index
    %c0_7 = arith.constant 0 : index
    %6 = vector.load %arg10[%c0_5, %c0_6, %c0_7] : memref<1x1x32xf32, #tpu.memory_space<vmem>>, vector<1x1x32xf32>
    %7 = vector.shape_cast %6 : vector<1x1x32xf32> to vector<1x32xf32>
    %8 = arith.truncf %3 : vector<8x32xf32> to vector<8x32xbf16>
    %cst = arith.constant dense<0.000000e+00> : vector<8x32xf32>
    %9 = tpu.matmul %8, %5, %cst {dimension_numbers = #tpu.dot_dimension_numbers<[1], [0], [0], [1], [0, 0, 1, 1], [], []>} : vector<8x32xbf16>, vector<32x32xbf16>, vector<8x32xf32> -> vector<8x32xf32>
    %10 = vector.broadcast %7 : vector<1x32xf32> to vector<8x32xf32>
    %11 = arith.addf %9, %10 : vector<8x32xf32>
    %cst_8 = arith.constant 0.353553385 : f32
    %12 = vector.broadcast %cst_8 : f32 to vector<8x32xf32>
    %13 = arith.mulf %11, %12 : vector<8x32xf32>
    %c0_9 = arith.constant 0 : index
    %c0_10 = arith.constant 0 : index
    %c0_11 = arith.constant 0 : index
    %14 = vector.load %arg11[%c0_9, %c0_10, %c0_11] : memref<1x32x32xbf16, #tpu.memory_space<vmem>>, vector<1x32x32xbf16>
    %15 = vector.shape_cast %14 : vector<1x32x32xbf16> to vector<32x32xbf16>
    %c0_12 = arith.constant 0 : index
    %c0_13 = arith.constant 0 : index
    %c0_14 = arith.constant 0 : index
    %16 = vector.load %arg12[%c0_12, %c0_13, %c0_14] : memref<1x1x32xf32, #tpu.memory_space<vmem>>, vector<1x1x32xf32>
    %17 = vector.shape_cast %16 : vector<1x1x32xf32> to vector<1x32xf32>
    %18 = arith.truncf %3 : vector<8x32xf32> to vector<8x32xbf16>
    %cst_15 = arith.constant dense<0.000000e+00> : vector<8x32xf32>
    %19 = tpu.matmul %18, %15, %cst_15 {dimension_numbers = #tpu.dot_dimension_numbers<[1], [0], [0], [1], [0, 0, 1, 1], [], []>} : vector<8x32xbf16>, vector<32x32xbf16>, vector<8x32xf32> -> vector<8x32xf32>
    %20 = vector.broadcast %17 : vector<1x32xf32> to vector<8x32xf32>
    %21 = arith.addf %19, %20 : vector<8x32xf32>
    %c0_16 = arith.constant 0 : index
    %c0_17 = arith.constant 0 : index
    %c0_18 = arith.constant 0 : index
    %22 = vector.load %arg13[%c0_16, %c0_17, %c0_18] : memref<1x32x32xbf16, #tpu.memory_space<vmem>>, vector<1x32x32xbf16>
    %23 = vector.shape_cast %22 : vector<1x32x32xbf16> to vector<32x32xbf16>
    %c0_19 = arith.constant 0 : index
    %c0_20 = arith.constant 0 : index
    %c0_21 = arith.constant 0 : index
    %24 = vector.load %arg14[%c0_19, %c0_20, %c0_21] : memref<1x1x32xf32, #tpu.memory_space<vmem>>, vector<1x1x32xf32>
    %25 = vector.shape_cast %24 : vector<1x1x32xf32> to vector<1x32xf32>
    %26 = arith.truncf %3 : vector<8x32xf32> to vector<8x32xbf16>
    %cst_22 = arith.constant dense<0.000000e+00> : vector<8x32xf32>
    %27 = tpu.matmul %26, %23, %cst_22 {dimension_numbers = #tpu.dot_dimension_numbers<[1], [0], [0], [1], [0, 0, 1, 1], [], []>} : vector<8x32xbf16>, vector<32x32xbf16>, vector<8x32xf32> -> vector<8x32xf32>
    %28 = vector.broadcast %25 : vector<1x32xf32> to vector<8x32xf32>
    %29 = arith.addf %27, %28 : vector<8x32xf32>
    %30 = vector.shape_cast %13 : vector<8x32xf32> to vector<8x4x8xf32>
    %31 = tpu.transpose %30, [1, 0, 2] : vector<8x4x8xf32> -> vector<4x8x8xf32>
    %32 = arith.truncf %31 : vector<4x8x8xf32> to vector<4x8x8xbf16>
    %33 = vector.shape_cast %21 : vector<8x32xf32> to vector<8x4x8xf32>
    %34 = tpu.transpose %33, [1, 0, 2] : vector<8x4x8xf32> -> vector<4x8x8xf32>
    %35 = arith.truncf %34 : vector<4x8x8xf32> to vector<4x8x8xbf16>
    %36 = vector.shape_cast %29 : vector<8x32xf32> to vector<8x4x8xf32>
    %37 = tpu.transpose %36, [1, 0, 2] : vector<8x4x8xf32> -> vector<4x8x8xf32>
    %38 = arith.truncf %37 : vector<4x8x8xf32> to vector<4x8x8xbf16>
    "tpu.trace_start"() <{level = 10 : i32, message = "htd,hsd->hts"}> : () -> ()
    %cst_23 = arith.constant dense<0.000000e+00> : vector<4x8x8xf32>
    %39 = tpu.matmul %32, %35, %cst_23 {dimension_numbers = #tpu.dot_dimension_numbers<[2], [2], [1], [1], [0, 0, 0, 1, 1, 1], [0], [0]>} : vector<4x8x8xbf16>, vector<4x8x8xbf16>, vector<4x8x8xf32> -> vector<4x8x8xf32>
    "tpu.trace_stop"() : () -> ()
    %c0_24 = arith.constant 0 : index
    %c0_25 = arith.constant 0 : index
    %c0_26 = arith.constant 0 : index
    %40 = vector.load %arg8[%c0_24, %c0_25, %c0_26] : memref<1x1x8xf32, #tpu.memory_space<vmem>>, vector<1x1x8xf32>
    %41 = vector.shape_cast %40 : vector<1x1x8xf32> to vector<1x8xf32>
    %42 = vector.shape_cast %41 : vector<1x8xf32> to vector<1x1x8xf32>
    %43 = vector.broadcast %42 : vector<1x1x8xf32> to vector<4x8x8xf32>
    %44 = arith.addf %39, %43 : vector<4x8x8xf32>
    %cst_27 = arith.constant dense<0xFF800000> : vector<4x8xf32>
    %45 = vector.multi_reduction <maximumf>, %44, %cst_27 [2] : vector<4x8x8xf32> to vector<4x8xf32>
    %46 = vector.shape_cast %45 : vector<4x8xf32> to vector<4x8x1xf32>
    %47 = vector.broadcast %46 : vector<4x8x1xf32> to vector<4x8x8xf32>
    %48 = arith.subf %44, %47 : vector<4x8x8xf32>
    %49 = math.exp %48 : vector<4x8x8xf32>
    %cst_28 = arith.constant dense<0.000000e+00> : vector<4x8xf32>
    %50 = vector.multi_reduction <add>, %49, %cst_28 [2] : vector<4x8x8xf32> to vector<4x8xf32>
    %51 = vector.shape_cast %50 : vector<4x8xf32> to vector<4x8x1xf32>
    %52 = tpu.reciprocal %51 {approx = true} : vector<4x8x1xf32> -> vector<4x8x1xf32>
    %53 = arith.truncf %49 : vector<4x8x8xf32> to vector<4x8x8xbf16>
    "tpu.trace_start"() <{level = 10 : i32, message = "hts,hsd->htd"}> : () -> ()
    %cst_29 = arith.constant dense<0.000000e+00> : vector<4x8x8xf32>
    %54 = tpu.matmul %53, %38, %cst_29 {dimension_numbers = #tpu.dot_dimension_numbers<[2], [1], [1], [2], [0, 0, 0, 1, 1, 2], [0], [0]>} : vector<4x8x8xbf16>, vector<4x8x8xbf16>, vector<4x8x8xf32> -> vector<4x8x8xf32>
    "tpu.trace_stop"() : () -> ()
    %55 = vector.broadcast %52 : vector<4x8x1xf32> to vector<4x8x8xf32>
    %56 = arith.mulf %54, %55 : vector<4x8x8xf32>
    %57 = tpu.transpose %56, [1, 0, 2] : vector<4x8x8xf32> -> vector<8x4x8xf32>
    %58 = vector.shape_cast %57 : vector<8x4x8xf32> to vector<8x32xf32>
    %c0_30 = arith.constant 0 : index
    %c0_31 = arith.constant 0 : index
    %c0_32 = arith.constant 0 : index
    %59 = vector.load %arg15[%c0_30, %c0_31, %c0_32] : memref<1x32x32xbf16, #tpu.memory_space<vmem>>, vector<1x32x32xbf16>
    %60 = vector.shape_cast %59 : vector<1x32x32xbf16> to vector<32x32xbf16>
    %c0_33 = arith.constant 0 : index
    %c0_34 = arith.constant 0 : index
    %c0_35 = arith.constant 0 : index
    %61 = vector.load %arg16[%c0_33, %c0_34, %c0_35] : memref<1x1x32xf32, #tpu.memory_space<vmem>>, vector<1x1x32xf32>
    %62 = vector.shape_cast %61 : vector<1x1x32xf32> to vector<1x32xf32>
    %63 = arith.truncf %58 : vector<8x32xf32> to vector<8x32xbf16>
    %cst_36 = arith.constant dense<0.000000e+00> : vector<8x32xf32>
    %64 = tpu.matmul %63, %60, %cst_36 {dimension_numbers = #tpu.dot_dimension_numbers<[1], [0], [0], [1], [0, 0, 1, 1], [], []>} : vector<8x32xbf16>, vector<32x32xbf16>, vector<8x32xf32> -> vector<8x32xf32>
    %65 = vector.broadcast %62 : vector<1x32xf32> to vector<8x32xf32>
    %66 = arith.addf %64, %65 : vector<8x32xf32>
    %67 = arith.addf %3, %66 : vector<8x32xf32>
    %c0_37 = arith.constant 0 : index
    %c0_38 = arith.constant 0 : index
    %c0_39 = arith.constant 0 : index
    %68 = vector.load %arg17[%c0_37, %c0_38, %c0_39] : memref<1x1x32xf32, #tpu.memory_space<vmem>>, vector<1x1x32xf32>
    %69 = vector.shape_cast %68 : vector<1x1x32xf32> to vector<1x32xf32>
    %c0_40 = arith.constant 0 : index
    %c0_41 = arith.constant 0 : index
    %c0_42 = arith.constant 0 : index
    %70 = vector.load %arg18[%c0_40, %c0_41, %c0_42] : memref<1x1x32xf32, #tpu.memory_space<vmem>>, vector<1x1x32xf32>
    %71 = vector.shape_cast %70 : vector<1x1x32xf32> to vector<1x32xf32>
    %cst_43 = arith.constant dense<0.000000e+00> : vector<8xf32>
    %72 = vector.multi_reduction <add>, %67, %cst_43 [1] : vector<8x32xf32> to vector<8xf32>
    %73 = vector.shape_cast %72 : vector<8xf32> to vector<8x1xf32>
    %cst_44 = arith.constant 3.200000e+01 : f32
    %74 = vector.broadcast %cst_44 : f32 to vector<8x1xf32>
    %75 = arith.divf %73, %74 : vector<8x1xf32>
    %76 = vector.broadcast %75 : vector<8x1xf32> to vector<8x32xf32>
    %77 = arith.subf %67, %76 : vector<8x32xf32>
    %78 = arith.mulf %77, %77 : vector<8x32xf32>
    %cst_45 = arith.constant dense<0.000000e+00> : vector<8xf32>
    %79 = vector.multi_reduction <add>, %78, %cst_45 [1] : vector<8x32xf32> to vector<8xf32>
    %80 = vector.shape_cast %79 : vector<8xf32> to vector<8x1xf32>
    %cst_46 = arith.constant 3.200000e+01 : f32
    %81 = vector.broadcast %cst_46 : f32 to vector<8x1xf32>
    %82 = arith.divf %80, %81 : vector<8x1xf32>
    %83 = vector.broadcast %75 : vector<8x1xf32> to vector<8x32xf32>
    %84 = arith.subf %67, %83 : vector<8x32xf32>
    %cst_47 = arith.constant 9.99999974E-6 : f32
    %85 = vector.broadcast %cst_47 : f32 to vector<8x1xf32>
    %86 = arith.addf %82, %85 : vector<8x1xf32>
    %87 = math.rsqrt %86 : vector<8x1xf32>
    %88 = vector.broadcast %87 : vector<8x1xf32> to vector<8x32xf32>
    %89 = arith.mulf %84, %88 : vector<8x32xf32>
    %90 = vector.broadcast %69 : vector<1x32xf32> to vector<8x32xf32>
    %91 = arith.mulf %89, %90 : vector<8x32xf32>
    %92 = vector.broadcast %71 : vector<1x32xf32> to vector<8x32xf32>
    %93 = arith.addf %91, %92 : vector<8x32xf32>
    %c0_48 = arith.constant 0 : index
    %c0_49 = arith.constant 0 : index
    %c0_50 = arith.constant 0 : index
    %94 = vector.load %arg19[%c0_48, %c0_49, %c0_50] : memref<1x32x64xbf16, #tpu.memory_space<vmem>>, vector<1x32x64xbf16>
    %95 = vector.shape_cast %94 : vector<1x32x64xbf16> to vector<32x64xbf16>
    %c0_51 = arith.constant 0 : index
    %c0_52 = arith.constant 0 : index
    %c0_53 = arith.constant 0 : index
    %96 = vector.load %arg20[%c0_51, %c0_52, %c0_53] : memref<1x1x64xf32, #tpu.memory_space<vmem>>, vector<1x1x64xf32>
    %97 = vector.shape_cast %96 : vector<1x1x64xf32> to vector<1x64xf32>
    %98 = arith.truncf %93 : vector<8x32xf32> to vector<8x32xbf16>
    %cst_54 = arith.constant dense<0.000000e+00> : vector<8x64xf32>
    %99 = tpu.matmul %98, %95, %cst_54 {dimension_numbers = #tpu.dot_dimension_numbers<[1], [0], [0], [1], [0, 0, 1, 1], [], []>} : vector<8x32xbf16>, vector<32x64xbf16>, vector<8x64xf32> -> vector<8x64xf32>
    %100 = vector.broadcast %97 : vector<1x64xf32> to vector<8x64xf32>
    %101 = arith.addf %99, %100 : vector<8x64xf32>
    %cst_55 = arith.constant 0.000000e+00 : f32
    %102 = vector.broadcast %cst_55 : f32 to vector<8x64xf32>
    %103 = arith.maximumf %101, %102 : vector<8x64xf32>
    %c0_56 = arith.constant 0 : index
    %c0_57 = arith.constant 0 : index
    %c0_58 = arith.constant 0 : index
    %104 = vector.load %arg21[%c0_56, %c0_57, %c0_58] : memref<1x64x32xbf16, #tpu.memory_space<vmem>>, vector<1x64x32xbf16>
    %105 = vector.shape_cast %104 : vector<1x64x32xbf16> to vector<64x32xbf16>
    %c0_59 = arith.constant 0 : index
    %c0_60 = arith.constant 0 : index
    %c0_61 = arith.constant 0 : index
    %106 = vector.load %arg22[%c0_59, %c0_60, %c0_61] : memref<1x1x32xf32, #tpu.memory_space<vmem>>, vector<1x1x32xf32>
    %107 = vector.shape_cast %106 : vector<1x1x32xf32> to vector<1x32xf32>
    %108 = arith.truncf %103 : vector<8x64xf32> to vector<8x64xbf16>
    %cst_62 = arith.constant dense<0.000000e+00> : vector<8x32xf32>
    %109 = tpu.matmul %108, %105, %cst_62 {dimension_numbers = #tpu.dot_dimension_numbers<[1], [0], [0], [1], [0, 0, 1, 1], [], []>} : vector<8x64xbf16>, vector<64x32xbf16>, vector<8x32xf32> -> vector<8x32xf32>
    %110 = vector.broadcast %107 : vector<1x32xf32> to vector<8x32xf32>
    %111 = arith.addf %109, %110 : vector<8x32xf32>
    %112 = arith.addf %93, %111 : vector<8x32xf32>
    %c0_63 = arith.constant 0 : index
    %c0_64 = arith.constant 0 : index
    %c0_65 = arith.constant 0 : index
    %113 = vector.load %arg23[%c0_63, %c0_64, %c0_65] : memref<1x1x32xf32, #tpu.memory_space<vmem>>, vector<1x1x32xf32>
    %114 = vector.shape_cast %113 : vector<1x1x32xf32> to vector<1x32xf32>
    %c0_66 = arith.constant 0 : index
    %c0_67 = arith.constant 0 : index
    %c0_68 = arith.constant 0 : index
    %115 = vector.load %arg24[%c0_66, %c0_67, %c0_68] : memref<1x1x32xf32, #tpu.memory_space<vmem>>, vector<1x1x32xf32>
    %116 = vector.shape_cast %115 : vector<1x1x32xf32> to vector<1x32xf32>
    %cst_69 = arith.constant dense<0.000000e+00> : vector<8xf32>
    %117 = vector.multi_reduction <add>, %112, %cst_69 [1] : vector<8x32xf32> to vector<8xf32>
    %118 = vector.shape_cast %117 : vector<8xf32> to vector<8x1xf32>
    %cst_70 = arith.constant 3.200000e+01 : f32
    %119 = vector.broadcast %cst_70 : f32 to vector<8x1xf32>
    %120 = arith.divf %118, %119 : vector<8x1xf32>
    %121 = vector.broadcast %120 : vector<8x1xf32> to vector<8x32xf32>
    %122 = arith.subf %112, %121 : vector<8x32xf32>
    %123 = arith.mulf %122, %122 : vector<8x32xf32>
    %cst_71 = arith.constant dense<0.000000e+00> : vector<8xf32>
    %124 = vector.multi_reduction <add>, %123, %cst_71 [1] : vector<8x32xf32> to vector<8xf32>
    %125 = vector.shape_cast %124 : vector<8xf32> to vector<8x1xf32>
    %cst_72 = arith.constant 3.200000e+01 : f32
    %126 = vector.broadcast %cst_72 : f32 to vector<8x1xf32>
    %127 = arith.divf %125, %126 : vector<8x1xf32>
    %128 = vector.broadcast %120 : vector<8x1xf32> to vector<8x32xf32>
    %129 = arith.subf %112, %128 : vector<8x32xf32>
    %cst_73 = arith.constant 9.99999974E-6 : f32
    %130 = vector.broadcast %cst_73 : f32 to vector<8x1xf32>
    %131 = arith.addf %127, %130 : vector<8x1xf32>
    %132 = math.rsqrt %131 : vector<8x1xf32>
    %133 = vector.broadcast %132 : vector<8x1xf32> to vector<8x32xf32>
    %134 = arith.mulf %129, %133 : vector<8x32xf32>
    %135 = vector.broadcast %114 : vector<1x32xf32> to vector<8x32xf32>
    %136 = arith.mulf %134, %135 : vector<8x32xf32>
    %137 = vector.broadcast %116 : vector<1x32xf32> to vector<8x32xf32>
    %138 = arith.addf %136, %137 : vector<8x32xf32>
    %c0_74 = arith.constant 0 : index
    %c0_75 = arith.constant 0 : index
    %139 = vector.load %arg27[%c0_74, %c0_75] : memref<8x32xf32, #tpu.memory_space<vmem>>, vector<8x32xf32>
    tpu.vector_store %arg27[%c0_74, %c0_75], %138 {strides = array<i32>} : memref<8x32xf32, #tpu.memory_space<vmem>>, vector<8x32xf32>,
    %c0_76 = arith.constant 0 : index
    %c0_77 = arith.constant 0 : index
    %c0_78 = arith.constant 0 : index
    %c0_79 = arith.constant 0 : index
    %140 = vector.load %arg26[%c0_76, %c0_77, %c0_78, %c0_79] : memref<1x1x8x32xf32, #tpu.memory_space<vmem>>, vector<1x1x8x32xf32>
    %141 = vector.shape_cast %140 : vector<1x1x8x32xf32> to vector<8x32xf32>
    %142 = vector.shape_cast %138 : vector<8x32xf32> to vector<1x1x8x32xf32>
    tpu.vector_store %arg26[%c0_76, %c0_77, %c0_78, %c0_79], %142 {strides = array<i32>} : memref<1x1x8x32xf32, #tpu.memory_space<vmem>>, vector<1x1x8x32xf32>,
    return
  }
  func.func @transform_0(%arg0: i32, %arg1: i32) -> (i32, i32, i32) {
    %c0_i32 = arith.constant 0 : i32
    %c0_i32_0 = arith.constant 0 : i32
    %c0_i32_1 = arith.constant 0 : i32
    return %arg0, %c0_i32, %c0_i32_0 : i32, i32, i32
  }
  func.func @transform_1(%arg0: i32, %arg1: i32) -> (i32, i32) {
    %c0_i32 = arith.constant 0 : i32
    %c0_i32_0 = arith.constant 0 : i32
    %c0_i32_1 = arith.constant 0 : i32
    return %c0_i32, %c0_i32_0 : i32, i32
  }
  func.func @transform_2(%arg0: i32, %arg1: i32) -> (i32, i32, i32) {
    %c0_i32 = arith.constant 0 : i32
    %c0_i32_0 = arith.constant 0 : i32
    %c0_i32_1 = arith.constant 0 : i32
    return %arg0, %c0_i32, %c0_i32_0 : i32, i32, i32
  }
  func.func @transform_3(%arg0: i32, %arg1: i32) -> (i32, i32) {
    %c0_i32 = arith.constant 0 : i32
    %c0_i32_0 = arith.constant 0 : i32
    %c0_i32_1 = arith.constant 0 : i32
    return %c0_i32, %c0_i32_0 : i32, i32
  }
  func.func @transform_4(%arg0: i32, %arg1: i32) -> (i32, i32) {
    %c0_i32 = arith.constant 0 : i32
    %c0_i32_0 = arith.constant 0 : i32
    %c0_i32_1 = arith.constant 0 : i32
    return %c0_i32, %c0_i32_0 : i32, i32
  }
  func.func @transform_5(%arg0: i32, %arg1: i32) -> (i32, i32, i32) {
    %c0_i32 = arith.constant 0 : i32
    %c0_i32_0 = arith.constant 0 : i32
    %c0_i32_1 = arith.constant 0 : i32
    return %arg0, %c0_i32, %c0_i32_0 : i32, i32, i32
  }
  func.func @transform_6(%arg0: i32, %arg1: i32) -> (i32, i32, i32) {
    %c0_i32 = arith.constant 0 : i32
    %c0_i32_0 = arith.constant 0 : i32
    %c0_i32_1 = arith.constant 0 : i32
    return %arg0, %c0_i32, %c0_i32_0 : i32, i32, i32
  }
  func.func @transform_7(%arg0: i32, %arg1: i32) -> (i32, i32, i32) {
    %c0_i32 = arith.constant 0 : i32
    %c0_i32_0 = arith.constant 0 : i32
    %c0_i32_1 = arith.constant 0 : i32
    return %arg1, %c0_i32, %c0_i32_0 : i32, i32, i32
  }
  func.func @transform_8(%arg0: i32, %arg1: i32) -> (i32, i32, i32) {
    %c0_i32 = arith.constant 0 : i32
    %c0_i32_0 = arith.constant 0 : i32
    %c0_i32_1 = arith.constant 0 : i32
    return %arg1, %c0_i32, %c0_i32_0 : i32, i32, i32
  }
  func.func @transform_9(%arg0: i32, %arg1: i32) -> (i32, i32, i32) {
    %c0_i32 = arith.constant 0 : i32
    %c0_i32_0 = arith.constant 0 : i32
    %c0_i32_1 = arith.constant 0 : i32
    return %arg1, %c0_i32, %c0_i32_0 : i32, i32, i32
  }
  func.func @transform_10(%arg0: i32, %arg1: i32) -> (i32, i32, i32) {
    %c0_i32 = arith.constant 0 : i32
    %c0_i32_0 = arith.constant 0 : i32
    %c0_i32_1 = arith.constant 0 : i32
    return %arg1, %c0_i32, %c0_i32_0 : i32, i32, i32
  }
  func.func @transform_11(%arg0: i32, %arg1: i32) -> (i32, i32, i32) {
    %c0_i32 = arith.constant 0 : i32
    %c0_i32_0 = arith.constant 0 : i32
    %c0_i32_1 = arith.constant 0 : i32
    return %arg1, %c0_i32, %c0_i32_0 : i32, i32, i32
  }
  func.func @transform_12(%arg0: i32, %arg1: i32) -> (i32, i32, i32) {
    %c0_i32 = arith.constant 0 : i32
    %c0_i32_0 = arith.constant 0 : i32
    %c0_i32_1 = arith.constant 0 : i32
    return %arg1, %c0_i32, %c0_i32_0 : i32, i32, i32
  }
  func.func @transform_13(%arg0: i32, %arg1: i32) -> (i32, i32, i32) {
    %c0_i32 = arith.constant 0 : i32
    %c0_i32_0 = arith.constant 0 : i32
    %c0_i32_1 = arith.constant 0 : i32
    return %arg1, %c0_i32, %c0_i32_0 : i32, i32, i32
  }
  func.func @transform_14(%arg0: i32, %arg1: i32) -> (i32, i32, i32) {
    %c0_i32 = arith.constant 0 : i32
    %c0_i32_0 = arith.constant 0 : i32
    %c0_i32_1 = arith.constant 0 : i32
    return %arg1, %c0_i32, %c0_i32_0 : i32, i32, i32
  }
  func.func @transform_15(%arg0: i32, %arg1: i32) -> (i32, i32, i32) {
    %c0_i32 = arith.constant 0 : i32
    %c0_i32_0 = arith.constant 0 : i32
    %c0_i32_1 = arith.constant 0 : i32
    return %arg1, %c0_i32, %c0_i32_0 : i32, i32, i32
  }
  func.func @transform_16(%arg0: i32, %arg1: i32) -> (i32, i32, i32) {
    %c0_i32 = arith.constant 0 : i32
    %c0_i32_0 = arith.constant 0 : i32
    %c0_i32_1 = arith.constant 0 : i32
    return %arg1, %c0_i32, %c0_i32_0 : i32, i32, i32
  }
  func.func @transform_17(%arg0: i32, %arg1: i32) -> (i32, i32, i32) {
    %c0_i32 = arith.constant 0 : i32
    %c0_i32_0 = arith.constant 0 : i32
    %c0_i32_1 = arith.constant 0 : i32
    return %arg1, %c0_i32, %c0_i32_0 : i32, i32, i32
  }
  func.func @transform_18(%arg0: i32, %arg1: i32) -> (i32, i32, i32) {
    %c0_i32 = arith.constant 0 : i32
    %c0_i32_0 = arith.constant 0 : i32
    %c0_i32_1 = arith.constant 0 : i32
    return %arg1, %c0_i32, %c0_i32_0 : i32, i32, i32
  }
  func.func @transform_19(%arg0: i32, %arg1: i32) -> (i32, i32, i32) {
    %c0_i32 = arith.constant 0 : i32
    %c0_i32_0 = arith.constant 0 : i32
    %c0_i32_1 = arith.constant 0 : i32
    return %arg1, %c0_i32, %c0_i32_0 : i32, i32, i32
  }
  func.func @transform_20(%arg0: i32, %arg1: i32) -> (i32, i32, i32) {
    %c0_i32 = arith.constant 0 : i32
    %c0_i32_0 = arith.constant 0 : i32
    %c0_i32_1 = arith.constant 0 : i32
    return %arg1, %c0_i32, %c0_i32_0 : i32, i32, i32
  }
  func.func @transform_21(%arg0: i32, %arg1: i32) -> (i32, i32, i32) {
    %c0_i32 = arith.constant 0 : i32
    %c0_i32_0 = arith.constant 0 : i32
    %c0_i32_1 = arith.constant 0 : i32
    return %arg1, %c0_i32, %c0_i32_0 : i32, i32, i32
  }
  func.func @transform_22(%arg0: i32, %arg1: i32) -> (i32, i32, i32) {
    %c0_i32 = arith.constant 0 : i32
    %c0_i32_0 = arith.constant 0 : i32
    %c0_i32_1 = arith.constant 0 : i32
    return %arg1, %c0_i32, %c0_i32_0 : i32, i32, i32
  }
  func.func @transform_23(%arg0: i32, %arg1: i32) -> (i32, i32, i32) {
    %c0_i32 = arith.constant 0 : i32
    %c0_i32_0 = arith.constant 0 : i32
    %c0_i32_1 = arith.constant 0 : i32
    return %arg0, %c0_i32, %c0_i32_0 : i32, i32, i32
  }
  func.func @transform_24(%arg0: i32, %arg1: i32) -> (i32, i32, i32, i32) {
    %c0_i32 = arith.constant 0 : i32
    %c0_i32_0 = arith.constant 0 : i32
    %c0_i32_1 = arith.constant 0 : i32
    return %arg1, %arg0, %c0_i32, %c0_i32_0 : i32, i32, i32, i32
  }
}

</mosaic_0001>

<llo_original>
// kernel: tpu_custom_call.1
$region0: #{tpu_custom_call.1}
  #allocation0 [shape = 'u32[]', space=smem, size = 0x4, offset = 0x4, fixed_abs, tag = 'smem constant byte address 0x4 - core index']
  #allocation1 [shape = 'u32[144,128]{1,0:T(1,128)}', space=vmem, size = 0x12000, scoped, tag = 'internal scratch']
  #allocation2 [shape = 'f32[8,32]{1,0:T(8,128)}', space=vmem, size = 0x1000, scoped, tag = 'scratch operand']
  %s0 = inlined_call_operand.hbm [shape: f32[2,8,32], index: 0, kind: input, shape index: {}]
  %s1 = inlined_call_operand.hbm [shape: f32[8,32], index: 1, kind: input, shape index: {}]
  %s2 = inlined_call_operand.hbm [shape: f32[2,8,32], index: 2, kind: input, shape index: {}]
  %s3 = inlined_call_operand.hbm [shape: f32[1,32], index: 3, kind: input, shape index: {}]
  %s4 = inlined_call_operand.hbm [shape: f32[1,32], index: 4, kind: input, shape index: {}]
  %s5 = inlined_call_operand.hbm [shape: f32[2,8,1], index: 5, kind: input, shape index: {}]
  %s6 = inlined_call_operand.hbm [shape: f32[2,1,8], index: 6, kind: input, shape index: {}]
  %s7 = inlined_call_operand.hbm [shape: bf16[2,32,32], index: 7, kind: input, shape index: {}]
  %s8 = inlined_call_operand.hbm [shape: f32[2,1,32], index: 8, kind: input, shape index: {}]
  %s9 = inlined_call_operand.hbm [shape: bf16[2,32,32], index: 9, kind: input, shape index: {}]
  %s10 = inlined_call_operand.hbm [shape: f32[2,1,32], index: 10, kind: input, shape index: {}]
  %s11 = inlined_call_operand.hbm [shape: bf16[2,32,32], index: 11, kind: input, shape index: {}]
  %s12 = inlined_call_operand.hbm [shape: f32[2,1,32], index: 12, kind: input, shape index: {}]
  %s13 = inlined_call_operand.hbm [shape: bf16[2,32,32], index: 13, kind: input, shape index: {}]
  %s14 = inlined_call_operand.hbm [shape: f32[2,1,32], index: 14, kind: input, shape index: {}]
  %s15 = inlined_call_operand.hbm [shape: f32[2,1,32], index: 15, kind: input, shape index: {}]
  %s16 = inlined_call_operand.hbm [shape: f32[2,1,32], index: 16, kind: input, shape index: {}]
  %s17 = inlined_call_operand.hbm [shape: bf16[2,32,64], index: 17, kind: input, shape index: {}]
  %s18 = inlined_call_operand.hbm [shape: f32[2,1,64], index: 18, kind: input, shape index: {}]
  %s19 = inlined_call_operand.hbm [shape: bf16[2,64,32], index: 19, kind: input, shape index: {}]
  %s20 = inlined_call_operand.hbm [shape: f32[2,1,32], index: 20, kind: input, shape index: {}]
  %s21 = inlined_call_operand.hbm [shape: f32[2,1,32], index: 21, kind: input, shape index: {}]
  %s22 = inlined_call_operand.hbm [shape: f32[2,1,32], index: 22, kind: input, shape index: {}]
  %s23 = inlined_call_operand.hbm [shape: f32[2,8,32], index: 23, kind: output, shape index: {0}]
  %s24 = inlined_call_operand.hbm [shape: f32[2,2,8,32], index: 24, kind: output, shape index: {1}]
  %25 = xla_tuple %s23, %s24
  %s26 = sld [smem:[#allocation0]]
  $region229: #{tpu_custom_call.1} parent=0
    _
  %s28 = ssub.s32 1, %s26
  %s29 = scalar_select 0, %s28, %s26
  $region1: #{tpu_custom_call.1} parent=0
    #allocation3 [shape = 'u8[8192]{0}', space=vmem, size = 0x2000, scoped, tag = 'input window, operand 0']
    #allocation4 [shape = 's32[2]{0}', space=sflag, size = 0x8, scoped, tag = 'scoped memory for tpu_custom_call.1']
    #allocation5 [shape = 's32[2]{0}', space=sflag, size = 0x8, scoped, tag = 'scoped memory for tpu_custom_call.1']
    #allocation6 [shape = 'u8[4096]{0}', space=vmem, size = 0x1000, scoped, tag = 'input window, operand 1, single buffered']
    #allocation7 [shape = 's32[1]{0}', space=sflag, size = 0x4, scoped, tag = 'scoped memory for tpu_custom_call.1']
    #allocation8 [shape = 'u8[8192]{0}', space=vmem, size = 0x2000, scoped, tag = 'input window, operand 2']
    #allocation9 [shape = 'u8[512]{0}', space=vmem, size = 0x400, scoped, tag = 'input window, operand 3, single buffered']
    #allocation10 [shape = 'u8[512]{0}', space=vmem, size = 0x400, scoped, tag = 'input window, operand 4, single buffered']
    #allocation11 [shape = 's32[1]{0}', space=sflag, size = 0x4, scoped, tag = 'scoped memory for tpu_custom_call.1']
    #allocation12 [shape = 'u8[8192]{0}', space=vmem, size = 0x2000, scoped, tag = 'input window, operand 5']
    #allocation13 [shape = 'u8[1024]{0}', space=vmem, size = 0x400, scoped, tag = 'input window, operand 6']
    #allocation14 [shape = 'u8[16384]{0}', space=vmem, size = 0x4000, scoped, tag = 'input window, operand 7']
    #allocation15 [shape = 'u8[1024]{0}', space=vmem, size = 0x400, scoped, tag = 'input window, operand 8']
    #allocation16 [shape = 'u8[16384]{0}', space=vmem, size = 0x4000, scoped, tag = 'input window, operand 9']
    #allocation17 [shape = 'u8[1024]{0}', space=vmem, size = 0x400, scoped, tag = 'input window, operand 10']
    #allocation18 [shape = 'u8[16384]{0}', space=vmem, size = 0x4000, scoped, tag = 'input window, operand 11']
    #allocation19 [shape = 'u8[1024]{0}', space=vmem, size = 0x400, scoped, tag = 'input window, operand 12']
    #allocation20 [shape = 'u8[16384]{0}', space=vmem, size = 0x4000, scoped, tag = 'input window, operand 13']
    #allocation21 [shape = 'u8[1024]{0}', space=vmem, size = 0x400, scoped, tag = 'input window, operand 14']
    #allocation22 [shape = 'u8[1024]{0}', space=vmem, size = 0x400, scoped, tag = 'input window, operand 15']
    #allocation23 [shape = 'u8[1024]{0}', space=vmem, size = 0x400, scoped, tag = 'input window, operand 16']
    #allocation24 [shape = 'u8[16384]{0}', space=vmem, size = 0x4000, scoped, tag = 'input window, operand 17']
    #allocation25 [shape = 'u8[1024]{0}', space=vmem, size = 0x400, scoped, tag = 'input window, operand 18']
    #allocation26 [shape = 'u8[32768]{0}', space=vmem, size = 0x8000, scoped, tag = 'input window, operand 19']
    #allocation27 [shape = 'u8[1024]{0}', space=vmem, size = 0x400, scoped, tag = 'input window, operand 20']
    #allocation28 [shape = 'u8[1024]{0}', space=vmem, size = 0x400, scoped, tag = 'input window, operand 21']
    #allocation29 [shape = 'u8[1024]{0}', space=vmem, size = 0x400, scoped, tag = 'input window, operand 22']
    #allocation30 [shape = 'u8[8192]{0}', space=vmem, size = 0x2000, scoped, tag = 'output window, operand 0']
    #allocation31 [shape = 'u8[8192]{0}', space=vmem, size = 0x2000, scoped, tag = 'output window, operand 1']
    #allocation32 [shape = 's32[2]{0}', space=sflag, size = 0x8, scoped, tag = 'scoped memory for tpu_custom_call.1']
    %30 = vsyncpa [#allocation4], 0
    %s31 = scalar_lea.sflag [#allocation4], 1
    %32 = vsyncpa %s31, 0
    %33 = vsyncpa [#allocation7], 0
    %34 = vsyncpa [#allocation11], 0
    %35 = vsyncpa [#allocation5], 0
    %s36 = scalar_lea.sflag [#allocation5], 1
    %37 = vsyncpa %s36, 0
    %38 = vsyncpa [#allocation32], 0
    %s39 = scalar_lea.sflag [#allocation32], 1
    %40 = vsyncpa %s39, 0
    loop: start=0, step=1, limit=6
    $region2: #{tpu_custom_call.1} parent=1 // loop_pre_header
      _
    $region3: #{tpu_custom_call.1} parent=1 // loop_header
      %s42 = sphi 0, %s46
      %p43 = scmp.ge.s32.totalorder %s42, 6
      %s49 = sphi 0, %s61
      %s50 = sphi 0, %s57
      %s51 = sphi 0, %s49
      %s52 = sphi 0, %s50
      %s53 = sphi 0, %s51
      %s54 = sphi 0, %s52
      %s64 = sphi 0, %s66
      %s67 = sphi 0, %s64
      %s68 = sphi 0, %s67
      %s84 = sphi 0, %s68
      %s88 = sphi 0, %s88
      %s90 = sphi 0, %s88
      %s91 = sphi 0, %s90
      %s105 = sphi 0, %s91
      %s111 = sphi 0, %s113
      %s114 = sphi 0, %s111
      %s115 = sphi 0, %s114
      %s131 = sphi 0, %s115
      %s135 = sphi 0, %s135
      %s137 = sphi 0, %s135
      %s138 = sphi 0, %s137
      %s152 = sphi 0, %s138
      %s156 = sphi 0, %s156
      %s158 = sphi 0, %s156
      %s159 = sphi 0, %s158
      %s173 = sphi 0, %s159
      %s179 = sphi 0, %s181
      %s182 = sphi 0, %s179
      %s183 = sphi 0, %s182
      %s199 = sphi 0, %s183
      %s205 = sphi 0, %s207
      %s208 = sphi 0, %s205
      %s209 = sphi 0, %s208
      %s225 = sphi 0, %s209
      %s231 = sphi 0, %s233
      %s234 = sphi 0, %s231
      %s235 = sphi 0, %s234
      %s251 = sphi 0, %s235
      %s257 = sphi 0, %s259
      %s260 = sphi 0, %s257
      %s261 = sphi 0, %s260
      %s277 = sphi 0, %s261
      %s283 = sphi 0, %s285
      %s286 = sphi 0, %s283
      %s287 = sphi 0, %s286
      %s303 = sphi 0, %s287
      %s309 = sphi 0, %s311
      %s312 = sphi 0, %s309
      %s313 = sphi 0, %s312
      %s329 = sphi 0, %s313
      %s335 = sphi 0, %s337
      %s338 = sphi 0, %s335
      %s339 = sphi 0, %s338
      %s355 = sphi 0, %s339
      %s361 = sphi 0, %s363
      %s364 = sphi 0, %s361
      %s365 = sphi 0, %s364
      %s381 = sphi 0, %s365
      %s387 = sphi 0, %s389
      %s390 = sphi 0, %s387
      %s391 = sphi 0, %s390
      %s407 = sphi 0, %s391
      %s413 = sphi 0, %s415
      %s416 = sphi 0, %s413
      %s417 = sphi 0, %s416
      %s433 = sphi 0, %s417
      %s439 = sphi 0, %s441
      %s442 = sphi 0, %s439
      %s443 = sphi 0, %s442
      %s459 = sphi 0, %s443
      %s465 = sphi 0, %s467
      %s468 = sphi 0, %s465
      %s469 = sphi 0, %s468
      %s485 = sphi 0, %s469
      %s491 = sphi 0, %s493
      %s494 = sphi 0, %s491
      %s495 = sphi 0, %s494
      %s511 = sphi 0, %s495
      %s517 = sphi 0, %s519
      %s520 = sphi 0, %s517
      %s521 = sphi 0, %s520
      %s537 = sphi 0, %s521
      %s543 = sphi 0, %s545
      %s546 = sphi 0, %s543
      %s547 = sphi 0, %s546
      %s563 = sphi 0, %s547
      %s569 = sphi 0, %s571
      %s572 = sphi 0, %s569
      %s573 = sphi 0, %s572
      %s589 = sphi 0, %s573
      %s595 = sphi 0, %s597
      %s598 = sphi 0, %s595
      %s599 = sphi 0, %s598
      %s615 = sphi 0, %s599
      %s621 = sphi 0, %s623
      %s624 = sphi 0, %s621
      %s625 = sphi 0, %s624
      %s641 = sphi 0, %s625
      %s647 = sphi 0, %s649
      %s650 = sphi 0, %s647
      %s651 = sphi 0, %s650
      %s667 = sphi 0, %s651
      %s675 = sphi 0, %s677
      %s678 = sphi 0, %s675
      %s679 = sphi 0, %s678
      %s695 = sphi 0, %s679
    $region4: #{tpu_custom_call.1} parent=1 // loop_header_branch
      %45 = sbr.rel (%p43) target = $region8
    $region5: #{tpu_custom_call.1} parent=1 // loop_body
      %s47 = ssub.s32 %s42, 1
      %s48 = ssub.s32 %s42, 2
      %s55 = sadd.s32 1, %s50
      %p56 = scmp.ge.s32.totalorder %s55, 2
      %s57 = scalar_select %p56, 0, %s55
      %s58 = sadd.s32 1, %s49
      %s59 = scalar_select %p56, %s58, %s49
      %p60 = scmp.ge.s32.totalorder %s59, 2
      %s61 = scalar_select %p60, 0, %s59
      %s62 = ssub.s32 %s49, %s61
      %p63 = scmp.eq.s32.totalorder %s62, 0
      %s65 = sadd.s32 %s64, 1
      %s66 = scalar_select %p63, %s64, %s65
      %p69 = pneg %p63
      %p70 = scmp.eq.s32.totalorder %s42, 3
      %p71 = por %p69, %p70
      %p72 = scmp.ne.s32.totalorder %s64, %s67
      %p73 = scmp.eq.s32.totalorder %s42, 0
      %p74 = por %p72, %p73
      %p75 = scmp.ne.s32.totalorder %s64, %s67
      %p76 = scmp.eq.s32.totalorder %s47, 3
      %p77 = por %p75, %p76
      %p78 = scmp.ne.s32.totalorder %s67, %s68
      %p79 = scmp.eq.s32.totalorder %s47, 0
      %p80 = por %p78, %p79
      %p81 = scmp.ne.s32.totalorder %s67, %s68
      %p82 = scmp.eq.s32.totalorder %s48, 3
      %p83 = por %p81, %p82
      %p85 = scmp.ne.s32.totalorder %s68, %s84
      %p86 = scmp.eq.s32.totalorder %s48, 0
      %p87 = por %p85, %p86
      %s89 = sadd.s32 %s88, 1
      %p92 = scmp.eq.s32.totalorder %s42, 3
      %p93 = scmp.ne.s32.totalorder %s88, %s90
      %p94 = scmp.eq.s32.totalorder %s42, 0
      %p95 = por %p93, %p94
      %p96 = scmp.ne.s32.totalorder %s88, %s90
      %p97 = scmp.eq.s32.totalorder %s47, 3
      %p98 = por %p96, %p97
      %p99 = scmp.ne.s32.totalorder %s90, %s91
      %p100 = scmp.eq.s32.totalorder %s47, 0
      %p101 = por %p99, %p100
      %p102 = scmp.ne.s32.totalorder %s90, %s91
      %p103 = scmp.eq.s32.totalorder %s48, 3
      %p104 = por %p102, %p103
      %p106 = scmp.ne.s32.totalorder %s91, %s105
      %p107 = scmp.eq.s32.totalorder %s48, 0
      %p108 = por %p106, %p107
      %s109 = ssub.s32 %s49, %s61
      %p110 = scmp.eq.s32.totalorder %s109, 0
      %s112 = sadd.s32 %s111, 1
      %s113 = scalar_select %p110, %s111, %s112
      %p116 = pneg %p110
      %p117 = scmp.eq.s32.totalorder %s42, 3
      %p118 = por %p116, %p117
      %p119 = scmp.ne.s32.totalorder %s111, %s114
      %p120 = scmp.eq.s32.totalorder %s42, 0
      %p121 = por %p119, %p120
      %p122 = scmp.ne.s32.totalorder %s111, %s114
      %p123 = scmp.eq.s32.totalorder %s47, 3
      %p124 = por %p122, %p123
      %p125 = scmp.ne.s32.totalorder %s114, %s115
      %p126 = scmp.eq.s32.totalorder %s47, 0
      %p127 = por %p125, %p126
      %p128 = scmp.ne.s32.totalorder %s114, %s115
      %p129 = scmp.eq.s32.totalorder %s48, 3
      %p130 = por %p128, %p129
      %p132 = scmp.ne.s32.totalorder %s115, %s131
      %p133 = scmp.eq.s32.totalorder %s48, 0
      %p134 = por %p132, %p133
      %s136 = sadd.s32 %s135, 1
      %p139 = scmp.eq.s32.totalorder %s42, 3
      %p140 = scmp.ne.s32.totalorder %s135, %s137
      %p141 = scmp.eq.s32.totalorder %s42, 0
      %p142 = por %p140, %p141
      %p143 = scmp.ne.s32.totalorder %s135, %s137
      %p144 = scmp.eq.s32.totalorder %s47, 3
      %p145 = por %p143, %p144
      %p146 = scmp.ne.s32.totalorder %s137, %s138
      %p147 = scmp.eq.s32.totalorder %s47, 0
      %p148 = por %p146, %p147
      %p149 = scmp.ne.s32.totalorder %s137, %s138
      %p150 = scmp.eq.s32.totalorder %s48, 3
      %p151 = por %p149, %p150
      %p153 = scmp.ne.s32.totalorder %s138, %s152
      %p154 = scmp.eq.s32.totalorder %s48, 0
      %p155 = por %p153, %p154
      %s157 = sadd.s32 %s156, 1
      %p160 = scmp.eq.s32.totalorder %s42, 3
      %p161 = scmp.ne.s32.totalorder %s156, %s158
      %p162 = scmp.eq.s32.totalorder %s42, 0
      %p163 = por %p161, %p162
      %p164 = scmp.ne.s32.totalorder %s156, %s158
      %p165 = scmp.eq.s32.totalorder %s47, 3
      %p166 = por %p164, %p165
      %p167 = scmp.ne.s32.totalorder %s158, %s159
      %p168 = scmp.eq.s32.totalorder %s47, 0
      %p169 = por %p167, %p168
      %p170 = scmp.ne.s32.totalorder %s158, %s159
      %p171 = scmp.eq.s32.totalorder %s48, 3
      %p172 = por %p170, %p171
      %p174 = scmp.ne.s32.totalorder %s159, %s173
      %p175 = scmp.eq.s32.totalorder %s48, 0
      %p176 = por %p174, %p175
      %s177 = ssub.s32 %s49, %s61
      %p178 = scmp.eq.s32.totalorder %s177, 0
      %s180 = sadd.s32 %s179, 1
      %s181 = scalar_select %p178, %s179, %s180
      %p184 = pneg %p178
      %p185 = scmp.eq.s32.totalorder %s42, 3
      %p186 = por %p184, %p185
      %p187 = scmp.ne.s32.totalorder %s179, %s182
      %p188 = scmp.eq.s32.totalorder %s42, 0
      %p189 = por %p187, %p188
      %p190 = scmp.ne.s32.totalorder %s179, %s182
      %p191 = scmp.eq.s32.totalorder %s47, 3
      %p192 = por %p190, %p191
      %p193 = scmp.ne.s32.totalorder %s182, %s183
      %p194 = scmp.eq.s32.totalorder %s47, 0
      %p195 = por %p193, %p194
      %p196 = scmp.ne.s32.totalorder %s182, %s183
      %p197 = scmp.eq.s32.totalorder %s48, 3
      %p198 = por %p196, %p197
      %p200 = scmp.ne.s32.totalorder %s183, %s199
      %p201 = scmp.eq.s32.totalorder %s48, 0
      %p202 = por %p200, %p201
      %s203 = ssub.s32 %s49, %s61
      %p204 = scmp.eq.s32.totalorder %s203, 0
      %s206 = sadd.s32 %s205, 1
      %s207 = scalar_select %p204, %s205, %s206
      %p210 = pneg %p204
      %p211 = scmp.eq.s32.totalorder %s42, 3
      %p212 = por %p210, %p211
      %p213 = scmp.ne.s32.totalorder %s205, %s208
      %p214 = scmp.eq.s32.totalorder %s42, 0
      %p215 = por %p213, %p214
      %p216 = scmp.ne.s32.totalorder %s205, %s208
      %p217 = scmp.eq.s32.totalorder %s47, 3
      %p218 = por %p216, %p217
      %p219 = scmp.ne.s32.totalorder %s208, %s209
      %p220 = scmp.eq.s32.totalorder %s47, 0
      %p221 = por %p219, %p220
      %p222 = scmp.ne.s32.totalorder %s208, %s209
      %p223 = scmp.eq.s32.totalorder %s48, 3
      %p224 = por %p222, %p223
      %p226 = scmp.ne.s32.totalorder %s209, %s225
      %p227 = scmp.eq.s32.totalorder %s48, 0
      %p228 = por %p226, %p227
      %s229 = ssub.s32 %s50, %s57
      %p230 = scmp.eq.s32.totalorder %s229, 0
      %s232 = sadd.s32 %s231, 1
      %s233 = scalar_select %p230, %s231, %s232
      %p236 = pneg %p230
      %p237 = scmp.eq.s32.totalorder %s42, 3
      %p238 = por %p236, %p237
      %p239 = scmp.ne.s32.totalorder %s231, %s234
      %p240 = scmp.eq.s32.totalorder %s42, 0
      %p241 = por %p239, %p240
      %p242 = scmp.ne.s32.totalorder %s231, %s234
      %p243 = scmp.eq.s32.totalorder %s47, 3
      %p244 = por %p242, %p243
      %p245 = scmp.ne.s32.totalorder %s234, %s235
      %p246 = scmp.eq.s32.totalorder %s47, 0
      %p247 = por %p245, %p246
      %p248 = scmp.ne.s32.totalorder %s234, %s235
      %p249 = scmp.eq.s32.totalorder %s48, 3
      %p250 = por %p248, %p249
      %p252 = scmp.ne.s32.totalorder %s235, %s251
      %p253 = scmp.eq.s32.totalorder %s48, 0
      %p254 = por %p252, %p253
      %s255 = ssub.s32 %s50, %s57
      %p256 = scmp.eq.s32.totalorder %s255, 0
      %s258 = sadd.s32 %s257, 1
      %s259 = scalar_select %p256, %s257, %s258
      %p262 = pneg %p256
      %p263 = scmp.eq.s32.totalorder %s42, 3
      %p264 = por %p262, %p263
      %p265 = scmp.ne.s32.totalorder %s257, %s260
      %p266 = scmp.eq.s32.totalorder %s42, 0
      %p267 = por %p265, %p266
      %p268 = scmp.ne.s32.totalorder %s257, %s260
      %p269 = scmp.eq.s32.totalorder %s47, 3
      %p270 = por %p268, %p269
      %p271 = scmp.ne.s32.totalorder %s260, %s261
      %p272 = scmp.eq.s32.totalorder %s47, 0
      %p273 = por %p271, %p272
      %p274 = scmp.ne.s32.totalorder %s260, %s261
      %p275 = scmp.eq.s32.totalorder %s48, 3
      %p276 = por %p274, %p275
      %p278 = scmp.ne.s32.totalorder %s261, %s277
      %p279 = scmp.eq.s32.totalorder %s48, 0
      %p280 = por %p278, %p279
      %s281 = ssub.s32 %s50, %s57
      %p282 = scmp.eq.s32.totalorder %s281, 0
      %s284 = sadd.s32 %s283, 1
      %s285 = scalar_select %p282, %s283, %s284
      %p288 = pneg %p282
      %p289 = scmp.eq.s32.totalorder %s42, 3
      %p290 = por %p288, %p289
      %p291 = scmp.ne.s32.totalorder %s283, %s286
      %p292 = scmp.eq.s32.totalorder %s42, 0
      %p293 = por %p291, %p292
      %p294 = scmp.ne.s32.totalorder %s283, %s286
      %p295 = scmp.eq.s32.totalorder %s47, 3
      %p296 = por %p294, %p295
      %p297 = scmp.ne.s32.totalorder %s286, %s287
      %p298 = scmp.eq.s32.totalorder %s47, 0
      %p299 = por %p297, %p298
      %p300 = scmp.ne.s32.totalorder %s286, %s287
      %p301 = scmp.eq.s32.totalorder %s48, 3
      %p302 = por %p300, %p301
      %p304 = scmp.ne.s32.totalorder %s287, %s303
      %p305 = scmp.eq.s32.totalorder %s48, 0
      %p306 = por %p304, %p305
      %s307 = ssub.s32 %s50, %s57
      %p308 = scmp.eq.s32.totalorder %s307, 0
      %s310 = sadd.s32 %s309, 1
      %s311 = scalar_select %p308, %s309, %s310
      %p314 = pneg %p308
      %p315 = scmp.eq.s32.totalorder %s42, 3
      %p316 = por %p314, %p315
      %p317 = scmp.ne.s32.totalorder %s309, %s312
      %p318 = scmp.eq.s32.totalorder %s42, 0
      %p319 = por %p317, %p318
      %p320 = scmp.ne.s32.totalorder %s309, %s312
      %p321 = scmp.eq.s32.totalorder %s47, 3
      %p322 = por %p320, %p321
      %p323 = scmp.ne.s32.totalorder %s312, %s313
      %p324 = scmp.eq.s32.totalorder %s47, 0
      %p325 = por %p323, %p324
      %p326 = scmp.ne.s32.totalorder %s312, %s313
      %p327 = scmp.eq.s32.totalorder %s48, 3
      %p328 = por %p326, %p327
      %p330 = scmp.ne.s32.totalorder %s313, %s329
      %p331 = scmp.eq.s32.totalorder %s48, 0
      %p332 = por %p330, %p331
      %s333 = ssub.s32 %s50, %s57
      %p334 = scmp.eq.s32.totalorder %s333, 0
      %s336 = sadd.s32 %s335, 1
      %s337 = scalar_select %p334, %s335, %s336
      %p340 = pneg %p334
      %p341 = scmp.eq.s32.totalorder %s42, 3
      %p342 = por %p340, %p341
      %p343 = scmp.ne.s32.totalorder %s335, %s338
      %p344 = scmp.eq.s32.totalorder %s42, 0
      %p345 = por %p343, %p344
      %p346 = scmp.ne.s32.totalorder %s335, %s338
      %p347 = scmp.eq.s32.totalorder %s47, 3
      %p348 = por %p346, %p347
      %p349 = scmp.ne.s32.totalorder %s338, %s339
      %p350 = scmp.eq.s32.totalorder %s47, 0
      %p351 = por %p349, %p350
      %p352 = scmp.ne.s32.totalorder %s338, %s339
      %p353 = scmp.eq.s32.totalorder %s48, 3
      %p354 = por %p352, %p353
      %p356 = scmp.ne.s32.totalorder %s339, %s355
      %p357 = scmp.eq.s32.totalorder %s48, 0
      %p358 = por %p356, %p357
      %s359 = ssub.s32 %s50, %s57
      %p360 = scmp.eq.s32.totalorder %s359, 0
      %s362 = sadd.s32 %s361, 1
      %s363 = scalar_select %p360, %s361, %s362
      %p366 = pneg %p360
      %p367 = scmp.eq.s32.totalorder %s42, 3
      %p368 = por %p366, %p367
      %p369 = scmp.ne.s32.totalorder %s361, %s364
      %p370 = scmp.eq.s32.totalorder %s42, 0
      %p371 = por %p369, %p370
      %p372 = scmp.ne.s32.totalorder %s361, %s364
      %p373 = scmp.eq.s32.totalorder %s47, 3
      %p374 = por %p372, %p373
      %p375 = scmp.ne.s32.totalorder %s364, %s365
      %p376 = scmp.eq.s32.totalorder %s47, 0
      %p377 = por %p375, %p376
      %p378 = scmp.ne.s32.totalorder %s364, %s365
      %p379 = scmp.eq.s32.totalorder %s48, 3
      %p380 = por %p378, %p379
      %p382 = scmp.ne.s32.totalorder %s365, %s381
      %p383 = scmp.eq.s32.totalorder %s48, 0
      %p384 = por %p382, %p383
      %s385 = ssub.s32 %s50, %s57
      %p386 = scmp.eq.s32.totalorder %s385, 0
      %s388 = sadd.s32 %s387, 1
      %s389 = scalar_select %p386, %s387, %s388
      %p392 = pneg %p386
      %p393 = scmp.eq.s32.totalorder %s42, 3
      %p394 = por %p392, %p393
      %p395 = scmp.ne.s32.totalorder %s387, %s390
      %p396 = scmp.eq.s32.totalorder %s42, 0
      %p397 = por %p395, %p396
      %p398 = scmp.ne.s32.totalorder %s387, %s390
      %p399 = scmp.eq.s32.totalorder %s47, 3
      %p400 = por %p398, %p399
      %p401 = scmp.ne.s32.totalorder %s390, %s391
      %p402 = scmp.eq.s32.totalorder %s47, 0
      %p403 = por %p401, %p402
      %p404 = scmp.ne.s32.totalorder %s390, %s391
      %p405 = scmp.eq.s32.totalorder %s48, 3
      %p406 = por %p404, %p405
      %p408 = scmp.ne.s32.totalorder %s391, %s407
      %p409 = scmp.eq.s32.totalorder %s48, 0
      %p410 = por %p408, %p409
      %s411 = ssub.s32 %s50, %s57
      %p412 = scmp.eq.s32.totalorder %s411, 0
      %s414 = sadd.s32 %s413, 1
      %s415 = scalar_select %p412, %s413, %s414
      %p418 = pneg %p412
      %p419 = scmp.eq.s32.totalorder %s42, 3
      %p420 = por %p418, %p419
      %p421 = scmp.ne.s32.totalorder %s413, %s416
      %p422 = scmp.eq.s32.totalorder %s42, 0
      %p423 = por %p421, %p422
      %p424 = scmp.ne.s32.totalorder %s413, %s416
      %p425 = scmp.eq.s32.totalorder %s47, 3
      %p426 = por %p424, %p425
      %p427 = scmp.ne.s32.totalorder %s416, %s417
      %p428 = scmp.eq.s32.totalorder %s47, 0
      %p429 = por %p427, %p428
      %p430 = scmp.ne.s32.totalorder %s416, %s417
      %p431 = scmp.eq.s32.totalorder %s48, 3
      %p432 = por %p430, %p431
      %p434 = scmp.ne.s32.totalorder %s417, %s433
      %p435 = scmp.eq.s32.totalorder %s48, 0
      %p436 = por %p434, %p435
      %s437 = ssub.s32 %s50, %s57
      %p438 = scmp.eq.s32.totalorder %s437, 0
      %s440 = sadd.s32 %s439, 1
      %s441 = scalar_select %p438, %s439, %s440
      %p444 = pneg %p438
      %p445 = scmp.eq.s32.totalorder %s42, 3
      %p446 = por %p444, %p445
      %p447 = scmp.ne.s32.totalorder %s439, %s442
      %p448 = scmp.eq.s32.totalorder %s42, 0
      %p449 = por %p447, %p448
      %p450 = scmp.ne.s32.totalorder %s439, %s442
      %p451 = scmp.eq.s32.totalorder %s47, 3
      %p452 = por %p450, %p451
      %p453 = scmp.ne.s32.totalorder %s442, %s443
      %p454 = scmp.eq.s32.totalorder %s47, 0
      %p455 = por %p453, %p454
      %p456 = scmp.ne.s32.totalorder %s442, %s443
      %p457 = scmp.eq.s32.totalorder %s48, 3
      %p458 = por %p456, %p457
      %p460 = scmp.ne.s32.totalorder %s443, %s459
      %p461 = scmp.eq.s32.totalorder %s48, 0
      %p462 = por %p460, %p461
      %s463 = ssub.s32 %s50, %s57
      %p464 = scmp.eq.s32.totalorder %s463, 0
      %s466 = sadd.s32 %s465, 1
      %s467 = scalar_select %p464, %s465, %s466
      %p470 = pneg %p464
      %p471 = scmp.eq.s32.totalorder %s42, 3
      %p472 = por %p470, %p471
      %p473 = scmp.ne.s32.totalorder %s465, %s468
      %p474 = scmp.eq.s32.totalorder %s42, 0
      %p475 = por %p473, %p474
      %p476 = scmp.ne.s32.totalorder %s465, %s468
      %p477 = scmp.eq.s32.totalorder %s47, 3
      %p478 = por %p476, %p477
      %p479 = scmp.ne.s32.totalorder %s468, %s469
      %p480 = scmp.eq.s32.totalorder %s47, 0
      %p481 = por %p479, %p480
      %p482 = scmp.ne.s32.totalorder %s468, %s469
      %p483 = scmp.eq.s32.totalorder %s48, 3
      %p484 = por %p482, %p483
      %p486 = scmp.ne.s32.totalorder %s469, %s485
      %p487 = scmp.eq.s32.totalorder %s48, 0
      %p488 = por %p486, %p487
      %s489 = ssub.s32 %s50, %s57
      %p490 = scmp.eq.s32.totalorder %s489, 0
      %s492 = sadd.s32 %s491, 1
      %s493 = scalar_select %p490, %s491, %s492
      %p496 = pneg %p490
      %p497 = scmp.eq.s32.totalorder %s42, 3
      %p498 = por %p496, %p497
      %p499 = scmp.ne.s32.totalorder %s491, %s494
      %p500 = scmp.eq.s32.totalorder %s42, 0
      %p501 = por %p499, %p500
      %p502 = scmp.ne.s32.totalorder %s491, %s494
      %p503 = scmp.eq.s32.totalorder %s47, 3
      %p504 = por %p502, %p503
      %p505 = scmp.ne.s32.totalorder %s494, %s495
      %p506 = scmp.eq.s32.totalorder %s47, 0
      %p507 = por %p505, %p506
      %p508 = scmp.ne.s32.totalorder %s494, %s495
      %p509 = scmp.eq.s32.totalorder %s48, 3
      %p510 = por %p508, %p509
      %p512 = scmp.ne.s32.totalorder %s495, %s511
      %p513 = scmp.eq.s32.totalorder %s48, 0
      %p514 = por %p512, %p513
      %s515 = ssub.s32 %s50, %s57
      %p516 = scmp.eq.s32.totalorder %s515, 0
      %s518 = sadd.s32 %s517, 1
      %s519 = scalar_select %p516, %s517, %s518
      %p522 = pneg %p516
      %p523 = scmp.eq.s32.totalorder %s42, 3
      %p524 = por %p522, %p523
      %p525 = scmp.ne.s32.totalorder %s517, %s520
      %p526 = scmp.eq.s32.totalorder %s42, 0
      %p527 = por %p525, %p526
      %p528 = scmp.ne.s32.totalorder %s517, %s520
      %p529 = scmp.eq.s32.totalorder %s47, 3
      %p530 = por %p528, %p529
      %p531 = scmp.ne.s32.totalorder %s520, %s521
      %p532 = scmp.eq.s32.totalorder %s47, 0
      %p533 = por %p531, %p532
      %p534 = scmp.ne.s32.totalorder %s520, %s521
      %p535 = scmp.eq.s32.totalorder %s48, 3
      %p536 = por %p534, %p535
      %p538 = scmp.ne.s32.totalorder %s521, %s537
      %p539 = scmp.eq.s32.totalorder %s48, 0
      %p540 = por %p538, %p539
      %s541 = ssub.s32 %s50, %s57
      %p542 = scmp.eq.s32.totalorder %s541, 0
      %s544 = sadd.s32 %s543, 1
      %s545 = scalar_select %p542, %s543, %s544
      %p548 = pneg %p542
      %p549 = scmp.eq.s32.totalorder %s42, 3
      %p550 = por %p548, %p549
      %p551 = scmp.ne.s32.totalorder %s543, %s546
      %p552 = scmp.eq.s32.totalorder %s42, 0
      %p553 = por %p551, %p552
      %p554 = scmp.ne.s32.totalorder %s543, %s546
      %p555 = scmp.eq.s32.totalorder %s47, 3
      %p556 = por %p554, %p555
      %p557 = scmp.ne.s32.totalorder %s546, %s547
      %p558 = scmp.eq.s32.totalorder %s47, 0
      %p559 = por %p557, %p558
      %p560 = scmp.ne.s32.totalorder %s546, %s547
      %p561 = scmp.eq.s32.totalorder %s48, 3
      %p562 = por %p560, %p561
      %p564 = scmp.ne.s32.totalorder %s547, %s563
      %p565 = scmp.eq.s32.totalorder %s48, 0
      %p566 = por %p564, %p565
      %s567 = ssub.s32 %s50, %s57
      %p568 = scmp.eq.s32.totalorder %s567, 0
      %s570 = sadd.s32 %s569, 1
      %s571 = scalar_select %p568, %s569, %s570
      %p574 = pneg %p568
      %p575 = scmp.eq.s32.totalorder %s42, 3
      %p576 = por %p574, %p575
      %p577 = scmp.ne.s32.totalorder %s569, %s572
      %p578 = scmp.eq.s32.totalorder %s42, 0
      %p579 = por %p577, %p578
      %p580 = scmp.ne.s32.totalorder %s569, %s572
      %p581 = scmp.eq.s32.totalorder %s47, 3
      %p582 = por %p580, %p581
      %p583 = scmp.ne.s32.totalorder %s572, %s573
      %p584 = scmp.eq.s32.totalorder %s47, 0
      %p585 = por %p583, %p584
      %p586 = scmp.ne.s32.totalorder %s572, %s573
      %p587 = scmp.eq.s32.totalorder %s48, 3
      %p588 = por %p586, %p587
      %p590 = scmp.ne.s32.totalorder %s573, %s589
      %p591 = scmp.eq.s32.totalorder %s48, 0
      %p592 = por %p590, %p591
      %s593 = ssub.s32 %s50, %s57
      %p594 = scmp.eq.s32.totalorder %s593, 0
      %s596 = sadd.s32 %s595, 1
      %s597 = scalar_select %p594, %s595, %s596
      %p600 = pneg %p594
      %p601 = scmp.eq.s32.totalorder %s42, 3
      %p602 = por %p600, %p601
      %p603 = scmp.ne.s32.totalorder %s595, %s598
      %p604 = scmp.eq.s32.totalorder %s42, 0
      %p605 = por %p603, %p604
      %p606 = scmp.ne.s32.totalorder %s595, %s598
      %p607 = scmp.eq.s32.totalorder %s47, 3
      %p608 = por %p606, %p607
      %p609 = scmp.ne.s32.totalorder %s598, %s599
      %p610 = scmp.eq.s32.totalorder %s47, 0
      %p611 = por %p609, %p610
      %p612 = scmp.ne.s32.totalorder %s598, %s599
      %p613 = scmp.eq.s32.totalorder %s48, 3
      %p614 = por %p612, %p613
      %p616 = scmp.ne.s32.totalorder %s599, %s615
      %p617 = scmp.eq.s32.totalorder %s48, 0
      %p618 = por %p616, %p617
      %s619 = ssub.s32 %s50, %s57
      %p620 = scmp.eq.s32.totalorder %s619, 0
      %s622 = sadd.s32 %s621, 1
      %s623 = scalar_select %p620, %s621, %s622
      %p626 = pneg %p620
      %p627 = scmp.eq.s32.totalorder %s42, 3
      %p628 = por %p626, %p627
      %p629 = scmp.ne.s32.totalorder %s621, %s624
      %p630 = scmp.eq.s32.totalorder %s42, 0
      %p631 = por %p629, %p630
      %p632 = scmp.ne.s32.totalorder %s621, %s624
      %p633 = scmp.eq.s32.totalorder %s47, 3
      %p634 = por %p632, %p633
      %p635 = scmp.ne.s32.totalorder %s624, %s625
      %p636 = scmp.eq.s32.totalorder %s47, 0
      %p637 = por %p635, %p636
      %p638 = scmp.ne.s32.totalorder %s624, %s625
      %p639 = scmp.eq.s32.totalorder %s48, 3
      %p640 = por %p638, %p639
      %p642 = scmp.ne.s32.totalorder %s625, %s641
      %p643 = scmp.eq.s32.totalorder %s48, 0
      %p644 = por %p642, %p643
      %s645 = ssub.s32 %s49, %s61
      %p646 = scmp.eq.s32.totalorder %s645, 0
      %s648 = sadd.s32 %s647, 1
      %s649 = scalar_select %p646, %s647, %s648
      %p652 = pneg %p646
      %p653 = scmp.eq.s32.totalorder %s42, 3
      %p654 = por %p652, %p653
      %p655 = scmp.ne.s32.totalorder %s647, %s650
      %p656 = scmp.eq.s32.totalorder %s42, 0
      %p657 = por %p655, %p656
      %p658 = scmp.ne.s32.totalorder %s647, %s650
      %p659 = scmp.eq.s32.totalorder %s47, 3
      %p660 = por %p658, %p659
      %p661 = scmp.ne.s32.totalorder %s650, %s651
      %p662 = scmp.eq.s32.totalorder %s47, 0
      %p663 = por %p661, %p662
      %p664 = scmp.ne.s32.totalorder %s650, %s651
      %p665 = scmp.eq.s32.totalorder %s48, 3
      %p666 = por %p664, %p665
      %p668 = scmp.ne.s32.totalorder %s651, %s667
      %p669 = scmp.eq.s32.totalorder %s48, 0
      %p670 = por %p668, %p669
      %s671 = ssub.s32 %s50, %s57
      %s672 = ssub.s32 %s49, %s61
      %s673 = sor.u32 %s671, %s672
      %p674 = scmp.eq.s32.totalorder %s673, 0
      %s676 = sadd.s32 %s675, 1
      %s677 = scalar_select %p674, %s675, %s676
      %p680 = pneg %p674
      %p681 = scmp.eq.s32.totalorder %s42, 3
      %p682 = por %p680, %p681
      %p683 = scmp.ne.s32.totalorder %s675, %s678
      %p684 = scmp.eq.s32.totalorder %s42, 0
      %p685 = por %p683, %p684
      %p686 = scmp.ne.s32.totalorder %s675, %s678
      %p687 = scmp.eq.s32.totalorder %s47, 3
      %p688 = por %p686, %p687
      %p689 = scmp.ne.s32.totalorder %s678, %s679
      %p690 = scmp.eq.s32.totalorder %s47, 0
      %p691 = por %p689, %p690
      %p692 = scmp.ne.s32.totalorder %s678, %s679
      %p693 = scmp.eq.s32.totalorder %s48, 3
      %p694 = por %p692, %p693
      %p696 = scmp.ne.s32.totalorder %s679, %s695
      %p697 = scmp.eq.s32.totalorder %s48, 0
      %p698 = por %p696, %p697
      %p699 = scmp.le.s32.totalorder 1, %s42
      %p700 = scmp.lt.s32.totalorder %s42, 5
      %p701 = pnand %p699, %p700
      %p702 = pneg %p701
      // Predicated region
      $region9: #{tpu_custom_call.1} parent=5 // pred_check
        _
      $region10: #{tpu_custom_call.1} parent=5 // pred_check_branch
        %704 = sbr.rel (%p701) target = $region12
      $region11: #{tpu_custom_call.1} parent=5 // pred_region
        %s705 = ssub.s32 %s42, 1
        // Predicated region
        $region13: #{tpu_custom_call.1} parent=11 // pred_check
          %p706 = pneg %p101
        $region14: #{tpu_custom_call.1} parent=11 // pred_check_branch
          %708 = sbr.rel (%p706) target = $region16
        $region15: #{tpu_custom_call.1} parent=11 // pred_region
          %s710 = ssub.s32 128, 128
          %711 = vsyncadd [#allocation7], %s710
          %s713 = sshll.u32 [#allocation6], 4
          %s714 = int_to_ptr.vmem [resolvable:$true] %s713
          %716 = dma.hbm_to_vmem [thread:$0]  %s1, 128, %s714, [#allocation7]
        $region16: #{tpu_custom_call.1} parent=11 // pred_fallthru
          _
        // Predicated region
        $region17: #{tpu_custom_call.1} parent=11 // pred_check
          %p717 = pneg %p148
        $region18: #{tpu_custom_call.1} parent=11 // pred_check_branch
          %719 = sbr.rel (%p717) target = $region20
        $region19: #{tpu_custom_call.1} parent=11 // pred_region
          %s721 = ssub.s32 16, 16
          %722 = vsyncadd [#allocation7], %s721
          %s724 = sshll.u32 [#allocation9], 4
          %s725 = int_to_ptr.vmem [resolvable:$true] %s724
          %727 = dma.hbm_to_vmem [thread:$0]  %s3, 16, %s725, [#allocation7]
        $region20: #{tpu_custom_call.1} parent=11 // pred_fallthru
          _
        // Predicated region
        $region21: #{tpu_custom_call.1} parent=11 // pred_check
          %p728 = pneg %p169
        $region22: #{tpu_custom_call.1} parent=11 // pred_check_branch
          %730 = sbr.rel (%p728) target = $region24
        $region23: #{tpu_custom_call.1} parent=11 // pred_region
          %s732 = ssub.s32 16, 16
          %733 = vsyncadd [#allocation11], %s732
          %s735 = sshll.u32 [#allocation10], 4
          %s736 = int_to_ptr.vmem [resolvable:$true] %s735
          %738 = dma.hbm_to_vmem [thread:$0]  %s4, 16, %s736, [#allocation11]
        $region24: #{tpu_custom_call.1} parent=11 // pred_fallthru
          _
      $region12: #{tpu_custom_call.1} parent=5 // pred_fallthru
        _
      %p739 = scmp.lt.s32.totalorder %s42, 4
      // Predicated region
      $region25: #{tpu_custom_call.1} parent=5 // pred_check
        %p740 = pneg %p739
      $region26: #{tpu_custom_call.1} parent=5 // pred_check_branch
        %742 = sbr.rel (%p740) target = $region28
      $region27: #{tpu_custom_call.1} parent=5 // pred_region
        // Predicated region
        $region29: #{tpu_custom_call.1} parent=27 // pred_check
          %p743 = pneg %p74
        $region30: #{tpu_custom_call.1} parent=27 // pred_check_branch
          %745 = sbr.rel (%p743) target = $region32
        $region31: #{tpu_custom_call.1} parent=27 // pred_region
          %s746 = sand.u32 %s42, 1
          %s747 = scalar_lea.sflag [#allocation4], %s746
          %s748 = sand.u32 %s64, 1
          %s749 = smul.addr %s748, 8
          %s750 = scalar_lea.vmem [#allocation3], %s749
          %s752 = ssub.s32 128, 128
          %753 = vsyncadd %s747, %s752
          %s754 = smul.addr %s49, 128
          %s755 = scalar_lea.hbm %s0, %s754
          %s757 = sshll.u32 %s750, 4
          %s758 = int_to_ptr.vmem [resolvable:$true] %s757
          %760 = dma.hbm_to_vmem [thread:$0]  %s755, 128, %s758, %s747
        $region32: #{tpu_custom_call.1} parent=27 // pred_fallthru
          _
        // Predicated region
        $region33: #{tpu_custom_call.1} parent=27 // pred_check
          %p761 = pneg %p121
        $region34: #{tpu_custom_call.1} parent=27 // pred_check_branch
          %763 = sbr.rel (%p761) target = $region36
        $region35: #{tpu_custom_call.1} parent=27 // pred_region
          %s764 = sand.u32 %s42, 1
          %s765 = scalar_lea.sflag [#allocation4], %s764
          %s766 = sand.u32 %s111, 1
          %s767 = smul.addr %s766, 8
          %s768 = scalar_lea.vmem [#allocation8], %s767
          %s770 = ssub.s32 128, 128
          %771 = vsyncadd %s765, %s770
          %s772 = smul.addr %s49, 128
          %s773 = scalar_lea.hbm %s2, %s772
          %s775 = sshll.u32 %s768, 4
          %s776 = int_to_ptr.vmem [resolvable:$true] %s775
          %778 = dma.hbm_to_vmem [thread:$0]  %s773, 128, %s776, %s765
        $region36: #{tpu_custom_call.1} parent=27 // pred_fallthru
          _
        // Predicated region
        $region37: #{tpu_custom_call.1} parent=27 // pred_check
          %p779 = pneg %p189
        $region38: #{tpu_custom_call.1} parent=27 // pred_check_branch
          %781 = sbr.rel (%p779) target = $region40
        $region39: #{tpu_custom_call.1} parent=27 // pred_region
          %s782 = sand.u32 %s42, 1
          %s783 = scalar_lea.sflag [#allocation4], %s782
          %s784 = sand.u32 %s179, 1
          %s785 = smul.addr %s784, 8
          %s786 = scalar_lea.vmem [#allocation12], %s785
          %s788 = ssub.s32 128, 128
          %789 = vsyncadd %s783, %s788
          %s790 = smul.addr %s49, 128
          %s791 = scalar_lea.hbm %s5, %s790
          %s793 = sshll.u32 %s786, 4
          %s794 = int_to_ptr.vmem [resolvable:$true] %s793
          %796 = dma.hbm_to_vmem [thread:$0]  %s791, 128, %s794, %s783
        $region40: #{tpu_custom_call.1} parent=27 // pred_fallthru
          _
        // Predicated region
        $region41: #{tpu_custom_call.1} parent=27 // pred_check
          %p797 = pneg %p215
        $region42: #{tpu_custom_call.1} parent=27 // pred_check_branch
          %799 = sbr.rel (%p797) target = $region44
        $region43: #{tpu_custom_call.1} parent=27 // pred_region
          %s800 = sand.u32 %s42, 1
          %s801 = scalar_lea.sflag [#allocation4], %s800
          %s802 = sand.u32 %s205, 1
          %s803 = scalar_lea.vmem [#allocation13], %s802
          %s805 = ssub.s32 16, 16
          %806 = vsyncadd %s801, %s805
          %s807 = smul.addr %s49, 16
          %s808 = scalar_lea.hbm %s6, %s807
          %s810 = sshll.u32 %s803, 4
          %s811 = int_to_ptr.vmem [resolvable:$true] %s810
          %813 = dma.hbm_to_vmem [thread:$0]  %s808, 16, %s811, %s801
        $region44: #{tpu_custom_call.1} parent=27 // pred_fallthru
          _
        // Predicated region
        $region45: #{tpu_custom_call.1} parent=27 // pred_check
          %p814 = pneg %p241
        $region46: #{tpu_custom_call.1} parent=27 // pred_check_branch
          %816 = sbr.rel (%p814) target = $region48
        $region47: #{tpu_custom_call.1} parent=27 // pred_region
          %s817 = sand.u32 %s42, 1
          %s818 = scalar_lea.sflag [#allocation4], %s817
          %s819 = sand.u32 %s231, 1
          %s820 = smul.addr %s819, 16
          %s821 = scalar_lea.vmem [#allocation14], %s820
          %s823 = ssub.s32 256, 256
          %824 = vsyncadd %s818, %s823
          %s825 = smul.addr %s50, 4
          %s826 = smul.addr %s825, 64
          %s827 = scalar_lea.hbm %s7, %s826
          %s828 = sshll.u32 %s821, 4
          %s829 = int_to_ptr.vmem [resolvable:$true] %s828
          %834 = dma.hbm_to_vmem [thread:$0]  %s827, 256, %s829, %s818, 64, 64, 4
        $region48: #{tpu_custom_call.1} parent=27 // pred_fallthru
          _
        // Predicated region
        $region49: #{tpu_custom_call.1} parent=27 // pred_check
          %p835 = pneg %p267
        $region50: #{tpu_custom_call.1} parent=27 // pred_check_branch
          %837 = sbr.rel (%p835) target = $region52
        $region51: #{tpu_custom_call.1} parent=27 // pred_region
          %s838 = sand.u32 %s42, 1
          %s839 = scalar_lea.sflag [#allocation4], %s838
          %s840 = sand.u32 %s257, 1
          %s841 = scalar_lea.vmem [#allocation15], %s840
          %s843 = ssub.s32 16, 16
          %844 = vsyncadd %s839, %s843
          %s845 = smul.addr %s50, 16
          %s846 = scalar_lea.hbm %s8, %s845
          %s848 = sshll.u32 %s841, 4
          %s849 = int_to_ptr.vmem [resolvable:$true] %s848
          %851 = dma.hbm_to_vmem [thread:$0]  %s846, 16, %s849, %s839
        $region52: #{tpu_custom_call.1} parent=27 // pred_fallthru
          _
        // Predicated region
        $region53: #{tpu_custom_call.1} parent=27 // pred_check
          %p852 = pneg %p293
        $region54: #{tpu_custom_call.1} parent=27 // pred_check_branch
          %854 = sbr.rel (%p852) target = $region56
        $region55: #{tpu_custom_call.1} parent=27 // pred_region
          %s855 = sand.u32 %s42, 1
          %s856 = scalar_lea.sflag [#allocation4], %s855
          %s857 = sand.u32 %s283, 1
          %s858 = smul.addr %s857, 16
          %s859 = scalar_lea.vmem [#allocation16], %s858
          %s861 = ssub.s32 256, 256
          %862 = vsyncadd %s856, %s861
          %s863 = smul.addr %s50, 4
          %s864 = smul.addr %s863, 64
          %s865 = scalar_lea.hbm %s9, %s864
          %s866 = sshll.u32 %s859, 4
          %s867 = int_to_ptr.vmem [resolvable:$true] %s866
          %872 = dma.hbm_to_vmem [thread:$0]  %s865, 256, %s867, %s856, 64, 64, 4
        $region56: #{tpu_custom_call.1} parent=27 // pred_fallthru
          _
        // Predicated region
        $region57: #{tpu_custom_call.1} parent=27 // pred_check
          %p873 = pneg %p319
        $region58: #{tpu_custom_call.1} parent=27 // pred_check_branch
          %875 = sbr.rel (%p873) target = $region60
        $region59: #{tpu_custom_call.1} parent=27 // pred_region
          %s876 = sand.u32 %s42, 1
          %s877 = scalar_lea.sflag [#allocation4], %s876
          %s878 = sand.u32 %s309, 1
          %s879 = scalar_lea.vmem [#allocation17], %s878
          %s881 = ssub.s32 16, 16
          %882 = vsyncadd %s877, %s881
          %s883 = smul.addr %s50, 16
          %s884 = scalar_lea.hbm %s10, %s883
          %s886 = sshll.u32 %s879, 4
          %s887 = int_to_ptr.vmem [resolvable:$true] %s886
          %889 = dma.hbm_to_vmem [thread:$0]  %s884, 16, %s887, %s877
        $region60: #{tpu_custom_call.1} parent=27 // pred_fallthru
          _
        // Predicated region
        $region61: #{tpu_custom_call.1} parent=27 // pred_check
          %p890 = pneg %p345
        $region62: #{tpu_custom_call.1} parent=27 // pred_check_branch
          %892 = sbr.rel (%p890) target = $region64
        $region63: #{tpu_custom_call.1} parent=27 // pred_region
          %s893 = sand.u32 %s42, 1
          %s894 = scalar_lea.sflag [#allocation4], %s893
          %s895 = sand.u32 %s335, 1
          %s896 = smul.addr %s895, 16
          %s897 = scalar_lea.vmem [#allocation18], %s896
          %s899 = ssub.s32 256, 256
          %900 = vsyncadd %s894, %s899
          %s901 = smul.addr %s50, 4
          %s902 = smul.addr %s901, 64
          %s903 = scalar_lea.hbm %s11, %s902
          %s904 = sshll.u32 %s897, 4
          %s905 = int_to_ptr.vmem [resolvable:$true] %s904
          %910 = dma.hbm_to_vmem [thread:$0]  %s903, 256, %s905, %s894, 64, 64, 4
        $region64: #{tpu_custom_call.1} parent=27 // pred_fallthru
          _
        // Predicated region
        $region65: #{tpu_custom_call.1} parent=27 // pred_check
          %p911 = pneg %p371
        $region66: #{tpu_custom_call.1} parent=27 // pred_check_branch
          %913 = sbr.rel (%p911) target = $region68
        $region67: #{tpu_custom_call.1} parent=27 // pred_region
          %s914 = sand.u32 %s42, 1
          %s915 = scalar_lea.sflag [#allocation4], %s914
          %s916 = sand.u32 %s361, 1
          %s917 = scalar_lea.vmem [#allocation19], %s916
          %s919 = ssub.s32 16, 16
          %920 = vsyncadd %s915, %s919
          %s921 = smul.addr %s50, 16
          %s922 = scalar_lea.hbm %s12, %s921
          %s924 = sshll.u32 %s917, 4
          %s925 = int_to_ptr.vmem [resolvable:$true] %s924
          %927 = dma.hbm_to_vmem [thread:$0]  %s922, 16, %s925, %s915
        $region68: #{tpu_custom_call.1} parent=27 // pred_fallthru
          _
        // Predicated region
        $region69: #{tpu_custom_call.1} parent=27 // pred_check
          %p928 = pneg %p397
        $region70: #{tpu_custom_call.1} parent=27 // pred_check_branch
          %930 = sbr.rel (%p928) target = $region72
        $region71: #{tpu_custom_call.1} parent=27 // pred_region
          %s931 = sand.u32 %s42, 1
          %s932 = scalar_lea.sflag [#allocation4], %s931
          %s933 = sand.u32 %s387, 1
          %s934 = smul.addr %s933, 16
          %s935 = scalar_lea.vmem [#allocation20], %s934
          %s937 = ssub.s32 256, 256
          %938 = vsyncadd %s932, %s937
          %s939 = smul.addr %s50, 4
          %s940 = smul.addr %s939, 64
          %s941 = scalar_lea.hbm %s13, %s940
          %s942 = sshll.u32 %s935, 4
          %s943 = int_to_ptr.vmem [resolvable:$true] %s942
          %948 = dma.hbm_to_vmem [thread:$0]  %s941, 256, %s943, %s932, 64, 64, 4
        $region72: #{tpu_custom_call.1} parent=27 // pred_fallthru
          _
        // Predicated region
        $region73: #{tpu_custom_call.1} parent=27 // pred_check
          %p949 = pneg %p423
        $region74: #{tpu_custom_call.1} parent=27 // pred_check_branch
          %951 = sbr.rel (%p949) target = $region76
        $region75: #{tpu_custom_call.1} parent=27 // pred_region
          %s952 = sand.u32 %s42, 1
          %s953 = scalar_lea.sflag [#allocation4], %s952
          %s954 = sand.u32 %s413, 1
          %s955 = scalar_lea.vmem [#allocation21], %s954
          %s957 = ssub.s32 16, 16
          %958 = vsyncadd %s953, %s957
          %s959 = smul.addr %s50, 16
          %s960 = scalar_lea.hbm %s14, %s959
          %s962 = sshll.u32 %s955, 4
          %s963 = int_to_ptr.vmem [resolvable:$true] %s962
          %965 = dma.hbm_to_vmem [thread:$0]  %s960, 16, %s963, %s953
        $region76: #{tpu_custom_call.1} parent=27 // pred_fallthru
          _
        // Predicated region
        $region77: #{tpu_custom_call.1} parent=27 // pred_check
          %p966 = pneg %p449
        $region78: #{tpu_custom_call.1} parent=27 // pred_check_branch
          %968 = sbr.rel (%p966) target = $region80
        $region79: #{tpu_custom_call.1} parent=27 // pred_region
          %s969 = sand.u32 %s42, 1
          %s970 = scalar_lea.sflag [#allocation4], %s969
          %s971 = sand.u32 %s439, 1
          %s972 = scalar_lea.vmem [#allocation22], %s971
          %s974 = ssub.s32 16, 16
          %975 = vsyncadd %s970, %s974
          %s976 = smul.addr %s50, 16
          %s977 = scalar_lea.hbm %s15, %s976
          %s979 = sshll.u32 %s972, 4
          %s980 = int_to_ptr.vmem [resolvable:$true] %s979
          %982 = dma.hbm_to_vmem [thread:$0]  %s977, 16, %s980, %s970
        $region80: #{tpu_custom_call.1} parent=27 // pred_fallthru
          _
        // Predicated region
        $region81: #{tpu_custom_call.1} parent=27 // pred_check
          %p983 = pneg %p475
        $region82: #{tpu_custom_call.1} parent=27 // pred_check_branch
          %985 = sbr.rel (%p983) target = $region84
        $region83: #{tpu_custom_call.1} parent=27 // pred_region
          %s986 = sand.u32 %s42, 1
          %s987 = scalar_lea.sflag [#allocation4], %s986
          %s988 = sand.u32 %s465, 1
          %s989 = scalar_lea.vmem [#allocation23], %s988
          %s991 = ssub.s32 16, 16
          %992 = vsyncadd %s987, %s991
          %s993 = smul.addr %s50, 16
          %s994 = scalar_lea.hbm %s16, %s993
          %s996 = sshll.u32 %s989, 4
          %s997 = int_to_ptr.vmem [resolvable:$true] %s996
          %999 = dma.hbm_to_vmem [thread:$0]  %s994, 16, %s997, %s987
        $region84: #{tpu_custom_call.1} parent=27 // pred_fallthru
          _
        // Predicated region
        $region85: #{tpu_custom_call.1} parent=27 // pred_check
          %p1000 = pneg %p501
        $region86: #{tpu_custom_call.1} parent=27 // pred_check_branch
          %1002 = sbr.rel (%p1000) target = $region88
        $region87: #{tpu_custom_call.1} parent=27 // pred_region
          %s1003 = sand.u32 %s42, 1
          %s1004 = scalar_lea.sflag [#allocation4], %s1003
          %s1005 = sand.u32 %s491, 1
          %s1006 = smul.addr %s1005, 16
          %s1007 = scalar_lea.vmem [#allocation24], %s1006
          %s1009 = ssub.s32 256, 256
          %1010 = vsyncadd %s1004, %s1009
          %s1011 = smul.addr %s50, 4
          %s1012 = smul.addr %s1011, 64
          %s1013 = scalar_lea.hbm %s17, %s1012
          %s1014 = sshll.u32 %s1007, 4
          %s1015 = int_to_ptr.vmem [resolvable:$true] %s1014
          %1020 = dma.hbm_to_vmem [thread:$0]  %s1013, 256, %s1015, %s1004, 64, 64, 4
        $region88: #{tpu_custom_call.1} parent=27 // pred_fallthru
          _
        // Predicated region
        $region89: #{tpu_custom_call.1} parent=27 // pred_check
          %p1021 = pneg %p527
        $region90: #{tpu_custom_call.1} parent=27 // pred_check_branch
          %1023 = sbr.rel (%p1021) target = $region92
        $region91: #{tpu_custom_call.1} parent=27 // pred_region
          %s1024 = sand.u32 %s42, 1
          %s1025 = scalar_lea.sflag [#allocation4], %s1024
          %s1026 = sand.u32 %s517, 1
          %s1027 = scalar_lea.vmem [#allocation25], %s1026
          %s1029 = ssub.s32 16, 16
          %1030 = vsyncadd %s1025, %s1029
          %s1031 = smul.addr %s50, 16
          %s1032 = scalar_lea.hbm %s18, %s1031
          %s1034 = sshll.u32 %s1027, 4
          %s1035 = int_to_ptr.vmem [resolvable:$true] %s1034
          %1037 = dma.hbm_to_vmem [thread:$0]  %s1032, 16, %s1035, %s1025
        $region92: #{tpu_custom_call.1} parent=27 // pred_fallthru
          _
        // Predicated region
        $region93: #{tpu_custom_call.1} parent=27 // pred_check
          %p1038 = pneg %p553
        $region94: #{tpu_custom_call.1} parent=27 // pred_check_branch
          %1040 = sbr.rel (%p1038) target = $region96
        $region95: #{tpu_custom_call.1} parent=27 // pred_region
          %s1041 = sand.u32 %s42, 1
          %s1042 = scalar_lea.sflag [#allocation4], %s1041
          %s1043 = sand.u32 %s543, 1
          %s1044 = smul.addr %s1043, 32
          %s1045 = scalar_lea.vmem [#allocation26], %s1044
          %s1047 = ssub.s32 512, 512
          %1048 = vsyncadd %s1042, %s1047
          %s1049 = smul.addr %s50, 8
          %s1050 = smul.addr %s1049, 64
          %s1051 = scalar_lea.hbm %s19, %s1050
          %s1052 = sshll.u32 %s1045, 4
          %s1053 = int_to_ptr.vmem [resolvable:$true] %s1052
          %1058 = dma.hbm_to_vmem [thread:$0]  %s1051, 512, %s1053, %s1042, 64, 64, 4
        $region96: #{tpu_custom_call.1} parent=27 // pred_fallthru
          _
        // Predicated region
        $region97: #{tpu_custom_call.1} parent=27 // pred_check
          %p1059 = pneg %p579
        $region98: #{tpu_custom_call.1} parent=27 // pred_check_branch
          %1061 = sbr.rel (%p1059) target = $region100
        $region99: #{tpu_custom_call.1} parent=27 // pred_region
          %s1062 = sand.u32 %s42, 1
          %s1063 = scalar_lea.sflag [#allocation4], %s1062
          %s1064 = sand.u32 %s569, 1
          %s1065 = scalar_lea.vmem [#allocation27], %s1064
          %s1067 = ssub.s32 16, 16
          %1068 = vsyncadd %s1063, %s1067
          %s1069 = smul.addr %s50, 16
          %s1070 = scalar_lea.hbm %s20, %s1069
          %s1072 = sshll.u32 %s1065, 4
          %s1073 = int_to_ptr.vmem [resolvable:$true] %s1072
          %1075 = dma.hbm_to_vmem [thread:$0]  %s1070, 16, %s1073, %s1063
        $region100: #{tpu_custom_call.1} parent=27 // pred_fallthru
          _
        // Predicated region
        $region101: #{tpu_custom_call.1} parent=27 // pred_check
          %p1076 = pneg %p605
        $region102: #{tpu_custom_call.1} parent=27 // pred_check_branch
          %1078 = sbr.rel (%p1076) target = $region104
        $region103: #{tpu_custom_call.1} parent=27 // pred_region
          %s1079 = sand.u32 %s42, 1
          %s1080 = scalar_lea.sflag [#allocation4], %s1079
          %s1081 = sand.u32 %s595, 1
          %s1082 = scalar_lea.vmem [#allocation28], %s1081
          %s1084 = ssub.s32 16, 16
          %1085 = vsyncadd %s1080, %s1084
          %s1086 = smul.addr %s50, 16
          %s1087 = scalar_lea.hbm %s21, %s1086
          %s1089 = sshll.u32 %s1082, 4
          %s1090 = int_to_ptr.vmem [resolvable:$true] %s1089
          %1092 = dma.hbm_to_vmem [thread:$0]  %s1087, 16, %s1090, %s1080
        $region104: #{tpu_custom_call.1} parent=27 // pred_fallthru
          _
        // Predicated region
        $region105: #{tpu_custom_call.1} parent=27 // pred_check
          %p1093 = pneg %p631
        $region106: #{tpu_custom_call.1} parent=27 // pred_check_branch
          %1095 = sbr.rel (%p1093) target = $region108
        $region107: #{tpu_custom_call.1} parent=27 // pred_region
          %s1096 = sand.u32 %s42, 1
          %s1097 = scalar_lea.sflag [#allocation4], %s1096
          %s1098 = sand.u32 %s621, 1
          %s1099 = scalar_lea.vmem [#allocation29], %s1098
          %s1101 = ssub.s32 16, 16
          %1102 = vsyncadd %s1097, %s1101
          %s1103 = smul.addr %s50, 16
          %s1104 = scalar_lea.hbm %s22, %s1103
          %s1106 = sshll.u32 %s1099, 4
          %s1107 = int_to_ptr.vmem [resolvable:$true] %s1106
          %1109 = dma.hbm_to_vmem [thread:$0]  %s1104, 16, %s1107, %s1097
        $region108: #{tpu_custom_call.1} parent=27 // pred_fallthru
          _
      $region28: #{tpu_custom_call.1} parent=5 // pred_fallthru
        _
      %p1110 = scmp.le.s32.totalorder 1, %s42
      %p1111 = scmp.lt.s32.totalorder %s42, 5
      %p1112 = pnand %p1110, %p1111
      %p1113 = pneg %p1112
      // Predicated region
      $region109: #{tpu_custom_call.1} parent=5 // pred_check
        _
      $region110: #{tpu_custom_call.1} parent=5 // pred_check_branch
        %1115 = sbr.rel (%p1112) target = $region112
      $region111: #{tpu_custom_call.1} parent=5 // pred_region
        %s1116 = ssub.s32 %s42, 1
        %s1117 = sand.u32 %s47, 1
        %s1118 = scalar_lea.sflag [#allocation4], %s1117
        %s1119 = sand.u32 %s67, 1
        %s1120 = smul.addr %s1119, 8
        %s1121 = scalar_lea.vmem [#allocation3], %s1120
        // Predicated region
        $region113: #{tpu_custom_call.1} parent=111 // pred_check
          %p1122 = pneg %p80
        $region114: #{tpu_custom_call.1} parent=111 // pred_check_branch
          %1124 = sbr.rel (%p1122) target = $region116
        $region115: #{tpu_custom_call.1} parent=111 // pred_region
          %1125 = dma.done %s1118, 128
        $region116: #{tpu_custom_call.1} parent=111 // pred_fallthru
          _
        // Predicated region
        $region117: #{tpu_custom_call.1} parent=111 // pred_check
          %p1126 = pneg %p101
        $region118: #{tpu_custom_call.1} parent=111 // pred_check_branch
          %1128 = sbr.rel (%p1126) target = $region120
        $region119: #{tpu_custom_call.1} parent=111 // pred_region
          %1129 = dma.done [#allocation7], 128
        $region120: #{tpu_custom_call.1} parent=111 // pred_fallthru
          _
        %s1130 = sand.u32 %s47, 1
        %s1131 = scalar_lea.sflag [#allocation4], %s1130
        %s1132 = sand.u32 %s114, 1
        %s1133 = smul.addr %s1132, 8
        %s1134 = scalar_lea.vmem [#allocation8], %s1133
        // Predicated region
        $region121: #{tpu_custom_call.1} parent=111 // pred_check
          %p1135 = pneg %p127
        $region122: #{tpu_custom_call.1} parent=111 // pred_check_branch
          %1137 = sbr.rel (%p1135) target = $region124
        $region123: #{tpu_custom_call.1} parent=111 // pred_region
          %1138 = dma.done %s1131, 128
        $region124: #{tpu_custom_call.1} parent=111 // pred_fallthru
          _
        // Predicated region
        $region125: #{tpu_custom_call.1} parent=111 // pred_check
          %p1139 = pneg %p148
        $region126: #{tpu_custom_call.1} parent=111 // pred_check_branch
          %1141 = sbr.rel (%p1139) target = $region128
        $region127: #{tpu_custom_call.1} parent=111 // pred_region
          %1142 = dma.done [#allocation7], 16
        $region128: #{tpu_custom_call.1} parent=111 // pred_fallthru
          _
        // Predicated region
        $region129: #{tpu_custom_call.1} parent=111 // pred_check
          %p1143 = pneg %p169
        $region130: #{tpu_custom_call.1} parent=111 // pred_check_branch
          %1145 = sbr.rel (%p1143) target = $region132
        $region131: #{tpu_custom_call.1} parent=111 // pred_region
          %1146 = dma.done [#allocation11], 16
        $region132: #{tpu_custom_call.1} parent=111 // pred_fallthru
          _
        %s1147 = sand.u32 %s47, 1
        %s1148 = scalar_lea.sflag [#allocation4], %s1147
        %s1149 = sand.u32 %s182, 1
        %s1150 = smul.addr %s1149, 8
        %s1151 = scalar_lea.vmem [#allocation12], %s1150
        // Predicated region
        $region133: #{tpu_custom_call.1} parent=111 // pred_check
          %p1152 = pneg %p195
        $region134: #{tpu_custom_call.1} parent=111 // pred_check_branch
          %1154 = sbr.rel (%p1152) target = $region136
        $region135: #{tpu_custom_call.1} parent=111 // pred_region
          %1155 = dma.done %s1148, 128
        $region136: #{tpu_custom_call.1} parent=111 // pred_fallthru
          _
        %s1156 = sand.u32 %s47, 1
        %s1157 = scalar_lea.sflag [#allocation4], %s1156
        %s1158 = sand.u32 %s208, 1
        %s1159 = scalar_lea.vmem [#allocation13], %s1158
        // Predicated region
        $region137: #{tpu_custom_call.1} parent=111 // pred_check
          %p1160 = pneg %p221
        $region138: #{tpu_custom_call.1} parent=111 // pred_check_branch
          %1162 = sbr.rel (%p1160) target = $region140
        $region139: #{tpu_custom_call.1} parent=111 // pred_region
          %1163 = dma.done %s1157, 16
        $region140: #{tpu_custom_call.1} parent=111 // pred_fallthru
          _
        %s1164 = sand.u32 %s47, 1
        %s1165 = scalar_lea.sflag [#allocation4], %s1164
        %s1166 = sand.u32 %s234, 1
        %s1167 = smul.addr %s1166, 16
        %s1168 = scalar_lea.vmem [#allocation14], %s1167
        // Predicated region
        $region141: #{tpu_custom_call.1} parent=111 // pred_check
          %p1169 = pneg %p247
        $region142: #{tpu_custom_call.1} parent=111 // pred_check_branch
          %1171 = sbr.rel (%p1169) target = $region144
        $region143: #{tpu_custom_call.1} parent=111 // pred_region
          %1172 = dma.done %s1165, 256
        $region144: #{tpu_custom_call.1} parent=111 // pred_fallthru
          _
        %s1173 = sand.u32 %s47, 1
        %s1174 = scalar_lea.sflag [#allocation4], %s1173
        %s1175 = sand.u32 %s260, 1
        %s1176 = scalar_lea.vmem [#allocation15], %s1175
        // Predicated region
        $region145: #{tpu_custom_call.1} parent=111 // pred_check
          %p1177 = pneg %p273
        $region146: #{tpu_custom_call.1} parent=111 // pred_check_branch
          %1179 = sbr.rel (%p1177) target = $region148
        $region147: #{tpu_custom_call.1} parent=111 // pred_region
          %1180 = dma.done %s1174, 16
        $region148: #{tpu_custom_call.1} parent=111 // pred_fallthru
          _
        %s1181 = sand.u32 %s47, 1
        %s1182 = scalar_lea.sflag [#allocation4], %s1181
        %s1183 = sand.u32 %s286, 1
        %s1184 = smul.addr %s1183, 16
        %s1185 = scalar_lea.vmem [#allocation16], %s1184
        // Predicated region
        $region149: #{tpu_custom_call.1} parent=111 // pred_check
          %p1186 = pneg %p299
        $region150: #{tpu_custom_call.1} parent=111 // pred_check_branch
          %1188 = sbr.rel (%p1186) target = $region152
        $region151: #{tpu_custom_call.1} parent=111 // pred_region
          %1189 = dma.done %s1182, 256
        $region152: #{tpu_custom_call.1} parent=111 // pred_fallthru
          _
        %s1190 = sand.u32 %s47, 1
        %s1191 = scalar_lea.sflag [#allocation4], %s1190
        %s1192 = sand.u32 %s312, 1
        %s1193 = scalar_lea.vmem [#allocation17], %s1192
        // Predicated region
        $region153: #{tpu_custom_call.1} parent=111 // pred_check
          %p1194 = pneg %p325
        $region154: #{tpu_custom_call.1} parent=111 // pred_check_branch
          %1196 = sbr.rel (%p1194) target = $region156
        $region155: #{tpu_custom_call.1} parent=111 // pred_region
          %1197 = dma.done %s1191, 16
        $region156: #{tpu_custom_call.1} parent=111 // pred_fallthru
          _
        %s1198 = sand.u32 %s47, 1
        %s1199 = scalar_lea.sflag [#allocation4], %s1198
        %s1200 = sand.u32 %s338, 1
        %s1201 = smul.addr %s1200, 16
        %s1202 = scalar_lea.vmem [#allocation18], %s1201
        // Predicated region
        $region157: #{tpu_custom_call.1} parent=111 // pred_check
          %p1203 = pneg %p351
        $region158: #{tpu_custom_call.1} parent=111 // pred_check_branch
          %1205 = sbr.rel (%p1203) target = $region160
        $region159: #{tpu_custom_call.1} parent=111 // pred_region
          %1206 = dma.done %s1199, 256
        $region160: #{tpu_custom_call.1} parent=111 // pred_fallthru
          _
        %s1207 = sand.u32 %s47, 1
        %s1208 = scalar_lea.sflag [#allocation4], %s1207
        %s1209 = sand.u32 %s364, 1
        %s1210 = scalar_lea.vmem [#allocation19], %s1209
        // Predicated region
        $region161: #{tpu_custom_call.1} parent=111 // pred_check
          %p1211 = pneg %p377
        $region162: #{tpu_custom_call.1} parent=111 // pred_check_branch
          %1213 = sbr.rel (%p1211) target = $region164
        $region163: #{tpu_custom_call.1} parent=111 // pred_region
          %1214 = dma.done %s1208, 16
        $region164: #{tpu_custom_call.1} parent=111 // pred_fallthru
          _
        %s1215 = sand.u32 %s47, 1
        %s1216 = scalar_lea.sflag [#allocation4], %s1215
        %s1217 = sand.u32 %s390, 1
        %s1218 = smul.addr %s1217, 16
        %s1219 = scalar_lea.vmem [#allocation20], %s1218
        // Predicated region
        $region165: #{tpu_custom_call.1} parent=111 // pred_check
          %p1220 = pneg %p403
        $region166: #{tpu_custom_call.1} parent=111 // pred_check_branch
          %1222 = sbr.rel (%p1220) target = $region168
        $region167: #{tpu_custom_call.1} parent=111 // pred_region
          %1223 = dma.done %s1216, 256
        $region168: #{tpu_custom_call.1} parent=111 // pred_fallthru
          _
        %s1224 = sand.u32 %s47, 1
        %s1225 = scalar_lea.sflag [#allocation4], %s1224
        %s1226 = sand.u32 %s416, 1
        %s1227 = scalar_lea.vmem [#allocation21], %s1226
        // Predicated region
        $region169: #{tpu_custom_call.1} parent=111 // pred_check
          %p1228 = pneg %p429
        $region170: #{tpu_custom_call.1} parent=111 // pred_check_branch
          %1230 = sbr.rel (%p1228) target = $region172
        $region171: #{tpu_custom_call.1} parent=111 // pred_region
          %1231 = dma.done %s1225, 16
        $region172: #{tpu_custom_call.1} parent=111 // pred_fallthru
          _
        %s1232 = sand.u32 %s47, 1
        %s1233 = scalar_lea.sflag [#allocation4], %s1232
        %s1234 = sand.u32 %s442, 1
        %s1235 = scalar_lea.vmem [#allocation22], %s1234
        // Predicated region
        $region173: #{tpu_custom_call.1} parent=111 // pred_check
          %p1236 = pneg %p455
        $region174: #{tpu_custom_call.1} parent=111 // pred_check_branch
          %1238 = sbr.rel (%p1236) target = $region176
        $region175: #{tpu_custom_call.1} parent=111 // pred_region
          %1239 = dma.done %s1233, 16
        $region176: #{tpu_custom_call.1} parent=111 // pred_fallthru
          _
        %s1240 = sand.u32 %s47, 1
        %s1241 = scalar_lea.sflag [#allocation4], %s1240
        %s1242 = sand.u32 %s468, 1
        %s1243 = scalar_lea.vmem [#allocation23], %s1242
        // Predicated region
        $region177: #{tpu_custom_call.1} parent=111 // pred_check
          %p1244 = pneg %p481
        $region178: #{tpu_custom_call.1} parent=111 // pred_check_branch
          %1246 = sbr.rel (%p1244) target = $region180
        $region179: #{tpu_custom_call.1} parent=111 // pred_region
          %1247 = dma.done %s1241, 16
        $region180: #{tpu_custom_call.1} parent=111 // pred_fallthru
          _
        %s1248 = sand.u32 %s47, 1
        %s1249 = scalar_lea.sflag [#allocation4], %s1248
        %s1250 = sand.u32 %s494, 1
        %s1251 = smul.addr %s1250, 16
        %s1252 = scalar_lea.vmem [#allocation24], %s1251
        // Predicated region
        $region181: #{tpu_custom_call.1} parent=111 // pred_check
          %p1253 = pneg %p507
        $region182: #{tpu_custom_call.1} parent=111 // pred_check_branch
          %1255 = sbr.rel (%p1253) target = $region184
        $region183: #{tpu_custom_call.1} parent=111 // pred_region
          %1256 = dma.done %s1249, 256
        $region184: #{tpu_custom_call.1} parent=111 // pred_fallthru
          _
        %s1257 = sand.u32 %s47, 1
        %s1258 = scalar_lea.sflag [#allocation4], %s1257
        %s1259 = sand.u32 %s520, 1
        %s1260 = scalar_lea.vmem [#allocation25], %s1259
        // Predicated region
        $region185: #{tpu_custom_call.1} parent=111 // pred_check
          %p1261 = pneg %p533
        $region186: #{tpu_custom_call.1} parent=111 // pred_check_branch
          %1263 = sbr.rel (%p1261) target = $region188
        $region187: #{tpu_custom_call.1} parent=111 // pred_region
          %1264 = dma.done %s1258, 16
        $region188: #{tpu_custom_call.1} parent=111 // pred_fallthru
          _
        %s1265 = sand.u32 %s47, 1
        %s1266 = scalar_lea.sflag [#allocation4], %s1265
        %s1267 = sand.u32 %s546, 1
        %s1268 = smul.addr %s1267, 32
        %s1269 = scalar_lea.vmem [#allocation26], %s1268
        // Predicated region
        $region189: #{tpu_custom_call.1} parent=111 // pred_check
          %p1270 = pneg %p559
        $region190: #{tpu_custom_call.1} parent=111 // pred_check_branch
          %1272 = sbr.rel (%p1270) target = $region192
        $region191: #{tpu_custom_call.1} parent=111 // pred_region
          %1273 = dma.done %s1266, 512
        $region192: #{tpu_custom_call.1} parent=111 // pred_fallthru
          _
        %s1274 = sand.u32 %s47, 1
        %s1275 = scalar_lea.sflag [#allocation4], %s1274
        %s1276 = sand.u32 %s572, 1
        %s1277 = scalar_lea.vmem [#allocation27], %s1276
        // Predicated region
        $region193: #{tpu_custom_call.1} parent=111 // pred_check
          %p1278 = pneg %p585
        $region194: #{tpu_custom_call.1} parent=111 // pred_check_branch
          %1280 = sbr.rel (%p1278) target = $region196
        $region195: #{tpu_custom_call.1} parent=111 // pred_region
          %1281 = dma.done %s1275, 16
        $region196: #{tpu_custom_call.1} parent=111 // pred_fallthru
          _
        %s1282 = sand.u32 %s47, 1
        %s1283 = scalar_lea.sflag [#allocation4], %s1282
        %s1284 = sand.u32 %s598, 1
        %s1285 = scalar_lea.vmem [#allocation28], %s1284
        // Predicated region
        $region197: #{tpu_custom_call.1} parent=111 // pred_check
          %p1286 = pneg %p611
        $region198: #{tpu_custom_call.1} parent=111 // pred_check_branch
          %1288 = sbr.rel (%p1286) target = $region200
        $region199: #{tpu_custom_call.1} parent=111 // pred_region
          %1289 = dma.done %s1283, 16
        $region200: #{tpu_custom_call.1} parent=111 // pred_fallthru
          _
        %s1290 = sand.u32 %s47, 1
        %s1291 = scalar_lea.sflag [#allocation4], %s1290
        %s1292 = sand.u32 %s624, 1
        %s1293 = scalar_lea.vmem [#allocation29], %s1292
        // Predicated region
        $region201: #{tpu_custom_call.1} parent=111 // pred_check
          %p1294 = pneg %p637
        $region202: #{tpu_custom_call.1} parent=111 // pred_check_branch
          %1296 = sbr.rel (%p1294) target = $region204
        $region203: #{tpu_custom_call.1} parent=111 // pred_region
          %1297 = dma.done %s1291, 16
        $region204: #{tpu_custom_call.1} parent=111 // pred_fallthru
          _
        %s1298 = sand.u32 %s47, 1
        %s1299 = scalar_lea.sflag [#allocation4], %s1298
        %s1300 = sand.u32 %s67, 1
        %s1301 = smul.addr %s1300, 8
        %s1302 = scalar_lea.vmem [#allocation3], %s1301
        %p1303 = pneg %p80
        %p1304 = pneg %p77
        %p1305 = pneg %p101
        %p1306 = pneg %p98
        %s1307 = sand.u32 %s47, 1
        %s1308 = scalar_lea.sflag [#allocation4], %s1307
        %s1309 = sand.u32 %s114, 1
        %s1310 = smul.addr %s1309, 8
        %s1311 = scalar_lea.vmem [#allocation8], %s1310
        %p1312 = pneg %p127
        %p1313 = pneg %p124
        %p1314 = pneg %p148
        %p1315 = pneg %p145
        %p1316 = pneg %p169
        %p1317 = pneg %p166
        %s1318 = sand.u32 %s47, 1
        %s1319 = scalar_lea.sflag [#allocation4], %s1318
        %s1320 = sand.u32 %s182, 1
        %s1321 = smul.addr %s1320, 8
        %s1322 = scalar_lea.vmem [#allocation12], %s1321
        %p1323 = pneg %p195
        %p1324 = pneg %p192
        %s1325 = sand.u32 %s47, 1
        %s1326 = scalar_lea.sflag [#allocation4], %s1325
        %s1327 = sand.u32 %s208, 1
        %s1328 = scalar_lea.vmem [#allocation13], %s1327
        %p1329 = pneg %p221
        %p1330 = pneg %p218
        %s1331 = sand.u32 %s47, 1
        %s1332 = scalar_lea.sflag [#allocation4], %s1331
        %s1333 = sand.u32 %s234, 1
        %s1334 = smul.addr %s1333, 16
        %s1335 = scalar_lea.vmem [#allocation14], %s1334
        %p1336 = pneg %p247
        %p1337 = pneg %p244
        %s1338 = sand.u32 %s47, 1
        %s1339 = scalar_lea.sflag [#allocation4], %s1338
        %s1340 = sand.u32 %s260, 1
        %s1341 = scalar_lea.vmem [#allocation15], %s1340
        %p1342 = pneg %p273
        %p1343 = pneg %p270
        %s1344 = sand.u32 %s47, 1
        %s1345 = scalar_lea.sflag [#allocation4], %s1344
        %s1346 = sand.u32 %s286, 1
        %s1347 = smul.addr %s1346, 16
        %s1348 = scalar_lea.vmem [#allocation16], %s1347
        %p1349 = pneg %p299
        %p1350 = pneg %p296
        %s1351 = sand.u32 %s47, 1
        %s1352 = scalar_lea.sflag [#allocation4], %s1351
        %s1353 = sand.u32 %s312, 1
        %s1354 = scalar_lea.vmem [#allocation17], %s1353
        %p1355 = pneg %p325
        %p1356 = pneg %p322
        %s1357 = sand.u32 %s47, 1
        %s1358 = scalar_lea.sflag [#allocation4], %s1357
        %s1359 = sand.u32 %s338, 1
        %s1360 = smul.addr %s1359, 16
        %s1361 = scalar_lea.vmem [#allocation18], %s1360
        %p1362 = pneg %p351
        %p1363 = pneg %p348
        %s1364 = sand.u32 %s47, 1
        %s1365 = scalar_lea.sflag [#allocation4], %s1364
        %s1366 = sand.u32 %s364, 1
        %s1367 = scalar_lea.vmem [#allocation19], %s1366
        %p1368 = pneg %p377
        %p1369 = pneg %p374
        %s1370 = sand.u32 %s47, 1
        %s1371 = scalar_lea.sflag [#allocation4], %s1370
        %s1372 = sand.u32 %s390, 1
        %s1373 = smul.addr %s1372, 16
        %s1374 = scalar_lea.vmem [#allocation20], %s1373
        %p1375 = pneg %p403
        %p1376 = pneg %p400
        %s1377 = sand.u32 %s47, 1
        %s1378 = scalar_lea.sflag [#allocation4], %s1377
        %s1379 = sand.u32 %s416, 1
        %s1380 = scalar_lea.vmem [#allocation21], %s1379
        %p1381 = pneg %p429
        %p1382 = pneg %p426
        %s1383 = sand.u32 %s47, 1
        %s1384 = scalar_lea.sflag [#allocation4], %s1383
        %s1385 = sand.u32 %s442, 1
        %s1386 = scalar_lea.vmem [#allocation22], %s1385
        %p1387 = pneg %p455
        %p1388 = pneg %p452
        %s1389 = sand.u32 %s47, 1
        %s1390 = scalar_lea.sflag [#allocation4], %s1389
        %s1391 = sand.u32 %s468, 1
        %s1392 = scalar_lea.vmem [#allocation23], %s1391
        %p1393 = pneg %p481
        %p1394 = pneg %p478
        %s1395 = sand.u32 %s47, 1
        %s1396 = scalar_lea.sflag [#allocation4], %s1395
        %s1397 = sand.u32 %s494, 1
        %s1398 = smul.addr %s1397, 16
        %s1399 = scalar_lea.vmem [#allocation24], %s1398
        %p1400 = pneg %p507
        %p1401 = pneg %p504
        %s1402 = sand.u32 %s47, 1
        %s1403 = scalar_lea.sflag [#allocation4], %s1402
        %s1404 = sand.u32 %s520, 1
        %s1405 = scalar_lea.vmem [#allocation25], %s1404
        %p1406 = pneg %p533
        %p1407 = pneg %p530
        %s1408 = sand.u32 %s47, 1
        %s1409 = scalar_lea.sflag [#allocation4], %s1408
        %s1410 = sand.u32 %s546, 1
        %s1411 = smul.addr %s1410, 32
        %s1412 = scalar_lea.vmem [#allocation26], %s1411
        %p1413 = pneg %p559
        %p1414 = pneg %p556
        %s1415 = sand.u32 %s47, 1
        %s1416 = scalar_lea.sflag [#allocation4], %s1415
        %s1417 = sand.u32 %s572, 1
        %s1418 = scalar_lea.vmem [#allocation27], %s1417
        %p1419 = pneg %p585
        %p1420 = pneg %p582
        %s1421 = sand.u32 %s47, 1
        %s1422 = scalar_lea.sflag [#allocation4], %s1421
        %s1423 = sand.u32 %s598, 1
        %s1424 = scalar_lea.vmem [#allocation28], %s1423
        %p1425 = pneg %p611
        %p1426 = pneg %p608
        %s1427 = sand.u32 %s47, 1
        %s1428 = scalar_lea.sflag [#allocation4], %s1427
        %s1429 = sand.u32 %s624, 1
        %s1430 = scalar_lea.vmem [#allocation29], %s1429
        %p1431 = pneg %p637
        %p1432 = pneg %p634
        %p1433 = pneg %p663
        %p1434 = pneg %p660
        %s1435 = sand.u32 %s650, 1
        %s1436 = scalar_lea.sflag [#allocation5], %s1435
        %s1437 = sand.u32 %s650, 1
        %s1438 = smul.addr %s1437, 8
        %s1439 = scalar_lea.vmem [#allocation30], %s1438
        %p1440 = pneg %p691
        %p1441 = pneg %p688
        %s1442 = sand.u32 %s678, 1
        %s1443 = scalar_lea.sflag [#allocation32], %s1442
        %s1444 = sand.u32 %s678, 1
        %s1445 = smul.addr %s1444, 8
        %s1446 = scalar_lea.vmem [#allocation31], %s1445
        %p1448 = scmp.eq.s32.totalorder %s52, 0
        // Predicated region
        $region205: #{tpu_custom_call.1} parent=111 // pred_check
          %p1449 = pneg %p1448
        $region206: #{tpu_custom_call.1} parent=111 // pred_check_branch
          %1451 = sbr.rel (%p1449) target = $region208
        $region207: #{tpu_custom_call.1} parent=111 // pred_region
          %v1452 = vld [vmem:[%s1121] sm:$0xff]
          %v1453 = vld [vmem:[#allocation6] sm:$0xff]
          %v1454 = vadd.f32 %v1452, %v1453
          %v1455 = vld [vmem:[%s1134] sm:$0xff]
          %v1456 = vadd.f32 %v1454, %v1455
          %v1457 = vld [vmem:[#allocation9] sm:$0x1]
          %v1458 = vld [vmem:[#allocation10] sm:$0x1]
          %vm1459 = vcmask 261120
          %v1460 = vsel %vm1459, %v1456, 0.0
          %1461 = vadd.xlane.f32.xlu0 %v1460
          %v1462 = vpop.xlane.xlu0 %1461
          %v1463 = vrcp.pop 32.0
          %v1464 = vmul.f32 %v1462, %v1463
          %v1465 = vsub.f32 %v1456, %v1464
          %v1466 = vmul.f32 %v1465, %v1465
          %v1467 = vsel %vm1459, %v1466, 0.0
          %1468 = vadd.xlane.f32.xlu0 %v1467
          %v1469 = vpop.xlane.xlu0 %1468
          %v1470 = vmul.f32 %v1469, %v1463
          %v1471 = vadd.f32 %v1470, 1e-05
          %v1472 = vrsqrt.pop %v1471
          %v1473 = vmul.f32 %v1465, %v1472
          %v1475 = vlaneseq
          %v1476 = vshrl.u32 %v1475, 7
          %v1477 = vsub.s32 0, %v1476
          %v1478 = vrot.slane %v1457, %v1477
          %v1480 = vmul.f32 %v1473, %v1478
          %v1482 = vlaneseq
          %v1483 = vshrl.u32 %v1482, 7
          %v1484 = vsub.s32 0, %v1483
          %v1485 = vrot.slane %v1458, %v1484
          %v1487 = vadd.f32 %v1480, %v1485
          %v1488 = vld [vmem:[%s1151] sm:$0xff]
          %v1489 = vsub.f32 1.0, %v1488
          %1491 = vset.pattern.permute.xlu0 0
          %1492 = vperm.xlu0 %1491, %v1489
          %v1493 = vpop.permute.xlu0 %1492
          %v1495 = vmul.f32 %v1487, %v1493
          %1496 = vst.msk [vmem:[#allocation2] sm:$0xff] %vm1459, %v1495
          %1497 = vst.msk [vmem:[%s1439] sm:$0xff] %vm1459, %v1495
        $region208: #{tpu_custom_call.1} parent=111 // pred_fallthru
          _
        %v1498 = vld [vmem:[#allocation2] sm:$0xff]
        %v1499 = vld [vmem:[%s1168] sm:$0xf]
        %v1500 = vld [vmem:[%s1168 + $0x4] sm:$0xf]
        %v1501 = vld [vmem:[%s1168 + $0x8] sm:$0xf]
        %v1502 = vld [vmem:[%s1168 + $0xc] sm:$0xf]
        %v1503 = vld [vmem:[%s1176] sm:$0x1]
        %v1504 = vpack.c.bf16 %v1498, %v1498
        %v1506 = vlaneseq
        %v1507 = vshrl.u32 %v1506, 7
        %v1508 = vsub.s32 0, %v1507
        %v1509 = vrot.slane %v1503, %v1508
        %v1515 = vunpack.c.l.b16 %v1499
        %v1516 = vunpack.c.l.b16 %v1500
        %v1517 = vunpack.c.l.b16 %v1501
        %v1518 = vunpack.c.l.b16 %v1502
        %v1519 = vpack.c.b16 %v1516, %v1515
        %v1520 = vpack.c.b16 %v1518, %v1517
        %vm1523 = vcmask 261120
        %v1525 = vsel %vm1523, %v1504, 0
        %1527 = vmatprep.subr.bf16.mxu0 0
        %1528 = vmatpush1.bf16.msra.mxu0 %v1519
        %1529 = vmatprep.subr.bf16.mxu0 0
        %1530 = vmatpush1.bf16.msra.mxu0 %v1520
        %1531 = vmatprep.subr.bf16.mxu0 0
        %1532 = vmatpush1.bf16.msra.mxu0 0
        %1533 = vmatprep.subr.bf16.mxu0 0
        %1534 = vmatpush1.bf16.msra.mxu0 0
        %1535 = vmatprep.subr.bf16.mxu0 0
        %1536 = vmatpush1.bf16.msra.mxu0 0
        %1537 = vmatprep.subr.bf16.mxu0 0
        %1538 = vmatpush1.bf16.msra.mxu0 0
        %1539 = vmatprep.subr.bf16.mxu0 0
        %1540 = vmatpush1.bf16.msra.mxu0 0
        %1541 = vmatprep.subr.bf16.mxu0 0
        %1542 = vmatpush1.bf16.msra.mxu0 0
        %1543 = vmatprep.subr.bf16.mxu0 0
        %1544 = vmatpush1.bf16.msra.mxu0 0
        %1545 = vmatprep.subr.bf16.mxu0 0
        %1546 = vmatpush1.bf16.msra.mxu0 0
        %1547 = vmatprep.subr.bf16.mxu0 0
        %1548 = vmatpush1.bf16.msra.mxu0 0
        %1549 = vmatprep.subr.bf16.mxu0 0
        %1550 = vmatpush1.bf16.msra.mxu0 0
        %1551 = vmatprep.subr.bf16.mxu0 0
        %1552 = vmatpush1.bf16.msra.mxu0 0
        %1553 = vmatprep.subr.bf16.mxu0 0
        %1554 = vmatpush1.bf16.msra.mxu0 0
        %1555 = vmatprep.subr.bf16.mxu0 0
        %1556 = vmatpush1.bf16.msra.mxu0 0
        %1557 = vmatprep.subr.bf16.mxu0 0
        %1558 = vmatpush1.bf16.msra.mxu0 0
        %1559 = vmatprep.mubr.bf16.mxu0 0
        %1560 = vmatmul.mubr.bf16.gmra.mrb[0].mxu0 %v1525
        %v1561 = vpop.f32.mrb[0].mxu0
        %v1562 = vadd.f32 %v1509, %v1561
        %v1563 = vpop.f32.mrb[0].mxu0
        %v1564 = vpop.f32.mrb[0].mxu0
        %v1565 = vpop.f32.mrb[0].mxu0
        %1566 = vdwg.mxu0
        %v1567 = vmul.f32 %v1562, 0.35355338
        %v1568 = vld [vmem:[%s1185] sm:$0xf]
        %v1569 = vld [vmem:[%s1185 + $0x4] sm:$0xf]
        %v1570 = vld [vmem:[%s1185 + $0x8] sm:$0xf]
        %v1571 = vld [vmem:[%s1185 + $0xc] sm:$0xf]
        %v1572 = vld [vmem:[%s1193] sm:$0x1]
        %v1574 = vlaneseq
        %v1575 = vshrl.u32 %v1574, 7
        %v1576 = vsub.s32 0, %v1575
        %v1577 = vrot.slane %v1572, %v1576
        %v1583 = vunpack.c.l.b16 %v1568
        %v1584 = vunpack.c.l.b16 %v1569
        %v1585 = vunpack.c.l.b16 %v1570
        %v1586 = vunpack.c.l.b16 %v1571
        %v1587 = vpack.c.b16 %v1584, %v1583
        %v1588 = vpack.c.b16 %v1586, %v1585
        %1591 = vmatprep.subr.bf16.mxu0 0
        %1592 = vmatpush1.bf16.msra.mxu0 %v1587
        %1593 = vmatprep.subr.bf16.mxu0 0
        %1594 = vmatpush1.bf16.msra.mxu0 %v1588
        %1595 = vmatprep.subr.bf16.mxu0 0
        %1596 = vmatpush1.bf16.msra.mxu0 0
        %1597 = vmatprep.subr.bf16.mxu0 0
        %1598 = vmatpush1.bf16.msra.mxu0 0
        %1599 = vmatprep.subr.bf16.mxu0 0
        %1600 = vmatpush1.bf16.msra.mxu0 0
        %1601 = vmatprep.subr.bf16.mxu0 0
        %1602 = vmatpush1.bf16.msra.mxu0 0
        %1603 = vmatprep.subr.bf16.mxu0 0
        %1604 = vmatpush1.bf16.msra.mxu0 0
        %1605 = vmatprep.subr.bf16.mxu0 0
        %1606 = vmatpush1.bf16.msra.mxu0 0
        %1607 = vmatprep.subr.bf16.mxu0 0
        %1608 = vmatpush1.bf16.msra.mxu0 0
        %1609 = vmatprep.subr.bf16.mxu0 0
        %1610 = vmatpush1.bf16.msra.mxu0 0
        %1611 = vmatprep.subr.bf16.mxu0 0
        %1612 = vmatpush1.bf16.msra.mxu0 0
        %1613 = vmatprep.subr.bf16.mxu0 0
        %1614 = vmatpush1.bf16.msra.mxu0 0
        %1615 = vmatprep.subr.bf16.mxu0 0
        %1616 = vmatpush1.bf16.msra.mxu0 0
        %1617 = vmatprep.subr.bf16.mxu0 0
        %1618 = vmatpush1.bf16.msra.mxu0 0
        %1619 = vmatprep.subr.bf16.mxu0 0
        %1620 = vmatpush1.bf16.msra.mxu0 0
        %1621 = vmatprep.subr.bf16.mxu0 0
        %1622 = vmatpush1.bf16.msra.mxu0 0
        %1623 = vmatprep.mubr.bf16.mxu0 0
        %1624 = vmatmul.mubr.bf16.gmra.mrb[0].mxu0 %v1525
        %v1625 = vpop.f32.mrb[0].mxu0
        %v1626 = vadd.f32 %v1577, %v1625
        %v1627 = vpop.f32.mrb[0].mxu0
        %v1628 = vpop.f32.mrb[0].mxu0
        %v1629 = vpop.f32.mrb[0].mxu0
        %1630 = vdwg.mxu0
        %v1631 = vld [vmem:[%s1202] sm:$0xf]
        %v1632 = vld [vmem:[%s1202 + $0x4] sm:$0xf]
        %v1633 = vld [vmem:[%s1202 + $0x8] sm:$0xf]
        %v1634 = vld [vmem:[%s1202 + $0xc] sm:$0xf]
        %v1635 = vld [vmem:[%s1210] sm:$0x1]
        %v1637 = vlaneseq
        %v1638 = vshrl.u32 %v1637, 7
        %v1639 = vsub.s32 0, %v1638
        %v1640 = vrot.slane %v1635, %v1639
        %v1646 = vunpack.c.l.b16 %v1631
        %v1647 = vunpack.c.l.b16 %v1632
        %v1648 = vunpack.c.l.b16 %v1633
        %v1649 = vunpack.c.l.b16 %v1634
        %v1650 = vpack.c.b16 %v1647, %v1646
        %v1651 = vpack.c.b16 %v1649, %v1648
        %1654 = vmatprep.subr.bf16.mxu0 0
        %1655 = vmatpush1.bf16.msra.mxu0 %v1650
        %1656 = vmatprep.subr.bf16.mxu0 0
        %1657 = vmatpush1.bf16.msra.mxu0 %v1651
        %1658 = vmatprep.subr.bf16.mxu0 0
        %1659 = vmatpush1.bf16.msra.mxu0 0
        %1660 = vmatprep.subr.bf16.mxu0 0
        %1661 = vmatpush1.bf16.msra.mxu0 0
        %1662 = vmatprep.subr.bf16.mxu0 0
        %1663 = vmatpush1.bf16.msra.mxu0 0
        %1664 = vmatprep.subr.bf16.mxu0 0
        %1665 = vmatpush1.bf16.msra.mxu0 0
        %1666 = vmatprep.subr.bf16.mxu0 0
        %1667 = vmatpush1.bf16.msra.mxu0 0
        %1668 = vmatprep.subr.bf16.mxu0 0
        %1669 = vmatpush1.bf16.msra.mxu0 0
        %1670 = vmatprep.subr.bf16.mxu0 0
        %1671 = vmatpush1.bf16.msra.mxu0 0
        %1672 = vmatprep.subr.bf16.mxu0 0
        %1673 = vmatpush1.bf16.msra.mxu0 0
        %1674 = vmatprep.subr.bf16.mxu0 0
        %1675 = vmatpush1.bf16.msra.mxu0 0
        %1676 = vmatprep.subr.bf16.mxu0 0
        %1677 = vmatpush1.bf16.msra.mxu0 0
        %1678 = vmatprep.subr.bf16.mxu0 0
        %1679 = vmatpush1.bf16.msra.mxu0 0
        %1680 = vmatprep.subr.bf16.mxu0 0
        %1681 = vmatpush1.bf16.msra.mxu0 0
        %1682 = vmatprep.subr.bf16.mxu0 0
        %1683 = vmatpush1.bf16.msra.mxu0 0
        %1684 = vmatprep.subr.bf16.mxu0 0
        %1685 = vmatpush1.bf16.msra.mxu0 0
        %1686 = vmatprep.mubr.bf16.mxu0 0
        %1687 = vmatmul.mubr.bf16.gmra.mrb[0].mxu0 %v1525
        %v1688 = vpop.f32.mrb[0].mxu0
        %v1689 = vadd.f32 %v1640, %v1688
        %v1690 = vpop.f32.mrb[0].mxu0
        %v1691 = vpop.f32.mrb[0].mxu0
        %v1692 = vpop.f32.mrb[0].mxu0
        %1693 = vdwg.mxu0
        %1695 = vrot.lane.b32.xlu0 %v1567, 120
        %v1696 = vpop.permute.xlu0 %1695
        %1698 = vrot.lane.b32.xlu0 %v1567, 112
        %v1699 = vpop.permute.xlu0 %1698
        %1701 = vrot.lane.b32.xlu0 %v1567, 104
        %v1702 = vpop.permute.xlu0 %1701
        %v1704 = vcombine.low %v1567, %v1699
        %v1705 = vcombine.high %v1567, %v1699
        %v1707 = vunpack.c.l.s4 1983009808
        %v1708 = vunpack.c.0.s8 %v1707
        %v1709 = vlaneseq
        %v1710 = vshrl.u32 %v1709, 7
        %v1711 = vsub.s32 %v1708, %v1710
        %v1712 = vrot.slane %v1704, %v1711
        %v1714 = vunpack.c.l.s4 1983009808
        %v1715 = vunpack.c.0.s8 %v1714
        %v1716 = vlaneseq
        %v1717 = vshrl.u32 %v1716, 7
        %v1718 = vsub.s32 %v1715, %v1717
        %v1719 = vrot.slane %v1705, %v1718
        %v1720 = vcombine.low %v1696, %v1702
        %v1721 = vcombine.high %v1696, %v1702
        %v1723 = vunpack.c.l.s4 1983009808
        %v1724 = vunpack.c.0.s8 %v1723
        %v1725 = vlaneseq
        %v1726 = vshrl.u32 %v1725, 7
        %v1727 = vsub.s32 %v1724, %v1726
        %v1728 = vrot.slane %v1720, %v1727
        %v1730 = vunpack.c.l.s4 1983009808
        %v1731 = vunpack.c.0.s8 %v1730
        %v1732 = vlaneseq
        %v1733 = vshrl.u32 %v1732, 7
        %v1734 = vsub.s32 %v1731, %v1733
        %v1735 = vrot.slane %v1721, %v1734
        %v1736 = vcombine.low %v1712, %v1728
        %v1737 = vcombine.high %v1712, %v1728
        %v1739 = vunpack.c.l.s4 1934713408
        %v1740 = vunpack.c.0.s8 %v1739
        %v1741 = vlaneseq
        %v1742 = vshrl.u32 %v1741, 7
        %v1743 = vsub.s32 %v1740, %v1742
        %v1744 = vrot.slane %v1736, %v1743
        %v1746 = vunpack.c.l.s4 1934713408
        %v1747 = vunpack.c.0.s8 %v1746
        %v1748 = vlaneseq
        %v1749 = vshrl.u32 %v1748, 7
        %v1750 = vsub.s32 %v1747, %v1749
        %v1751 = vrot.slane %v1737, %v1750
        %v1752 = vcombine.low %v1719, %v1735
        %v1753 = vcombine.high %v1719, %v1735
        %v1755 = vunpack.c.l.s4 1934713408
        %v1756 = vunpack.c.0.s8 %v1755
        %v1757 = vlaneseq
        %v1758 = vshrl.u32 %v1757, 7
        %v1759 = vsub.s32 %v1756, %v1758
        %v1760 = vrot.slane %v1752, %v1759
        %v1762 = vunpack.c.l.s4 1934713408
        %v1763 = vunpack.c.0.s8 %v1762
        %v1764 = vlaneseq
        %v1765 = vshrl.u32 %v1764, 7
        %v1766 = vsub.s32 %v1763, %v1765
        %v1767 = vrot.slane %v1753, %v1766
        %v1768 = vcombine.high %v1744, 0.0
        %v1769 = vcombine.high %v1751, 0.0
        %v1770 = vcombine.high %v1760, 0.0
        %v1771 = vcombine.high %v1767, 0.0
        %v1772 = vcombine.low %v1744, %v1751
        %v1774 = vunpack.c.l.s4 1983009808
        %v1775 = vunpack.c.0.s8 %v1774
        %v1776 = vlaneseq
        %v1777 = vshrl.u32 %v1776, 7
        %v1778 = vsub.s32 %v1775, %v1777
        %v1779 = vrot.slane %v1772, %v1778
        %v1780 = vcombine.low %v1768, %v1769
        %v1782 = vunpack.c.l.s4 1983009808
        %v1783 = vunpack.c.0.s8 %v1782
        %v1784 = vlaneseq
        %v1785 = vshrl.u32 %v1784, 7
        %v1786 = vsub.s32 %v1783, %v1785
        %v1787 = vrot.slane %v1780, %v1786
        %v1788 = vcombine.low %v1760, %v1767
        %v1790 = vunpack.c.l.s4 1983009808
        %v1791 = vunpack.c.0.s8 %v1790
        %v1792 = vlaneseq
        %v1793 = vshrl.u32 %v1792, 7
        %v1794 = vsub.s32 %v1791, %v1793
        %v1795 = vrot.slane %v1788, %v1794
        %v1796 = vcombine.low %v1770, %v1771
        %v1798 = vunpack.c.l.s4 1983009808
        %v1799 = vunpack.c.0.s8 %v1798
        %v1800 = vlaneseq
        %v1801 = vshrl.u32 %v1800, 7
        %v1802 = vsub.s32 %v1799, %v1801
        %v1803 = vrot.slane %v1796, %v1802
        %v1804 = vcombine.low %v1779, %v1787
        %v1805 = vcombine.high %v1779, %v1787
        %v1807 = vunpack.c.l.s4 1934713408
        %v1808 = vunpack.c.0.s8 %v1807
        %v1809 = vlaneseq
        %v1810 = vshrl.u32 %v1809, 7
        %v1811 = vsub.s32 %v1808, %v1810
        %v1812 = vrot.slane %v1804, %v1811
        %v1814 = vunpack.c.l.s4 1934713408
        %v1815 = vunpack.c.0.s8 %v1814
        %v1816 = vlaneseq
        %v1817 = vshrl.u32 %v1816, 7
        %v1818 = vsub.s32 %v1815, %v1817
        %v1819 = vrot.slane %v1805, %v1818
        %v1820 = vcombine.low %v1795, %v1803
        %v1821 = vcombine.high %v1795, %v1803
        %v1823 = vunpack.c.l.s4 1934713408
        %v1824 = vunpack.c.0.s8 %v1823
        %v1825 = vlaneseq
        %v1826 = vshrl.u32 %v1825, 7
        %v1827 = vsub.s32 %v1824, %v1826
        %v1828 = vrot.slane %v1820, %v1827
        %v1830 = vunpack.c.l.s4 1934713408
        %v1831 = vunpack.c.0.s8 %v1830
        %v1832 = vlaneseq
        %v1833 = vshrl.u32 %v1832, 7
        %v1834 = vsub.s32 %v1831, %v1833
        %v1835 = vrot.slane %v1821, %v1834
        %v1836 = vcombine.low %v1812, %v1828
        %v1837 = vcombine.high %v1812, %v1828
        %v1838 = vcombine.low %v1819, %v1835
        %v1839 = vcombine.high %v1819, %v1835
        %v1840 = vpack.c.bf16 %v1836, %v1836
        %v1841 = vpack.c.bf16 %v1837, %v1837
        %v1842 = vpack.c.bf16 %v1838, %v1838
        %v1843 = vpack.c.bf16 %v1839, %v1839
        %1845 = vrot.lane.b32.xlu0 %v1626, 120
        %v1846 = vpop.permute.xlu0 %1845
        %1848 = vrot.lane.b32.xlu0 %v1626, 112
        %v1849 = vpop.permute.xlu0 %1848
        %1851 = vrot.lane.b32.xlu0 %v1626, 104
        %v1852 = vpop.permute.xlu0 %1851
        %v1854 = vcombine.low %v1626, %v1849
        %v1855 = vcombine.high %v1626, %v1849
        %v1857 = vunpack.c.l.s4 1983009808
        %v1858 = vunpack.c.0.s8 %v1857
        %v1859 = vlaneseq
        %v1860 = vshrl.u32 %v1859, 7
        %v1861 = vsub.s32 %v1858, %v1860
        %v1862 = vrot.slane %v1854, %v1861
        %v1864 = vunpack.c.l.s4 1983009808
        %v1865 = vunpack.c.0.s8 %v1864
        %v1866 = vlaneseq
        %v1867 = vshrl.u32 %v1866, 7
        %v1868 = vsub.s32 %v1865, %v1867
        %v1869 = vrot.slane %v1855, %v1868
        %v1870 = vcombine.low %v1846, %v1852
        %v1871 = vcombine.high %v1846, %v1852
        %v1873 = vunpack.c.l.s4 1983009808
        %v1874 = vunpack.c.0.s8 %v1873
        %v1875 = vlaneseq
        %v1876 = vshrl.u32 %v1875, 7
        %v1877 = vsub.s32 %v1874, %v1876
        %v1878 = vrot.slane %v1870, %v1877
        %v1880 = vunpack.c.l.s4 1983009808
        %v1881 = vunpack.c.0.s8 %v1880
        %v1882 = vlaneseq
        %v1883 = vshrl.u32 %v1882, 7
        %v1884 = vsub.s32 %v1881, %v1883
        %v1885 = vrot.slane %v1871, %v1884
        %v1886 = vcombine.low %v1862, %v1878
        %v1887 = vcombine.high %v1862, %v1878
        %v1889 = vunpack.c.l.s4 1934713408
        %v1890 = vunpack.c.0.s8 %v1889
        %v1891 = vlaneseq
        %v1892 = vshrl.u32 %v1891, 7
        %v1893 = vsub.s32 %v1890, %v1892
        %v1894 = vrot.slane %v1886, %v1893
        %v1896 = vunpack.c.l.s4 1934713408
        %v1897 = vunpack.c.0.s8 %v1896
        %v1898 = vlaneseq
        %v1899 = vshrl.u32 %v1898, 7
        %v1900 = vsub.s32 %v1897, %v1899
        %v1901 = vrot.slane %v1887, %v1900
        %v1902 = vcombine.low %v1869, %v1885
        %v1903 = vcombine.high %v1869, %v1885
        %v1905 = vunpack.c.l.s4 1934713408
        %v1906 = vunpack.c.0.s8 %v1905
        %v1907 = vlaneseq
        %v1908 = vshrl.u32 %v1907, 7
        %v1909 = vsub.s32 %v1906, %v1908
        %v1910 = vrot.slane %v1902, %v1909
        %v1912 = vunpack.c.l.s4 1934713408
        %v1913 = vunpack.c.0.s8 %v1912
        %v1914 = vlaneseq
        %v1915 = vshrl.u32 %v1914, 7
        %v1916 = vsub.s32 %v1913, %v1915
        %v1917 = vrot.slane %v1903, %v1916
        %v1918 = vcombine.high %v1894, 0.0
        %v1919 = vcombine.high %v1901, 0.0
        %v1920 = vcombine.high %v1910, 0.0
        %v1921 = vcombine.high %v1917, 0.0
        %v1922 = vcombine.low %v1894, %v1901
        %v1924 = vunpack.c.l.s4 1983009808
        %v1925 = vunpack.c.0.s8 %v1924
        %v1926 = vlaneseq
        %v1927 = vshrl.u32 %v1926, 7
        %v1928 = vsub.s32 %v1925, %v1927
        %v1929 = vrot.slane %v1922, %v1928
        %v1930 = vcombine.low %v1918, %v1919
        %v1932 = vunpack.c.l.s4 1983009808
        %v1933 = vunpack.c.0.s8 %v1932
        %v1934 = vlaneseq
        %v1935 = vshrl.u32 %v1934, 7
        %v1936 = vsub.s32 %v1933, %v1935
        %v1937 = vrot.slane %v1930, %v1936
        %v1938 = vcombine.low %v1910, %v1917
        %v1940 = vunpack.c.l.s4 1983009808
        %v1941 = vunpack.c.0.s8 %v1940
        %v1942 = vlaneseq
        %v1943 = vshrl.u32 %v1942, 7
        %v1944 = vsub.s32 %v1941, %v1943
        %v1945 = vrot.slane %v1938, %v1944
        %v1946 = vcombine.low %v1920, %v1921
        %v1948 = vunpack.c.l.s4 1983009808
        %v1949 = vunpack.c.0.s8 %v1948
        %v1950 = vlaneseq
        %v1951 = vshrl.u32 %v1950, 7
        %v1952 = vsub.s32 %v1949, %v1951
        %v1953 = vrot.slane %v1946, %v1952
        %v1954 = vcombine.low %v1929, %v1937
        %v1955 = vcombine.high %v1929, %v1937
        %v1957 = vunpack.c.l.s4 1934713408
        %v1958 = vunpack.c.0.s8 %v1957
        %v1959 = vlaneseq
        %v1960 = vshrl.u32 %v1959, 7
        %v1961 = vsub.s32 %v1958, %v1960
        %v1962 = vrot.slane %v1954, %v1961
        %v1964 = vunpack.c.l.s4 1934713408
        %v1965 = vunpack.c.0.s8 %v1964
        %v1966 = vlaneseq
        %v1967 = vshrl.u32 %v1966, 7
        %v1968 = vsub.s32 %v1965, %v1967
        %v1969 = vrot.slane %v1955, %v1968
        %v1970 = vcombine.low %v1945, %v1953
        %v1971 = vcombine.high %v1945, %v1953
        %v1973 = vunpack.c.l.s4 1934713408
        %v1974 = vunpack.c.0.s8 %v1973
        %v1975 = vlaneseq
        %v1976 = vshrl.u32 %v1975, 7
        %v1977 = vsub.s32 %v1974, %v1976
        %v1978 = vrot.slane %v1970, %v1977
        %v1980 = vunpack.c.l.s4 1934713408
        %v1981 = vunpack.c.0.s8 %v1980
        %v1982 = vlaneseq
        %v1983 = vshrl.u32 %v1982, 7
        %v1984 = vsub.s32 %v1981, %v1983
        %v1985 = vrot.slane %v1971, %v1984
        %v1986 = vcombine.low %v1962, %v1978
        %v1987 = vcombine.high %v1962, %v1978
        %v1988 = vcombine.low %v1969, %v1985
        %v1989 = vcombine.high %v1969, %v1985
        %v1990 = vpack.c.bf16 %v1986, %v1986
        %v1991 = vpack.c.bf16 %v1987, %v1987
        %v1992 = vpack.c.bf16 %v1988, %v1988
        %v1993 = vpack.c.bf16 %v1989, %v1989
        %1995 = vrot.lane.b32.xlu0 %v1689, 120
        %v1996 = vpop.permute.xlu0 %1995
        %1998 = vrot.lane.b32.xlu0 %v1689, 112
        %v1999 = vpop.permute.xlu0 %1998
        %2001 = vrot.lane.b32.xlu0 %v1689, 104
        %v2002 = vpop.permute.xlu0 %2001
        %v2004 = vcombine.low %v1689, %v1999
        %v2005 = vcombine.high %v1689, %v1999
        %v2007 = vunpack.c.l.s4 1983009808
        %v2008 = vunpack.c.0.s8 %v2007
        %v2009 = vlaneseq
        %v2010 = vshrl.u32 %v2009, 7
        %v2011 = vsub.s32 %v2008, %v2010
        %v2012 = vrot.slane %v2004, %v2011
        %v2014 = vunpack.c.l.s4 1983009808
        %v2015 = vunpack.c.0.s8 %v2014
        %v2016 = vlaneseq
        %v2017 = vshrl.u32 %v2016, 7
        %v2018 = vsub.s32 %v2015, %v2017
        %v2019 = vrot.slane %v2005, %v2018
        %v2020 = vcombine.low %v1996, %v2002
        %v2021 = vcombine.high %v1996, %v2002
        %v2023 = vunpack.c.l.s4 1983009808
        %v2024 = vunpack.c.0.s8 %v2023
        %v2025 = vlaneseq
        %v2026 = vshrl.u32 %v2025, 7
        %v2027 = vsub.s32 %v2024, %v2026
        %v2028 = vrot.slane %v2020, %v2027
        %v2030 = vunpack.c.l.s4 1983009808
        %v2031 = vunpack.c.0.s8 %v2030
        %v2032 = vlaneseq
        %v2033 = vshrl.u32 %v2032, 7
        %v2034 = vsub.s32 %v2031, %v2033
        %v2035 = vrot.slane %v2021, %v2034
        %v2036 = vcombine.low %v2012, %v2028
        %v2037 = vcombine.high %v2012, %v2028
        %v2039 = vunpack.c.l.s4 1934713408
        %v2040 = vunpack.c.0.s8 %v2039
        %v2041 = vlaneseq
        %v2042 = vshrl.u32 %v2041, 7
        %v2043 = vsub.s32 %v2040, %v2042
        %v2044 = vrot.slane %v2036, %v2043
        %v2046 = vunpack.c.l.s4 1934713408
        %v2047 = vunpack.c.0.s8 %v2046
        %v2048 = vlaneseq
        %v2049 = vshrl.u32 %v2048, 7
        %v2050 = vsub.s32 %v2047, %v2049
        %v2051 = vrot.slane %v2037, %v2050
        %v2052 = vcombine.low %v2019, %v2035
        %v2053 = vcombine.high %v2019, %v2035
        %v2055 = vunpack.c.l.s4 1934713408
        %v2056 = vunpack.c.0.s8 %v2055
        %v2057 = vlaneseq
        %v2058 = vshrl.u32 %v2057, 7
        %v2059 = vsub.s32 %v2056, %v2058
        %v2060 = vrot.slane %v2052, %v2059
        %v2062 = vunpack.c.l.s4 1934713408
        %v2063 = vunpack.c.0.s8 %v2062
        %v2064 = vlaneseq
        %v2065 = vshrl.u32 %v2064, 7
        %v2066 = vsub.s32 %v2063, %v2065
        %v2067 = vrot.slane %v2053, %v2066
        %v2068 = vcombine.high %v2044, 0.0
        %v2069 = vcombine.high %v2051, 0.0
        %v2070 = vcombine.high %v2060, 0.0
        %v2071 = vcombine.high %v2067, 0.0
        %v2072 = vcombine.low %v2044, %v2051
        %v2074 = vunpack.c.l.s4 1983009808
        %v2075 = vunpack.c.0.s8 %v2074
        %v2076 = vlaneseq
        %v2077 = vshrl.u32 %v2076, 7
        %v2078 = vsub.s32 %v2075, %v2077
        %v2079 = vrot.slane %v2072, %v2078
        %v2080 = vcombine.low %v2068, %v2069
        %v2082 = vunpack.c.l.s4 1983009808
        %v2083 = vunpack.c.0.s8 %v2082
        %v2084 = vlaneseq
        %v2085 = vshrl.u32 %v2084, 7
        %v2086 = vsub.s32 %v2083, %v2085
        %v2087 = vrot.slane %v2080, %v2086
        %v2088 = vcombine.low %v2060, %v2067
        %v2090 = vunpack.c.l.s4 1983009808
        %v2091 = vunpack.c.0.s8 %v2090
        %v2092 = vlaneseq
        %v2093 = vshrl.u32 %v2092, 7
        %v2094 = vsub.s32 %v2091, %v2093
        %v2095 = vrot.slane %v2088, %v2094
        %v2096 = vcombine.low %v2070, %v2071
        %v2098 = vunpack.c.l.s4 1983009808
        %v2099 = vunpack.c.0.s8 %v2098
        %v2100 = vlaneseq
        %v2101 = vshrl.u32 %v2100, 7
        %v2102 = vsub.s32 %v2099, %v2101
        %v2103 = vrot.slane %v2096, %v2102
        %v2104 = vcombine.low %v2079, %v2087
        %v2105 = vcombine.high %v2079, %v2087
        %v2107 = vunpack.c.l.s4 1934713408
        %v2108 = vunpack.c.0.s8 %v2107
        %v2109 = vlaneseq
        %v2110 = vshrl.u32 %v2109, 7
        %v2111 = vsub.s32 %v2108, %v2110
        %v2112 = vrot.slane %v2104, %v2111
        %v2114 = vunpack.c.l.s4 1934713408
        %v2115 = vunpack.c.0.s8 %v2114
        %v2116 = vlaneseq
        %v2117 = vshrl.u32 %v2116, 7
        %v2118 = vsub.s32 %v2115, %v2117
        %v2119 = vrot.slane %v2105, %v2118
        %v2120 = vcombine.low %v2095, %v2103
        %v2121 = vcombine.high %v2095, %v2103
        %v2123 = vunpack.c.l.s4 1934713408
        %v2124 = vunpack.c.0.s8 %v2123
        %v2125 = vlaneseq
        %v2126 = vshrl.u32 %v2125, 7
        %v2127 = vsub.s32 %v2124, %v2126
        %v2128 = vrot.slane %v2120, %v2127
        %v2130 = vunpack.c.l.s4 1934713408
        %v2131 = vunpack.c.0.s8 %v2130
        %v2132 = vlaneseq
        %v2133 = vshrl.u32 %v2132, 7
        %v2134 = vsub.s32 %v2131, %v2133
        %v2135 = vrot.slane %v2121, %v2134
        %v2136 = vcombine.low %v2112, %v2128
        %v2137 = vcombine.high %v2112, %v2128
        %v2138 = vcombine.low %v2119, %v2135
        %v2139 = vcombine.high %v2119, %v2135
        %v2140 = vpack.c.bf16 %v2136, %v2136
        %v2141 = vpack.c.bf16 %v2137, %v2137
        %v2142 = vpack.c.bf16 %v2138, %v2138
        %v2143 = vpack.c.bf16 %v2139, %v2139
        %v2144 = vld [vmem:[%s1159] sm:$0x1]
        %v2146 = vlaneseq
        %v2147 = vshrl.u32 %v2146, 7
        %v2148 = vsub.s32 0, %v2147
        %v2149 = vrot.slane %v2144, %v2148
        %vm2151 = vcmask 64512
        %v2153 = vsel %vm2151, %v1840, 0
        %v2156 = vsel %vm2151, %v1990, 0
        %2158 = vmatprep.subr.bf16.mxu0 0
        %2159 = vmatpush1.bf16.xpose.msra.mxu0 %v2156
        %2160 = vmatprep.subr.bf16.mxu0 0
        %2161 = vmatpush1.bf16.xpose.msra.mxu0 0
        %2162 = vmatprep.subr.bf16.mxu0 0
        %2163 = vmatpush1.bf16.xpose.msra.mxu0 0
        %2164 = vmatprep.subr.bf16.mxu0 0
        %2165 = vmatpush1.bf16.xpose.msra.mxu0 0
        %2166 = vmatprep.subr.bf16.mxu0 0
        %2167 = vmatpush1.bf16.xpose.msra.mxu0 0
        %2168 = vmatprep.subr.bf16.mxu0 0
        %2169 = vmatpush1.bf16.xpose.msra.mxu0 0
        %2170 = vmatprep.subr.bf16.mxu0 0
        %2171 = vmatpush1.bf16.xpose.msra.mxu0 0
        %2172 = vmatprep.subr.bf16.mxu0 0
        %2173 = vmatpush1.bf16.xpose.msra.mxu0 0
        %2174 = vmatprep.subr.bf16.mxu0 0
        %2175 = vmatpush1.bf16.xpose.msra.mxu0 0
        %2176 = vmatprep.subr.bf16.mxu0 0
        %2177 = vmatpush1.bf16.xpose.msra.mxu0 0
        %2178 = vmatprep.subr.bf16.mxu0 0
        %2179 = vmatpush1.bf16.xpose.msra.mxu0 0
        %2180 = vmatprep.subr.bf16.mxu0 0
        %2181 = vmatpush1.bf16.xpose.msra.mxu0 0
        %2182 = vmatprep.subr.bf16.mxu0 0
        %2183 = vmatpush1.bf16.xpose.msra.mxu0 0
        %2184 = vmatprep.subr.bf16.mxu0 0
        %2185 = vmatpush1.bf16.xpose.msra.mxu0 0
        %2186 = vmatprep.subr.bf16.mxu0 0
        %2187 = vmatpush1.bf16.xpose.msra.mxu0 0
        %2188 = vmatprep.subr.bf16.mxu0 0
        %2189 = vmatpush1.bf16.xpose.msra.mxu0 0
        %2190 = vmatprep.mubr.bf16.mxu0 0
        %2191 = vmatmul.mubr.bf16.gmra.mrb[0].mxu0 %v2153
        %v2192 = vpop.f32.mrb[0].mxu0
        %v2193 = vadd.f32 %v2149, %v2192
        %v2194 = vpop.f32.mrb[0].mxu0
        %v2195 = vpop.f32.mrb[0].mxu0
        %v2196 = vpop.f32.mrb[0].mxu0
        %2197 = vdwg.mxu0
        %v2199 = vsel %vm2151, %v1841, 0
        %v2202 = vsel %vm2151, %v1991, 0
        %2204 = vmatprep.subr.bf16.mxu0 0
        %2205 = vmatpush1.bf16.xpose.msra.mxu0 %v2202
        %2206 = vmatprep.subr.bf16.mxu0 0
        %2207 = vmatpush1.bf16.xpose.msra.mxu0 0
        %2208 = vmatprep.subr.bf16.mxu0 0
        %2209 = vmatpush1.bf16.xpose.msra.mxu0 0
        %2210 = vmatprep.subr.bf16.mxu0 0
        %2211 = vmatpush1.bf16.xpose.msra.mxu0 0
        %2212 = vmatprep.subr.bf16.mxu0 0
        %2213 = vmatpush1.bf16.xpose.msra.mxu0 0
        %2214 = vmatprep.subr.bf16.mxu0 0
        %2215 = vmatpush1.bf16.xpose.msra.mxu0 0
        %2216 = vmatprep.subr.bf16.mxu0 0
        %2217 = vmatpush1.bf16.xpose.msra.mxu0 0
        %2218 = vmatprep.subr.bf16.mxu0 0
        %2219 = vmatpush1.bf16.xpose.msra.mxu0 0
        %2220 = vmatprep.subr.bf16.mxu0 0
        %2221 = vmatpush1.bf16.xpose.msra.mxu0 0
        %2222 = vmatprep.subr.bf16.mxu0 0
        %2223 = vmatpush1.bf16.xpose.msra.mxu0 0
        %2224 = vmatprep.subr.bf16.mxu0 0
        %2225 = vmatpush1.bf16.xpose.msra.mxu0 0
        %2226 = vmatprep.subr.bf16.mxu0 0
        %2227 = vmatpush1.bf16.xpose.msra.mxu0 0
        %2228 = vmatprep.subr.bf16.mxu0 0
        %2229 = vmatpush1.bf16.xpose.msra.mxu0 0
        %2230 = vmatprep.subr.bf16.mxu0 0
        %2231 = vmatpush1.bf16.xpose.msra.mxu0 0
        %2232 = vmatprep.subr.bf16.mxu0 0
        %2233 = vmatpush1.bf16.xpose.msra.mxu0 0
        %2234 = vmatprep.subr.bf16.mxu0 0
        %2235 = vmatpush1.bf16.xpose.msra.mxu0 0
        %2236 = vmatprep.mubr.bf16.mxu0 0
        %2237 = vmatmul.mubr.bf16.gmra.mrb[0].mxu0 %v2199
        %v2238 = vpop.f32.mrb[0].mxu0
        %v2239 = vadd.f32 %v2149, %v2238
        %v2240 = vpop.f32.mrb[0].mxu0
        %v2241 = vpop.f32.mrb[0].mxu0
        %v2242 = vpop.f32.mrb[0].mxu0
        %2243 = vdwg.mxu0
        %v2245 = vsel %vm2151, %v1842, 0
        %v2248 = vsel %vm2151, %v1992, 0
        %2250 = vmatprep.subr.bf16.mxu0 0
        %2251 = vmatpush1.bf16.xpose.msra.mxu0 %v2248
        %2252 = vmatprep.subr.bf16.mxu0 0
        %2253 = vmatpush1.bf16.xpose.msra.mxu0 0
        %2254 = vmatprep.subr.bf16.mxu0 0
        %2255 = vmatpush1.bf16.xpose.msra.mxu0 0
        %2256 = vmatprep.subr.bf16.mxu0 0
        %2257 = vmatpush1.bf16.xpose.msra.mxu0 0
        %2258 = vmatprep.subr.bf16.mxu0 0
        %2259 = vmatpush1.bf16.xpose.msra.mxu0 0
        %2260 = vmatprep.subr.bf16.mxu0 0
        %2261 = vmatpush1.bf16.xpose.msra.mxu0 0
        %2262 = vmatprep.subr.bf16.mxu0 0
        %2263 = vmatpush1.bf16.xpose.msra.mxu0 0
        %2264 = vmatprep.subr.bf16.mxu0 0
        %2265 = vmatpush1.bf16.xpose.msra.mxu0 0
        %2266 = vmatprep.subr.bf16.mxu0 0
        %2267 = vmatpush1.bf16.xpose.msra.mxu0 0
        %2268 = vmatprep.subr.bf16.mxu0 0
        %2269 = vmatpush1.bf16.xpose.msra.mxu0 0
        %2270 = vmatprep.subr.bf16.mxu0 0
        %2271 = vmatpush1.bf16.xpose.msra.mxu0 0
        %2272 = vmatprep.subr.bf16.mxu0 0
        %2273 = vmatpush1.bf16.xpose.msra.mxu0 0
        %2274 = vmatprep.subr.bf16.mxu0 0
        %2275 = vmatpush1.bf16.xpose.msra.mxu0 0
        %2276 = vmatprep.subr.bf16.mxu0 0
        %2277 = vmatpush1.bf16.xpose.msra.mxu0 0
        %2278 = vmatprep.subr.bf16.mxu0 0
        %2279 = vmatpush1.bf16.xpose.msra.mxu0 0
        %2280 = vmatprep.subr.bf16.mxu0 0
        %2281 = vmatpush1.bf16.xpose.msra.mxu0 0
        %2282 = vmatprep.mubr.bf16.mxu0 0
        %2283 = vmatmul.mubr.bf16.gmra.mrb[0].mxu0 %v2245
        %v2284 = vpop.f32.mrb[0].mxu0
        %v2285 = vadd.f32 %v2149, %v2284
        %v2286 = vpop.f32.mrb[0].mxu0
        %v2287 = vpop.f32.mrb[0].mxu0
        %v2288 = vpop.f32.mrb[0].mxu0
        %2289 = vdwg.mxu0
        %v2291 = vsel %vm2151, %v1843, 0
        %v2294 = vsel %vm2151, %v1993, 0
        %2296 = vmatprep.subr.bf16.mxu0 0
        %2297 = vmatpush1.bf16.xpose.msra.mxu0 %v2294
        %2298 = vmatprep.subr.bf16.mxu0 0
        %2299 = vmatpush1.bf16.xpose.msra.mxu0 0
        %2300 = vmatprep.subr.bf16.mxu0 0
        %2301 = vmatpush1.bf16.xpose.msra.mxu0 0
        %2302 = vmatprep.subr.bf16.mxu0 0
        %2303 = vmatpush1.bf16.xpose.msra.mxu0 0
        %2304 = vmatprep.subr.bf16.mxu0 0
        %2305 = vmatpush1.bf16.xpose.msra.mxu0 0
        %2306 = vmatprep.subr.bf16.mxu0 0
        %2307 = vmatpush1.bf16.xpose.msra.mxu0 0
        %2308 = vmatprep.subr.bf16.mxu0 0
        %2309 = vmatpush1.bf16.xpose.msra.mxu0 0
        %2310 = vmatprep.subr.bf16.mxu0 0
        %2311 = vmatpush1.bf16.xpose.msra.mxu0 0
        %2312 = vmatprep.subr.bf16.mxu0 0
        %2313 = vmatpush1.bf16.xpose.msra.mxu0 0
        %2314 = vmatprep.subr.bf16.mxu0 0
        %2315 = vmatpush1.bf16.xpose.msra.mxu0 0
        %2316 = vmatprep.subr.bf16.mxu0 0
        %2317 = vmatpush1.bf16.xpose.msra.mxu0 0
        %2318 = vmatprep.subr.bf16.mxu0 0
        %2319 = vmatpush1.bf16.xpose.msra.mxu0 0
        %2320 = vmatprep.subr.bf16.mxu0 0
        %2321 = vmatpush1.bf16.xpose.msra.mxu0 0
        %2322 = vmatprep.subr.bf16.mxu0 0
        %2323 = vmatpush1.bf16.xpose.msra.mxu0 0
        %2324 = vmatprep.subr.bf16.mxu0 0
        %2325 = vmatpush1.bf16.xpose.msra.mxu0 0
        %2326 = vmatprep.subr.bf16.mxu0 0
        %2327 = vmatpush1.bf16.xpose.msra.mxu0 0
        %2328 = vmatprep.mubr.bf16.mxu0 0
        %2329 = vmatmul.mubr.bf16.gmra.mrb[0].mxu0 %v2291
        %v2330 = vpop.f32.mrb[0].mxu0
        %v2331 = vadd.f32 %v2149, %v2330
        %v2332 = vpop.f32.mrb[0].mxu0
        %v2333 = vpop.f32.mrb[0].mxu0
        %v2334 = vpop.f32.mrb[0].mxu0
        %2335 = vdwg.mxu0
        %v2336 = vsel %vm2151, %v2193, -inf
        %2337 = vmax.xlane.f32.xlu0 %v2336
        %v2338 = vpop.xlane.xlu0 %2337
        %v2339 = vsel %vm2151, %v2239, -inf
        %2340 = vmax.xlane.f32.xlu0 %v2339
        %v2341 = vpop.xlane.xlu0 %2340
        %v2342 = vsel %vm2151, %v2285, -inf
        %2343 = vmax.xlane.f32.xlu0 %v2342
        %v2344 = vpop.xlane.xlu0 %2343
        %v2345 = vsel %vm2151, %v2331, -inf
        %2346 = vmax.xlane.f32.xlu0 %v2345
        %v2347 = vpop.xlane.xlu0 %2346
        %v2348 = vsub.f32 %v2193, %v2338
        %v2349 = vsub.f32 %v2239, %v2341
        %v2350 = vsub.f32 %v2285, %v2344
        %v2351 = vsub.f32 %v2331, %v2347
        %v2352 = vmul.f32 %v2348, 1.442695
        %v2353 = vpow.pop %v2352
        %v2354 = vmul.f32 %v2349, 1.442695
        %v2355 = vpow.pop %v2354
        %v2356 = vmul.f32 %v2350, 1.442695
        %v2357 = vpow.pop %v2356
        %v2358 = vmul.f32 %v2351, 1.442695
        %v2359 = vpow.pop %v2358
        %v2360 = vsel %vm2151, %v2353, 0.0
        %2361 = vadd.xlane.f32.xlu0 %v2360
        %v2362 = vpop.xlane.xlu0 %2361
        %v2363 = vsel %vm2151, %v2355, 0.0
        %2364 = vadd.xlane.f32.xlu0 %v2363
        %v2365 = vpop.xlane.xlu0 %2364
        %v2366 = vsel %vm2151, %v2357, 0.0
        %2367 = vadd.xlane.f32.xlu0 %v2366
        %v2368 = vpop.xlane.xlu0 %2367
        %v2369 = vsel %vm2151, %v2359, 0.0
        %2370 = vadd.xlane.f32.xlu0 %v2369
        %v2371 = vpop.xlane.xlu0 %2370
        %v2372 = vrcp.pop %v2362
        %v2373 = vrcp.pop %v2365
        %v2374 = vrcp.pop %v2368
        %v2375 = vrcp.pop %v2371
        %v2376 = vpack.c.bf16 %v2353, %v2353
        %v2377 = vpack.c.bf16 %v2355, %v2355
        %v2378 = vpack.c.bf16 %v2357, %v2357
        %v2379 = vpack.c.bf16 %v2359, %v2359
        %v2381 = vsel %vm2151, %v2376, 0
        %vm2383 = vcmask 1043456
        %v2385 = vsel %vm2383, %v2140, 0
        %2387 = vmatprep.subr.bf16.mxu0 0
        %2388 = vmatpush1.bf16.msra.mxu0 %v2385
        %2389 = vmatprep.subr.bf16.mxu0 0
        %2390 = vmatpush1.bf16.msra.mxu0 0
        %2391 = vmatprep.subr.bf16.mxu0 0
        %2392 = vmatpush1.bf16.msra.mxu0 0
        %2393 = vmatprep.subr.bf16.mxu0 0
        %2394 = vmatpush1.bf16.msra.mxu0 0
        %2395 = vmatprep.subr.bf16.mxu0 0
        %2396 = vmatpush1.bf16.msra.mxu0 0
        %2397 = vmatprep.subr.bf16.mxu0 0
        %2398 = vmatpush1.bf16.msra.mxu0 0
        %2399 = vmatprep.subr.bf16.mxu0 0
        %2400 = vmatpush1.bf16.msra.mxu0 0
        %2401 = vmatprep.subr.bf16.mxu0 0
        %2402 = vmatpush1.bf16.msra.mxu0 0
        %2403 = vmatprep.subr.bf16.mxu0 0
        %2404 = vmatpush1.bf16.msra.mxu0 0
        %2405 = vmatprep.subr.bf16.mxu0 0
        %2406 = vmatpush1.bf16.msra.mxu0 0
        %2407 = vmatprep.subr.bf16.mxu0 0
        %2408 = vmatpush1.bf16.msra.mxu0 0
        %2409 = vmatprep.subr.bf16.mxu0 0
        %2410 = vmatpush1.bf16.msra.mxu0 0
        %2411 = vmatprep.subr.bf16.mxu0 0
        %2412 = vmatpush1.bf16.msra.mxu0 0
        %2413 = vmatprep.subr.bf16.mxu0 0
        %2414 = vmatpush1.bf16.msra.mxu0 0
        %2415 = vmatprep.subr.bf16.mxu0 0
        %2416 = vmatpush1.bf16.msra.mxu0 0
        %2417 = vmatprep.subr.bf16.mxu0 0
        %2418 = vmatpush1.bf16.msra.mxu0 0
        %2419 = vmatprep.mubr.bf16.mxu0 0
        %2420 = vmatmul.mubr.bf16.gmra.mrb[0].mxu0 %v2381
        %v2421 = vpop.f32.mrb[0].mxu0
        %v2422 = vadd.f32 0.0, %v2421
        %v2423 = vpop.f32.mrb[0].mxu0
        %v2424 = vpop.f32.mrb[0].mxu0
        %v2425 = vpop.f32.mrb[0].mxu0
        %2426 = vdwg.mxu0
        %v2428 = vsel %vm2151, %v2377, 0
        %v2431 = vsel %vm2383, %v2141, 0
        %2433 = vmatprep.subr.bf16.mxu0 0
        %2434 = vmatpush1.bf16.msra.mxu0 %v2431
        %2435 = vmatprep.subr.bf16.mxu0 0
        %2436 = vmatpush1.bf16.msra.mxu0 0
        %2437 = vmatprep.subr.bf16.mxu0 0
        %2438 = vmatpush1.bf16.msra.mxu0 0
        %2439 = vmatprep.subr.bf16.mxu0 0
        %2440 = vmatpush1.bf16.msra.mxu0 0
        %2441 = vmatprep.subr.bf16.mxu0 0
        %2442 = vmatpush1.bf16.msra.mxu0 0
        %2443 = vmatprep.subr.bf16.mxu0 0
        %2444 = vmatpush1.bf16.msra.mxu0 0
        %2445 = vmatprep.subr.bf16.mxu0 0
        %2446 = vmatpush1.bf16.msra.mxu0 0
        %2447 = vmatprep.subr.bf16.mxu0 0
        %2448 = vmatpush1.bf16.msra.mxu0 0
        %2449 = vmatprep.subr.bf16.mxu0 0
        %2450 = vmatpush1.bf16.msra.mxu0 0
        %2451 = vmatprep.subr.bf16.mxu0 0
        %2452 = vmatpush1.bf16.msra.mxu0 0
        %2453 = vmatprep.subr.bf16.mxu0 0
        %2454 = vmatpush1.bf16.msra.mxu0 0
        %2455 = vmatprep.subr.bf16.mxu0 0
        %2456 = vmatpush1.bf16.msra.mxu0 0
        %2457 = vmatprep.subr.bf16.mxu0 0
        %2458 = vmatpush1.bf16.msra.mxu0 0
        %2459 = vmatprep.subr.bf16.mxu0 0
        %2460 = vmatpush1.bf16.msra.mxu0 0
        %2461 = vmatprep.subr.bf16.mxu0 0
        %2462 = vmatpush1.bf16.msra.mxu0 0
        %2463 = vmatprep.subr.bf16.mxu0 0
        %2464 = vmatpush1.bf16.msra.mxu0 0
        %2465 = vmatprep.mubr.bf16.mxu0 0
        %2466 = vmatmul.mubr.bf16.gmra.mrb[0].mxu0 %v2428
        %v2467 = vpop.f32.mrb[0].mxu0
        %v2468 = vadd.f32 0.0, %v2467
        %v2469 = vpop.f32.mrb[0].mxu0
        %v2470 = vpop.f32.mrb[0].mxu0
        %v2471 = vpop.f32.mrb[0].mxu0
        %2472 = vdwg.mxu0
        %v2474 = vsel %vm2151, %v2378, 0
        %v2477 = vsel %vm2383, %v2142, 0
        %2479 = vmatprep.subr.bf16.mxu0 0
        %2480 = vmatpush1.bf16.msra.mxu0 %v2477
        %2481 = vmatprep.subr.bf16.mxu0 0
        %2482 = vmatpush1.bf16.msra.mxu0 0
        %2483 = vmatprep.subr.bf16.mxu0 0
        %2484 = vmatpush1.bf16.msra.mxu0 0
        %2485 = vmatprep.subr.bf16.mxu0 0
        %2486 = vmatpush1.bf16.msra.mxu0 0
        %2487 = vmatprep.subr.bf16.mxu0 0
        %2488 = vmatpush1.bf16.msra.mxu0 0
        %2489 = vmatprep.subr.bf16.mxu0 0
        %2490 = vmatpush1.bf16.msra.mxu0 0
        %2491 = vmatprep.subr.bf16.mxu0 0
        %2492 = vmatpush1.bf16.msra.mxu0 0
        %2493 = vmatprep.subr.bf16.mxu0 0
        %2494 = vmatpush1.bf16.msra.mxu0 0
        %2495 = vmatprep.subr.bf16.mxu0 0
        %2496 = vmatpush1.bf16.msra.mxu0 0
        %2497 = vmatprep.subr.bf16.mxu0 0
        %2498 = vmatpush1.bf16.msra.mxu0 0
        %2499 = vmatprep.subr.bf16.mxu0 0
        %2500 = vmatpush1.bf16.msra.mxu0 0
        %2501 = vmatprep.subr.bf16.mxu0 0
        %2502 = vmatpush1.bf16.msra.mxu0 0
        %2503 = vmatprep.subr.bf16.mxu0 0
        %2504 = vmatpush1.bf16.msra.mxu0 0
        %2505 = vmatprep.subr.bf16.mxu0 0
        %2506 = vmatpush1.bf16.msra.mxu0 0
        %2507 = vmatprep.subr.bf16.mxu0 0
        %2508 = vmatpush1.bf16.msra.mxu0 0
        %2509 = vmatprep.subr.bf16.mxu0 0
        %2510 = vmatpush1.bf16.msra.mxu0 0
        %2511 = vmatprep.mubr.bf16.mxu0 0
        %2512 = vmatmul.mubr.bf16.gmra.mrb[0].mxu0 %v2474
        %v2513 = vpop.f32.mrb[0].mxu0
        %v2514 = vadd.f32 0.0, %v2513
        %v2515 = vpop.f32.mrb[0].mxu0
        %v2516 = vpop.f32.mrb[0].mxu0
        %v2517 = vpop.f32.mrb[0].mxu0
        %2518 = vdwg.mxu0
        %v2520 = vsel %vm2151, %v2379, 0
        %v2523 = vsel %vm2383, %v2143, 0
        %2525 = vmatprep.subr.bf16.mxu0 0
        %2526 = vmatpush1.bf16.msra.mxu0 %v2523
        %2527 = vmatprep.subr.bf16.mxu0 0
        %2528 = vmatpush1.bf16.msra.mxu0 0
        %2529 = vmatprep.subr.bf16.mxu0 0
        %2530 = vmatpush1.bf16.msra.mxu0 0
        %2531 = vmatprep.subr.bf16.mxu0 0
        %2532 = vmatpush1.bf16.msra.mxu0 0
        %2533 = vmatprep.subr.bf16.mxu0 0
        %2534 = vmatpush1.bf16.msra.mxu0 0
        %2535 = vmatprep.subr.bf16.mxu0 0
        %2536 = vmatpush1.bf16.msra.mxu0 0
        %2537 = vmatprep.subr.bf16.mxu0 0
        %2538 = vmatpush1.bf16.msra.mxu0 0
        %2539 = vmatprep.subr.bf16.mxu0 0
        %2540 = vmatpush1.bf16.msra.mxu0 0
        %2541 = vmatprep.subr.bf16.mxu0 0
        %2542 = vmatpush1.bf16.msra.mxu0 0
        %2543 = vmatprep.subr.bf16.mxu0 0
        %2544 = vmatpush1.bf16.msra.mxu0 0
        %2545 = vmatprep.subr.bf16.mxu0 0
        %2546 = vmatpush1.bf16.msra.mxu0 0
        %2547 = vmatprep.subr.bf16.mxu0 0
        %2548 = vmatpush1.bf16.msra.mxu0 0
        %2549 = vmatprep.subr.bf16.mxu0 0
        %2550 = vmatpush1.bf16.msra.mxu0 0
        %2551 = vmatprep.subr.bf16.mxu0 0
        %2552 = vmatpush1.bf16.msra.mxu0 0
        %2553 = vmatprep.subr.bf16.mxu0 0
        %2554 = vmatpush1.bf16.msra.mxu0 0
        %2555 = vmatprep.subr.bf16.mxu0 0
        %2556 = vmatpush1.bf16.msra.mxu0 0
        %2557 = vmatprep.mubr.bf16.mxu0 0
        %2558 = vmatmul.mubr.bf16.gmra.mrb[0].mxu0 %v2520
        %v2559 = vpop.f32.mrb[0].mxu0
        %v2560 = vadd.f32 0.0, %v2559
        %v2561 = vpop.f32.mrb[0].mxu0
        %v2562 = vpop.f32.mrb[0].mxu0
        %v2563 = vpop.f32.mrb[0].mxu0
        %2564 = vdwg.mxu0
        %v2565 = vmul.f32 %v2422, %v2372
        %v2566 = vmul.f32 %v2468, %v2373
        %v2567 = vmul.f32 %v2514, %v2374
        %v2568 = vmul.f32 %v2560, %v2375
        %v2569 = vcombine.low %v2565, %v2567
        %v2570 = vcombine.high %v2565, %v2567
        %v2572 = vunpack.c.l.s4 1983009808
        %v2573 = vunpack.c.0.s8 %v2572
        %v2574 = vlaneseq
        %v2575 = vshrl.u32 %v2574, 7
        %v2576 = vsub.s32 %v2573, %v2575
        %v2577 = vrot.slane %v2569, %v2576
        %v2579 = vunpack.c.l.s4 1983009808
        %v2580 = vunpack.c.0.s8 %v2579
        %v2581 = vlaneseq
        %v2582 = vshrl.u32 %v2581, 7
        %v2583 = vsub.s32 %v2580, %v2582
        %v2584 = vrot.slane %v2570, %v2583
        %v2585 = vcombine.low %v2566, %v2568
        %v2586 = vcombine.high %v2566, %v2568
        %v2588 = vunpack.c.l.s4 1983009808
        %v2589 = vunpack.c.0.s8 %v2588
        %v2590 = vlaneseq
        %v2591 = vshrl.u32 %v2590, 7
        %v2592 = vsub.s32 %v2589, %v2591
        %v2593 = vrot.slane %v2585, %v2592
        %v2595 = vunpack.c.l.s4 1983009808
        %v2596 = vunpack.c.0.s8 %v2595
        %v2597 = vlaneseq
        %v2598 = vshrl.u32 %v2597, 7
        %v2599 = vsub.s32 %v2596, %v2598
        %v2600 = vrot.slane %v2586, %v2599
        %v2601 = vcombine.low %v2577, %v2593
        %v2602 = vcombine.high %v2577, %v2593
        %v2604 = vunpack.c.l.s4 1934713408
        %v2605 = vunpack.c.0.s8 %v2604
        %v2606 = vlaneseq
        %v2607 = vshrl.u32 %v2606, 7
        %v2608 = vsub.s32 %v2605, %v2607
        %v2609 = vrot.slane %v2601, %v2608
        %v2611 = vunpack.c.l.s4 1934713408
        %v2612 = vunpack.c.0.s8 %v2611
        %v2613 = vlaneseq
        %v2614 = vshrl.u32 %v2613, 7
        %v2615 = vsub.s32 %v2612, %v2614
        %v2616 = vrot.slane %v2602, %v2615
        %v2617 = vcombine.low %v2584, %v2600
        %v2618 = vcombine.high %v2584, %v2600
        %v2620 = vunpack.c.l.s4 1934713408
        %v2621 = vunpack.c.0.s8 %v2620
        %v2622 = vlaneseq
        %v2623 = vshrl.u32 %v2622, 7
        %v2624 = vsub.s32 %v2621, %v2623
        %v2625 = vrot.slane %v2617, %v2624
        %v2627 = vunpack.c.l.s4 1934713408
        %v2628 = vunpack.c.0.s8 %v2627
        %v2629 = vlaneseq
        %v2630 = vshrl.u32 %v2629, 7
        %v2631 = vsub.s32 %v2628, %v2630
        %v2632 = vrot.slane %v2618, %v2631
        %v2633 = vcombine.high %v2609, 0.0
        %v2634 = vcombine.high %v2616, 0.0
        %v2635 = vcombine.high %v2625, 0.0
        %v2636 = vcombine.high %v2632, 0.0
        %v2637 = vcombine.low %v2609, %v2616
        %v2639 = vunpack.c.l.s4 1983009808
        %v2640 = vunpack.c.0.s8 %v2639
        %v2641 = vlaneseq
        %v2642 = vshrl.u32 %v2641, 7
        %v2643 = vsub.s32 %v2640, %v2642
        %v2644 = vrot.slane %v2637, %v2643
        %v2645 = vcombine.low %v2633, %v2634
        %v2647 = vunpack.c.l.s4 1983009808
        %v2648 = vunpack.c.0.s8 %v2647
        %v2649 = vlaneseq
        %v2650 = vshrl.u32 %v2649, 7
        %v2651 = vsub.s32 %v2648, %v2650
        %v2652 = vrot.slane %v2645, %v2651
        %v2653 = vcombine.low %v2625, %v2632
        %v2655 = vunpack.c.l.s4 1983009808
        %v2656 = vunpack.c.0.s8 %v2655
        %v2657 = vlaneseq
        %v2658 = vshrl.u32 %v2657, 7
        %v2659 = vsub.s32 %v2656, %v2658
        %v2660 = vrot.slane %v2653, %v2659
        %v2661 = vcombine.low %v2635, %v2636
        %v2663 = vunpack.c.l.s4 1983009808
        %v2664 = vunpack.c.0.s8 %v2663
        %v2665 = vlaneseq
        %v2666 = vshrl.u32 %v2665, 7
        %v2667 = vsub.s32 %v2664, %v2666
        %v2668 = vrot.slane %v2661, %v2667
        %v2669 = vcombine.low %v2644, %v2652
        %v2670 = vcombine.high %v2644, %v2652
        %v2672 = vunpack.c.l.s4 1934713408
        %v2673 = vunpack.c.0.s8 %v2672
        %v2674 = vlaneseq
        %v2675 = vshrl.u32 %v2674, 7
        %v2676 = vsub.s32 %v2673, %v2675
        %v2677 = vrot.slane %v2669, %v2676
        %v2679 = vunpack.c.l.s4 1934713408
        %v2680 = vunpack.c.0.s8 %v2679
        %v2681 = vlaneseq
        %v2682 = vshrl.u32 %v2681, 7
        %v2683 = vsub.s32 %v2680, %v2682
        %v2684 = vrot.slane %v2670, %v2683
        %v2685 = vcombine.low %v2660, %v2668
        %v2686 = vcombine.high %v2660, %v2668
        %v2688 = vunpack.c.l.s4 1934713408
        %v2689 = vunpack.c.0.s8 %v2688
        %v2690 = vlaneseq
        %v2691 = vshrl.u32 %v2690, 7
        %v2692 = vsub.s32 %v2689, %v2691
        %v2693 = vrot.slane %v2685, %v2692
        %v2695 = vunpack.c.l.s4 1934713408
        %v2696 = vunpack.c.0.s8 %v2695
        %v2697 = vlaneseq
        %v2698 = vshrl.u32 %v2697, 7
        %v2699 = vsub.s32 %v2696, %v2698
        %v2700 = vrot.slane %v2686, %v2699
        %v2701 = vcombine.low %v2677, %v2693
        %v2702 = vcombine.high %v2677, %v2693
        %v2703 = vcombine.low %v2684, %v2700
        %v2704 = vcombine.high %v2684, %v2700
        %2706 = vrot.lane.b32.xlu0 %v2702, 8
        %v2707 = vpop.permute.xlu0 %2706
        %2710 = vrot.lane.b32.xlu0 %v2703, 16
        %v2711 = vpop.permute.xlu0 %2710
        %2714 = vrot.lane.b32.xlu0 %v2704, 24
        %v2715 = vpop.permute.xlu0 %2714
        %v2717 = vsel %vm2151, %v2701, %v2707
        %vm2718 = vcmask 130048
        %v2719 = vsel %vm2718, %v2717, %v2711
        %vm2720 = vcmask 195584
        %v2721 = vsel %vm2720, %v2719, %v2715
        %v2722 = vld [vmem:[%s1219] sm:$0xf]
        %v2723 = vld [vmem:[%s1219 + $0x4] sm:$0xf]
        %v2724 = vld [vmem:[%s1219 + $0x8] sm:$0xf]
        %v2725 = vld [vmem:[%s1219 + $0xc] sm:$0xf]
        %v2726 = vld [vmem:[%s1227] sm:$0x1]
        %v2727 = vpack.c.bf16 %v2721, %v2721
        %v2729 = vlaneseq
        %v2730 = vshrl.u32 %v2729, 7
        %v2731 = vsub.s32 0, %v2730
        %v2732 = vrot.slane %v2726, %v2731
        %v2738 = vunpack.c.l.b16 %v2722
        %v2739 = vunpack.c.l.b16 %v2723
        %v2740 = vunpack.c.l.b16 %v2724
        %v2741 = vunpack.c.l.b16 %v2725
        %v2742 = vpack.c.b16 %v2739, %v2738
        %v2743 = vpack.c.b16 %v2741, %v2740
        %v2747 = vsel %vm1523, %v2727, 0
        %2749 = vmatprep.subr.bf16.mxu0 0
        %2750 = vmatpush1.bf16.msra.mxu0 %v2742
        %2751 = vmatprep.subr.bf16.mxu0 0
        %2752 = vmatpush1.bf16.msra.mxu0 %v2743
        %2753 = vmatprep.subr.bf16.mxu0 0
        %2754 = vmatpush1.bf16.msra.mxu0 0
        %2755 = vmatprep.subr.bf16.mxu0 0
        %2756 = vmatpush1.bf16.msra.mxu0 0
        %2757 = vmatprep.subr.bf16.mxu0 0
        %2758 = vmatpush1.bf16.msra.mxu0 0
        %2759 = vmatprep.subr.bf16.mxu0 0
        %2760 = vmatpush1.bf16.msra.mxu0 0
        %2761 = vmatprep.subr.bf16.mxu0 0
        %2762 = vmatpush1.bf16.msra.mxu0 0
        %2763 = vmatprep.subr.bf16.mxu0 0
        %2764 = vmatpush1.bf16.msra.mxu0 0
        %2765 = vmatprep.subr.bf16.mxu0 0
        %2766 = vmatpush1.bf16.msra.mxu0 0
        %2767 = vmatprep.subr.bf16.mxu0 0
        %2768 = vmatpush1.bf16.msra.mxu0 0
        %2769 = vmatprep.subr.bf16.mxu0 0
        %2770 = vmatpush1.bf16.msra.mxu0 0
        %2771 = vmatprep.subr.bf16.mxu0 0
        %2772 = vmatpush1.bf16.msra.mxu0 0
        %2773 = vmatprep.subr.bf16.mxu0 0
        %2774 = vmatpush1.bf16.msra.mxu0 0
        %2775 = vmatprep.subr.bf16.mxu0 0
        %2776 = vmatpush1.bf16.msra.mxu0 0
        %2777 = vmatprep.subr.bf16.mxu0 0
        %2778 = vmatpush1.bf16.msra.mxu0 0
        %2779 = vmatprep.subr.bf16.mxu0 0
        %2780 = vmatpush1.bf16.msra.mxu0 0
        %2781 = vmatprep.mubr.bf16.mxu0 0
        %2782 = vmatmul.mubr.bf16.gmra.mrb[0].mxu0 %v2747
        %v2783 = vpop.f32.mrb[0].mxu0
        %v2784 = vadd.f32 %v2732, %v2783
        %v2785 = vpop.f32.mrb[0].mxu0
        %v2786 = vpop.f32.mrb[0].mxu0
        %v2787 = vpop.f32.mrb[0].mxu0
        %2788 = vdwg.mxu0
        %v2789 = vadd.f32 %v1498, %v2784
        %v2790 = vld [vmem:[%s1235] sm:$0x1]
        %v2791 = vld [vmem:[%s1243] sm:$0x1]
        %v2792 = vsel %vm1523, %v2789, 0.0
        %2793 = vadd.xlane.f32.xlu0 %v2792
        %v2794 = vpop.xlane.xlu0 %2793
        %v2795 = vrcp.pop 32.0
        %v2796 = vmul.f32 %v2794, %v2795
        %v2797 = vsub.f32 %v2789, %v2796
        %v2798 = vmul.f32 %v2797, %v2797
        %v2799 = vsel %vm1523, %v2798, 0.0
        %2800 = vadd.xlane.f32.xlu0 %v2799
        %v2801 = vpop.xlane.xlu0 %2800
        %v2802 = vmul.f32 %v2801, %v2795
        %v2803 = vadd.f32 %v2802, 1e-05
        %v2804 = vrsqrt.pop %v2803
        %v2805 = vmul.f32 %v2797, %v2804
        %v2807 = vlaneseq
        %v2808 = vshrl.u32 %v2807, 7
        %v2809 = vsub.s32 0, %v2808
        %v2810 = vrot.slane %v2790, %v2809
        %v2812 = vmul.f32 %v2805, %v2810
        %v2814 = vlaneseq
        %v2815 = vshrl.u32 %v2814, 7
        %v2816 = vsub.s32 0, %v2815
        %v2817 = vrot.slane %v2791, %v2816
        %v2819 = vadd.f32 %v2812, %v2817
        %v2820 = vld [vmem:[%s1252] sm:$0xf]
        %v2821 = vld [vmem:[%s1252 + $0x4] sm:$0xf]
        %v2822 = vld [vmem:[%s1252 + $0x8] sm:$0xf]
        %v2823 = vld [vmem:[%s1252 + $0xc] sm:$0xf]
        %v2824 = vld [vmem:[%s1260] sm:$0x1]
        %v2825 = vpack.c.bf16 %v2819, %v2819
        %v2827 = vlaneseq
        %v2828 = vshrl.u32 %v2827, 7
        %v2829 = vsub.s32 0, %v2828
        %v2830 = vrot.slane %v2824, %v2829
        %v2836 = vunpack.c.l.b16 %v2820
        %v2837 = vunpack.c.l.b16 %v2821
        %v2838 = vunpack.c.l.b16 %v2822
        %v2839 = vunpack.c.l.b16 %v2823
        %v2840 = vpack.c.b16 %v2837, %v2836
        %v2841 = vpack.c.b16 %v2839, %v2838
        %v2845 = vsel %vm1523, %v2825, 0
        %2847 = vmatprep.subr.bf16.mxu0 0
        %2848 = vmatpush1.bf16.msra.mxu0 %v2840
        %2849 = vmatprep.subr.bf16.mxu0 0
        %2850 = vmatpush1.bf16.msra.mxu0 %v2841
        %2851 = vmatprep.subr.bf16.mxu0 0
        %2852 = vmatpush1.bf16.msra.mxu0 0
        %2853 = vmatprep.subr.bf16.mxu0 0
        %2854 = vmatpush1.bf16.msra.mxu0 0
        %2855 = vmatprep.subr.bf16.mxu0 0
        %2856 = vmatpush1.bf16.msra.mxu0 0
        %2857 = vmatprep.subr.bf16.mxu0 0
        %2858 = vmatpush1.bf16.msra.mxu0 0
        %2859 = vmatprep.subr.bf16.mxu0 0
        %2860 = vmatpush1.bf16.msra.mxu0 0
        %2861 = vmatprep.subr.bf16.mxu0 0
        %2862 = vmatpush1.bf16.msra.mxu0 0
        %2863 = vmatprep.subr.bf16.mxu0 0
        %2864 = vmatpush1.bf16.msra.mxu0 0
        %2865 = vmatprep.subr.bf16.mxu0 0
        %2866 = vmatpush1.bf16.msra.mxu0 0
        %2867 = vmatprep.subr.bf16.mxu0 0
        %2868 = vmatpush1.bf16.msra.mxu0 0
        %2869 = vmatprep.subr.bf16.mxu0 0
        %2870 = vmatpush1.bf16.msra.mxu0 0
        %2871 = vmatprep.subr.bf16.mxu0 0
        %2872 = vmatpush1.bf16.msra.mxu0 0
        %2873 = vmatprep.subr.bf16.mxu0 0
        %2874 = vmatpush1.bf16.msra.mxu0 0
        %2875 = vmatprep.subr.bf16.mxu0 0
        %2876 = vmatpush1.bf16.msra.mxu0 0
        %2877 = vmatprep.subr.bf16.mxu0 0
        %2878 = vmatpush1.bf16.msra.mxu0 0
        %2879 = vmatprep.mubr.bf16.mxu0 0
        %2880 = vmatmul.mubr.bf16.gmra.mrb[0].mxu0 %v2845
        %v2881 = vpop.f32.mrb[0].mxu0
        %v2882 = vadd.f32 %v2830, %v2881
        %v2883 = vpop.f32.mrb[0].mxu0
        %v2884 = vpop.f32.mrb[0].mxu0
        %v2885 = vpop.f32.mrb[0].mxu0
        %2886 = vdwg.mxu0
        %v2887 = vmax.f32 %v2882, 0.0
        %v2888 = vld [vmem:[%s1269] sm:$0xf]
        %v2889 = vld [vmem:[%s1269 + $0x4] sm:$0xf]
        %v2890 = vld [vmem:[%s1269 + $0x8] sm:$0xf]
        %v2891 = vld [vmem:[%s1269 + $0xc] sm:$0xf]
        %v2892 = vld [vmem:[%s1269 + $0x10] sm:$0xf]
        %v2893 = vld [vmem:[%s1269 + $0x14] sm:$0xf]
        %v2894 = vld [vmem:[%s1269 + $0x18] sm:$0xf]
        %v2895 = vld [vmem:[%s1269 + $0x1c] sm:$0xf]
        %v2896 = vld [vmem:[%s1277] sm:$0x1]
        %v2897 = vpack.c.bf16 %v2887, %v2887
        %v2899 = vlaneseq
        %v2900 = vshrl.u32 %v2899, 7
        %v2901 = vsub.s32 0, %v2900
        %v2902 = vrot.slane %v2896, %v2901
        %v2912 = vunpack.c.l.b16 %v2888
        %v2913 = vunpack.c.l.b16 %v2889
        %v2914 = vunpack.c.l.b16 %v2890
        %v2915 = vunpack.c.l.b16 %v2891
        %v2916 = vunpack.c.l.b16 %v2892
        %v2917 = vunpack.c.l.b16 %v2893
        %v2918 = vunpack.c.l.b16 %v2894
        %v2919 = vunpack.c.l.b16 %v2895
        %v2920 = vpack.c.b16 %v2913, %v2912
        %v2921 = vpack.c.b16 %v2915, %v2914
        %v2922 = vpack.c.b16 %v2917, %v2916
        %v2923 = vpack.c.b16 %v2919, %v2918
        %vm2928 = vcmask 523264
        %v2930 = vsel %vm2928, %v2897, 0
        %2932 = vmatprep.subr.bf16.mxu0 0
        %2933 = vmatpush1.bf16.msra.mxu0 %v2920
        %2934 = vmatprep.subr.bf16.mxu0 0
        %2935 = vmatpush1.bf16.msra.mxu0 %v2921
        %2936 = vmatprep.subr.bf16.mxu0 0
        %2937 = vmatpush1.bf16.msra.mxu0 %v2922
        %2938 = vmatprep.subr.bf16.mxu0 0
        %2939 = vmatpush1.bf16.msra.mxu0 %v2923
        %2940 = vmatprep.subr.bf16.mxu0 0
        %2941 = vmatpush1.bf16.msra.mxu0 0
        %2942 = vmatprep.subr.bf16.mxu0 0
        %2943 = vmatpush1.bf16.msra.mxu0 0
        %2944 = vmatprep.subr.bf16.mxu0 0
        %2945 = vmatpush1.bf16.msra.mxu0 0
        %2946 = vmatprep.subr.bf16.mxu0 0
        %2947 = vmatpush1.bf16.msra.mxu0 0
        %2948 = vmatprep.subr.bf16.mxu0 0
        %2949 = vmatpush1.bf16.msra.mxu0 0
        %2950 = vmatprep.subr.bf16.mxu0 0
        %2951 = vmatpush1.bf16.msra.mxu0 0
        %2952 = vmatprep.subr.bf16.mxu0 0
        %2953 = vmatpush1.bf16.msra.mxu0 0
        %2954 = vmatprep.subr.bf16.mxu0 0
        %2955 = vmatpush1.bf16.msra.mxu0 0
        %2956 = vmatprep.subr.bf16.mxu0 0
        %2957 = vmatpush1.bf16.msra.mxu0 0
        %2958 = vmatprep.subr.bf16.mxu0 0
        %2959 = vmatpush1.bf16.msra.mxu0 0
        %2960 = vmatprep.subr.bf16.mxu0 0
        %2961 = vmatpush1.bf16.msra.mxu0 0
        %2962 = vmatprep.subr.bf16.mxu0 0
        %2963 = vmatpush1.bf16.msra.mxu0 0
        %2964 = vmatprep.mubr.bf16.mxu0 0
        %2965 = vmatmul.mubr.bf16.gmra.mrb[0].mxu0 %v2930
        %v2966 = vpop.f32.mrb[0].mxu0
        %v2967 = vadd.f32 %v2902, %v2966
        %v2968 = vpop.f32.mrb[0].mxu0
        %v2969 = vpop.f32.mrb[0].mxu0
        %v2970 = vpop.f32.mrb[0].mxu0
        %2971 = vdwg.mxu0
        %v2972 = vadd.f32 %v2819, %v2967
        %v2973 = vld [vmem:[%s1285] sm:$0x1]
        %v2974 = vld [vmem:[%s1293] sm:$0x1]
        %v2975 = vsel %vm1523, %v2972, 0.0
        %2976 = vadd.xlane.f32.xlu0 %v2975
        %v2977 = vpop.xlane.xlu0 %2976
        %v2978 = vmul.f32 %v2977, %v2795
        %v2979 = vsub.f32 %v2972, %v2978
        %v2980 = vmul.f32 %v2979, %v2979
        %v2981 = vsel %vm1523, %v2980, 0.0
        %2982 = vadd.xlane.f32.xlu0 %v2981
        %v2983 = vpop.xlane.xlu0 %2982
        %v2984 = vmul.f32 %v2983, %v2795
        %v2985 = vadd.f32 %v2984, 1e-05
        %v2986 = vrsqrt.pop %v2985
        %v2987 = vmul.f32 %v2979, %v2986
        %v2989 = vlaneseq
        %v2990 = vshrl.u32 %v2989, 7
        %v2991 = vsub.s32 0, %v2990
        %v2992 = vrot.slane %v2973, %v2991
        %v2994 = vmul.f32 %v2987, %v2992
        %v2996 = vlaneseq
        %v2997 = vshrl.u32 %v2996, 7
        %v2998 = vsub.s32 0, %v2997
        %v2999 = vrot.slane %v2974, %v2998
        %v3001 = vadd.f32 %v2994, %v2999
        %3002 = vst.msk [vmem:[#allocation2] sm:$0xff] %vm1523, %v3001
        %3003 = vst.msk [vmem:[%s1446] sm:$0xff] %vm1523, %v3001
        %s3004 = sand.u32 %s650, 1
        %s3005 = scalar_lea.sflag [#allocation5], %s3004
        %s3006 = sand.u32 %s650, 1
        %s3007 = smul.addr %s3006, 8
        %s3008 = scalar_lea.vmem [#allocation30], %s3007
        %s3009 = sand.u32 %s678, 1
        %s3010 = scalar_lea.sflag [#allocation32], %s3009
        %s3011 = sand.u32 %s678, 1
        %s3012 = smul.addr %s3011, 8
        %s3013 = scalar_lea.vmem [#allocation31], %s3012
        // Predicated region
        $region209: #{tpu_custom_call.1} parent=111 // pred_check
          %p3014 = pneg %p660
        $region210: #{tpu_custom_call.1} parent=111 // pred_check_branch
          %3016 = sbr.rel (%p3014) target = $region212
        $region211: #{tpu_custom_call.1} parent=111 // pred_region
          %s3018 = ssub.s32 128, 128
          %3019 = vsyncadd %s3005, %s3018
          %s3020 = smul.addr %s51, 128
          %s3021 = scalar_lea.hbm %s23, %s3020
          %s3023 = sshll.u32 %s3008, 4
          %s3024 = int_to_ptr.vmem [resolvable:$true] %s3023
          %3026 = dma.vmem_to_hbm [thread:$0]  %s3024, 128, %s3021, %s3005
        $region212: #{tpu_custom_call.1} parent=111 // pred_fallthru
          _
        // Predicated region
        $region213: #{tpu_custom_call.1} parent=111 // pred_check
          %p3027 = pneg %p688
        $region214: #{tpu_custom_call.1} parent=111 // pred_check_branch
          %3029 = sbr.rel (%p3027) target = $region216
        $region215: #{tpu_custom_call.1} parent=111 // pred_region
          %s3031 = ssub.s32 128, 128
          %3032 = vsyncadd %s3010, %s3031
          %s3033 = smul.addr %s52, 2
          %s3034 = sadd.s32 %s51, %s3033
          %s3035 = smul.addr %s3034, 128
          %s3036 = scalar_lea.hbm %s24, %s3035
          %s3038 = sshll.u32 %s3013, 4
          %s3039 = int_to_ptr.vmem [resolvable:$true] %s3038
          %3041 = dma.vmem_to_hbm [thread:$0]  %s3039, 128, %s3036, %s3010
        $region216: #{tpu_custom_call.1} parent=111 // pred_fallthru
          _
      $region112: #{tpu_custom_call.1} parent=5 // pred_fallthru
        _
      %p3042 = scmp.le.s32.totalorder 2, %s42
      // Predicated region
      $region217: #{tpu_custom_call.1} parent=5 // pred_check
        %p3043 = pneg %p3042
      $region218: #{tpu_custom_call.1} parent=5 // pred_check_branch
        %3045 = sbr.rel (%p3043) target = $region220
      $region219: #{tpu_custom_call.1} parent=5 // pred_region
        %s3046 = ssub.s32 %s42, 2
        // Predicated region
        $region221: #{tpu_custom_call.1} parent=219 // pred_check
          %p3047 = pneg %p666
        $region222: #{tpu_custom_call.1} parent=219 // pred_check_branch
          %3049 = sbr.rel (%p3047) target = $region224
        $region223: #{tpu_custom_call.1} parent=219 // pred_region
          %s3050 = sand.u32 %s651, 1
          %s3051 = scalar_lea.sflag [#allocation5], %s3050
          %s3052 = sand.u32 %s651, 1
          %s3053 = smul.addr %s3052, 8
          %s3054 = scalar_lea.vmem [#allocation30], %s3053
          %3055 = dma.done %s3051, 128
        $region224: #{tpu_custom_call.1} parent=219 // pred_fallthru
          _
        // Predicated region
        $region225: #{tpu_custom_call.1} parent=219 // pred_check
          %p3056 = pneg %p694
        $region226: #{tpu_custom_call.1} parent=219 // pred_check_branch
          %3058 = sbr.rel (%p3056) target = $region228
        $region227: #{tpu_custom_call.1} parent=219 // pred_region
          %s3059 = sand.u32 %s679, 1
          %s3060 = scalar_lea.sflag [#allocation32], %s3059
          %s3061 = sand.u32 %s679, 1
          %s3062 = smul.addr %s3061, 8
          %s3063 = scalar_lea.vmem [#allocation31], %s3062
          %3064 = dma.done %s3060, 128
        $region228: #{tpu_custom_call.1} parent=219 // pred_fallthru
          _
      $region220: #{tpu_custom_call.1} parent=5 // pred_fallthru
        _
    $region6: #{tpu_custom_call.1} parent=1 // loop_footer
      %s46 = sadd.s32 1, %s42
    $region7: #{tpu_custom_call.1} parent=1 // loop_footer_branch
      %41 = sbr.rel target = $region3
    $region8: #{tpu_custom_call.1} parent=1 // loop_exit
      _
    %3065 = vsyncpa [#allocation4], 1
    %s3066 = scalar_lea.sflag [#allocation4], 1
    %3067 = vsyncpa %s3066, 1
    %3068 = vsyncpa [#allocation7], 1
    %3069 = vsyncpa [#allocation11], 1
    %3070 = vsyncpa [#allocation5], 1
    %s3071 = scalar_lea.sflag [#allocation5], 1
    %3072 = vsyncpa %s3071, 1
    %3073 = vsyncpa [#allocation32], 1
    %s3074 = scalar_lea.sflag [#allocation32], 1
    %3075 = vsyncpa %s3074, 1

</llo_original>
